<compile_context>
chip_gen: v6e
topology: v6e:2x2x1
jax: 0.10.0
libtpu: 0.0.40
codegen_flags: <defaults>
</compile_context>

<pallas_src>
import jax
import jax.numpy as jnp
from jax import lax
from jax.experimental import pallas as pl
from jax.experimental.pallas import tpu as pltpu

EPS = 1e-5                    # nn.BatchNorm2d default
LANES = 128
_VMEM_LIMIT = 32 * 1024 * 1024


def _round_up(x, m):
    return (x + m - 1) // m * m


def _largest_divisor_leq(n, cap):
    best = 1
    for d in range(1, n + 1):
        if n % d == 0 and d <= cap:
            best = d
    return best


def _pick_row_tile(rows, width, target_pixels=1024):
    """Largest divisor of `rows` whose tile (rows_tile * width) stays near target."""
    if rows * width <= target_pixels:
        return rows
    return _largest_divisor_leq(rows, max(1, target_pixels // width))


# ---------------------------------------------------------------------------
# Kernel 1: 3x3 valid conv (+ optionally fused input BN+ReLU of the previous
#           layer) + per-channel batch-statistic (sum / sum-sq) accumulation.
# ---------------------------------------------------------------------------
def _make_conv_stats_kernel(TR, Wo, Ci, Cpad, fuse_input_bn, single_dot):
    def kernel(*refs):
        if fuse_input_bn:
            x_ref, w_ref, sc_ref, sh_ref, y_ref, s_ref = refs
        else:
            x_ref, w_ref, y_ref, s_ref = refs
            sc_ref = sh_ref = None

        i = pl.program_id(1)            # row-tile index within this image
        r0 = i * TR
        w = w_ref[...]                  # (9*Ci, Cpad) bf16, resident

        def row_step(r, carry):
            ssum, ssq = carry
            taps = []
            for kh in range(3):
                row = x_ref[0, r0 + r + kh]            # (Wo+2, Ci)
                if fuse_input_bn:
                    # BN1 + ReLU of the previous layer, fused into tap formation.
                    a = row.astype(jnp.float32) * sc_ref[...] + sh_ref[...]
                    row = jnp.maximum(a, 0.0).astype(jnp.bfloat16)
                for kw in range(3):
                    taps.append(row[kw:kw + Wo, :])    # (Wo, Ci)

            if single_dot:
                # single deep-K MXU matmul: K = 9*Ci (lane-aligned concat).
                xcol = jnp.concatenate(taps, axis=-1)  # (Wo, 9*Ci)
                acc = jnp.dot(xcol, w, preferred_element_type=jnp.float32)
            else:
                # stem conv (Ci not 128-aligned): per-tap K=Ci dots.
                acc = jnp.zeros((Wo, Cpad), jnp.float32)
                for t, tap in enumerate(taps):
                    acc = acc + jnp.dot(tap, w[t * Ci:(t + 1) * Ci, :],
                                        preferred_element_type=jnp.float32)

            y_ref[0, r] = acc.astype(y_ref.dtype)
            ssum = ssum + jnp.sum(acc, axis=0, keepdims=True)
            ssq = ssq + jnp.sum(acc * acc, axis=0, keepdims=True)
            return ssum, ssq

        zero = jnp.zeros((1, Cpad), jnp.float32)
        ssum, ssq = lax.fori_loop(0, TR, row_step, (zero, zero))
        part = jnp.concatenate([ssum, ssq], axis=0)    # (2, Cpad)

        @pl.when(i == 0)
        def _():
            s_ref[0] = part

        @pl.when(i > 0)
        def _():
            s_ref[0] = s_ref[0] + part

    return kernel


def _conv_stats(x, wcol, Cpad, *, scale=None, shift=None, out_dtype=jnp.float32):
    """x: (N, H, W, Ci) bf16; wcol: (9*Ci, Cpad) bf16.
    Returns (pre-BN conv output (N, Ho, Wo, Cpad), per-image sums (N, 2, Cpad))."""
    N, H, W, Ci = x.shape
    Ho, Wo = H - 2, W - 2
    TR = _pick_row_tile(Ho, Wo)
    GI = Ho // TR
    fuse = scale is not None
    single_dot = (Ci % LANES == 0)
    kernel = _make_conv_stats_kernel(TR, Wo, Ci, Cpad, fuse, single_dot)

    # TODO(synk): for very large spatial dims the resident per-image input block
    # should become a manually DMA'd halo row-tile (pl.ANY + make_async_copy).
    in_specs = [
        pl.BlockSpec((1, H, W, Ci), lambda n, i: (n, 0, 0, 0)),   # resident image
        pl.BlockSpec((9 * Ci, Cpad), lambda n, i: (0, 0)),        # resident weights
    ]
    operands = [x, wcol]
    if fuse:
        in_specs += [pl.BlockSpec((1, Cpad), lambda n, i: (0, 0)),
                     pl.BlockSpec((1, Cpad), lambda n, i: (0, 0))]
        operands += [scale, shift]

    y, stats = pl.pallas_call(
        kernel,
        grid=(N, GI),
        in_specs=in_specs,
        out_specs=[
            pl.BlockSpec((1, TR, Wo, Cpad), lambda n, i: (n, i, 0, 0)),
            pl.BlockSpec((1, 2, Cpad), lambda n, i: (n, 0, 0)),   # stat accumulator
        ],
        out_shape=[
            jax.ShapeDtypeStruct((N, Ho, Wo, Cpad), out_dtype),
            jax.ShapeDtypeStruct((N, 2, Cpad), jnp.float32),
        ],
        compiler_params=pltpu.CompilerParams(
            dimension_semantics=("parallel", "arbitrary"),
            vmem_limit_bytes=_VMEM_LIMIT),
    )(*operands)
    return y, stats


def _bn_scale_shift(stats, gamma, beta, count, Cpad):
    """Fold batch mean/var + affine params into one per-channel scale/shift."""
    s = jnp.sum(stats.astype(jnp.float32), axis=0)      # (2, Cpad)
    mean = s[0] / count
    var = jnp.maximum(s[1] / count - mean * mean, 0.0)  # biased variance
    g = jnp.pad(gamma.astype(jnp.float32), (0, Cpad - gamma.shape[0]))
    b = jnp.pad(beta.astype(jnp.float32), (0, Cpad - beta.shape[0]))
    scale = g * lax.rsqrt(var + EPS)
    shift = b - mean * scale
    return scale.reshape(1, Cpad), shift.reshape(1, Cpad)


# ---------------------------------------------------------------------------
# Kernel 2: BN2 apply + ReLU fused with the 2x2/2 maxpool; emits right & down.
# ---------------------------------------------------------------------------
def _make_bn_relu_pool_kernel(TPR, Wp, Cpad):
    def kernel(y_ref, sc_ref, sh_ref, right_ref, down_ref):
        v = y_ref[0].astype(jnp.float32)                 # (2*TPR, Wp, 2, Cpad)
        r = jnp.maximum(v * sc_ref[...] + sh_ref[...], 0.0)
        right_ref[0] = r
        t = jnp.max(r, axis=2)                           # W-pair max  (2*TPR, Wp, Cpad)
        d = jnp.max(t.reshape(TPR, 2, Wp, Cpad), axis=1)  # H-pair max (TPR, Wp, Cpad)
        down_ref[0] = d
    return kernel


def _bn_relu_pool(y, scale, shift):
    """y: pre-BN conv2 output (N, Ho, Wo, Cpad) f32."""
    N, Ho, Wo, Cpad = y.shape
    # TODO(synk): odd spatial dims (PyTorch MaxPool2d floor-crops the last row/col).
    assert Ho % 2 == 0 and Wo % 2 == 0
    Hp, Wp = Ho // 2, Wo // 2
    yr = y.reshape(N, Ho, Wp, 2, Cpad)                   # free split of the W axis
    TPR = _pick_row_tile(Hp, 2 * Wo)                     # row-pairs per grid step
    GP = Hp // TPR
    kernel = _make_bn_relu_pool_kernel(TPR, Wp, Cpad)

    right_r, down = pl.pallas_call(
        kernel,
        grid=(N, GP),
        in_specs=[
            pl.BlockSpec((1, 2 * TPR, Wp, 2, Cpad), lambda n, j: (n, j, 0, 0, 0)),
            pl.BlockSpec((1, Cpad), lambda n, j: (0, 0)),
            pl.BlockSpec((1, Cpad), lambda n, j: (0, 0)),
        ],
        out_specs=[
            pl.BlockSpec((1, 2 * TPR, Wp, 2, Cpad), lambda n, j: (n, j, 0, 0, 0)),
            pl.BlockSpec((1, TPR, Wp, Cpad), lambda n, j: (n, j, 0, 0)),
        ],
        out_shape=[
            jax.ShapeDtypeStruct((N, Ho, Wp, 2, Cpad), jnp.float32),
            jax.ShapeDtypeStruct((N, Hp, Wp, Cpad), jnp.float32),
        ],
        compiler_params=pltpu.CompilerParams(
            dimension_semantics=("parallel", "parallel"),
            vmem_limit_bytes=_VMEM_LIMIT),
    )(yr, scale, shift)
    return right_r.reshape(N, Ho, Wo, Cpad), down


# ---------------------------------------------------------------------------
# down_conv forward
# ---------------------------------------------------------------------------
def down_conv_forward(x_nchw, params):
    N, Cin, H, W = x_nchw.shape
    Cout = params["w1"].shape[0]
    Cpad = _round_up(Cout, LANES)

    # NCHW (PyTorch) -> NHWC once at the module boundary; bf16 matmul operands.
    x = jnp.transpose(x_nchw, (0, 2, 3, 1)).astype(jnp.bfloat16)

    # conv1 (stem): conv + batch-statistic accumulation.
    w1 = jnp.transpose(params["w1"], (2, 3, 1, 0)).reshape(9 * Cin, Cout)
    w1 = jnp.pad(w1, ((0, 0), (0, Cpad - Cout))).astype(jnp.bfloat16)
    y1, s1 = _conv_stats(x, w1, Cpad, out_dtype=jnp.bfloat16)
    Ho1, Wo1 = H - 2, W - 2
    scale1, shift1 = _bn_scale_shift(s1, params["gamma1"], params["beta1"],
                                     N * Ho1 * Wo1, Cpad)
    # NOTE: conv bias cancels exactly under training-mode BatchNorm -> not applied.

    # conv2: BN1+ReLU fused into tap formation; single deep-K (9*Cpad) matmul.
    w2 = jnp.transpose(params["w2"], (2, 3, 1, 0))                # (3,3,Cout,Cout)
    w2p = jnp.zeros((3, 3, Cpad, Cpad), jnp.float32).at[:, :, :Cout, :Cout].set(w2)
    w2p = w2p.reshape(9 * Cpad, Cpad).astype(jnp.bfloat16)
    y2, s2 = _conv_stats(y1, w2p, Cpad, scale=scale1, shift=shift1,
                         out_dtype=jnp.float32)
    Ho2, Wo2 = Ho1 - 2, Wo1 - 2
    scale2, shift2 = _bn_scale_shift(s2, params["gamma2"], params["beta2"],
                                     N * Ho2 * Wo2, Cpad)

    # BN2 + ReLU + fused 2x2 maxpool.
    right_p, down_p = _bn_relu_pool(y2, scale2, shift2)

    # back to PyTorch conventions: un-pad channels, NHWC -> NCHW.
    right = jnp.transpose(right_p[..., :Cout], (0, 3, 1, 2))
    down = jnp.transpose(down_p[..., :Cout], (0, 3, 1, 2))
    # TODO(synk): BatchNorm running_mean/running_var updates (training-time side
    # effect of nn.BatchNorm2d) are not reproduced; only the forward activation is.
    return down, right


def init_params(key, in_channel, out_channel):
    k1, k2, k3, k4 = jax.random.split(key, 4)
    # Conv2d default init: U(-bound, bound) with bound = 1/sqrt(fan_in).
    bnd1 = 1.0 / jnp.sqrt(in_channel * 9)
    bnd2 = 1.0 / jnp.sqrt(out_channel * 9)
    return dict(
        w1=jax.random.uniform(k1, (out_channel, in_channel, 3, 3),
                              jnp.float32, -bnd1, bnd1),
        b1=jax.random.uniform(k2, (out_channel,), jnp.float32, -bnd1, bnd1),
        w2=jax.random.uniform(k3, (out_channel, out_channel, 3, 3),
                              jnp.float32, -bnd2, bnd2),
        b2=jax.random.uniform(k4, (out_channel,), jnp.float32, -bnd2, bnd2),
        gamma1=jnp.ones((out_channel,), jnp.float32),   # BatchNorm2d defaults
        beta1=jnp.zeros((out_channel,), jnp.float32),
        gamma2=jnp.ones((out_channel,), jnp.float32),
        beta2=jnp.zeros((out_channel,), jnp.float32),
    )


# pure-JAX reference (PyTorch semantics, f32, biases included) for validation.
def _reference_forward(x_nchw, params):
    def conv(x, w, b):
        y = lax.conv_general_dilated(x, w, (1, 1), "VALID",
                                     dimension_numbers=("NCHW", "OIHW", "NCHW"))
        return y + b.reshape(1, -1, 1, 1)

    def bn_relu(x, gamma, beta):
        mean = jnp.mean(x, axis=(0, 2, 3), keepdims=True)
        var = jnp.mean(jnp.square(x - mean), axis=(0, 2, 3), keepdims=True)
        y = (x - mean) * lax.rsqrt(var + EPS)
        y = y * gamma.reshape(1, -1, 1, 1) + beta.reshape(1, -1, 1, 1)
        return jnp.maximum(y, 0.0)

    h = bn_relu(conv(x_nchw, params["w1"], params["b1"]),
                params["gamma1"], params["beta1"])
    right = bn_relu(conv(h, params["w2"], params["b2"]),
                    params["gamma2"], params["beta2"])
    down = lax.reduce_window(right, -jnp.inf, lax.max,
                             (1, 1, 2, 2), (1, 1, 2, 2), "VALID")
    return down, right


if __name__ == "__main__":
    key = jax.random.PRNGKey(0)
    kx, kp = jax.random.split(key)

    N, in_ch, out_ch, H, W = 2, 4, 8, 16, 16
    x = jax.random.normal(kx, (N, in_ch, H, W), jnp.float32)    # NCHW input
    params = init_params(kp, in_ch, out_ch)

    down_out, right_out = jax.jit(down_conv_forward)(x, params)
    jax.block_until_ready((down_out, right_out))

    assert right_out.shape == (N, out_ch, H - 4, W - 4), right_out.shape
    assert down_out.shape == (N, out_ch, (H - 4) // 2, (W - 4) // 2), down_out.shape
    assert bool(jnp.all(jnp.isfinite(right_out))) and bool(jnp.all(jnp.isfinite(down_out)))

    ref_down, ref_right = jax.jit(_reference_forward)(x, params)
    assert bool(jnp.allclose(right_out, ref_right, rtol=5e-2, atol=5e-2)), \
        float(jnp.max(jnp.abs(right_out - ref_right)))
    assert bool(jnp.allclose(down_out, ref_down, rtol=5e-2, atol=5e-2)), \
        float(jnp.max(jnp.abs(down_out - ref_down)))

    print("KERNEL_OK")
</pallas_src>

<mosaic_0001>
module attributes {stable_mosaic.version = 11 : i64} {
  func.func @kernel(%arg0: i32, %arg1: i32, %arg2: memref<1x16x16x4xbf16, #tpu.memory_space<vmem>>, %arg3: memref<36x128xbf16, #tpu.memory_space<vmem>>, %arg4: memref<1x14x14x128xbf16, #tpu.memory_space<vmem>>, %arg5: memref<1x2x128xf32, #tpu.memory_space<vmem>>) attributes {dimension_semantics = [#tpu.dimension_semantics<parallel>, #tpu.dimension_semantics<arbitrary>], iteration_bounds = array<i64: 2, 1>, scalar_prefetch = 0 : i64, scratch_operands = 0 : i64, tpu.core_type = #tpu.core_type<tc>, window_params = [{transform_indices = @transform_0, window_bounds = array<i64: 1, 16, 16, 4>}, {pipeline_mode = #tpu.pipeline_mode<synchronous>, transform_indices = @transform_1, window_bounds = array<i64: 36, 128>}, {transform_indices = @transform_2, window_bounds = array<i64: 1, 14, 14, 128>}, {transform_indices = @transform_3, window_bounds = array<i64: 1, 2, 128>}]} {
    %c14_i32 = arith.constant 14 : i32
    %0 = arith.muli %arg1, %c14_i32 : i32
    %c0 = arith.constant 0 : index
    %c0_0 = arith.constant 0 : index
    %1 = vector.load %arg3[%c0, %c0_0] : memref<36x128xbf16, #tpu.memory_space<vmem>>, vector<36x128xbf16>
    %cst = arith.constant 0.000000e+00 : f32
    %2 = vector.broadcast %cst : f32 to vector<1x128xf32>
    %c0_i32 = arith.constant 0 : i32
    %c14_i32_1 = arith.constant 14 : i32
    %3 = arith.addi %c0_i32, %c14_i32_1 : i32
    %c1_i32 = arith.constant 1 : i32
    %4:2 = scf.for %arg6 = %c0_i32 to %3 step %c1_i32 iter_args(%arg7 = %2, %arg8 = %2) -> (vector<1x128xf32>, vector<1x128xf32>)  : i32 {
      %12 = arith.addi %0, %arg6 : i32
      %c0_i32_7 = arith.constant 0 : i32
      %13 = arith.addi %12, %c0_i32_7 : i32
      %c0_8 = arith.constant 0 : index
      %14 = arith.index_cast %13 : i32 to index
      %c0_9 = arith.constant 0 : index
      %c0_10 = arith.constant 0 : index
      %15 = vector.load %arg2[%c0_8, %14, %c0_9, %c0_10] : memref<1x16x16x4xbf16, #tpu.memory_space<vmem>>, vector<1x1x16x4xbf16>
      %16 = vector.shape_cast %15 : vector<1x1x16x4xbf16> to vector<16x4xbf16>
      %17 = vector.extract_strided_slice %16 {offsets = [0, 0], sizes = [14, 4], strides = [1, 1]} : vector<16x4xbf16> to vector<14x4xbf16>
      %18 = vector.extract_strided_slice %16 {offsets = [1, 0], sizes = [14, 4], strides = [1, 1]} : vector<16x4xbf16> to vector<14x4xbf16>
      %19 = vector.extract_strided_slice %16 {offsets = [2, 0], sizes = [14, 4], strides = [1, 1]} : vector<16x4xbf16> to vector<14x4xbf16>
      %20 = arith.addi %0, %arg6 : i32
      %c1_i32_11 = arith.constant 1 : i32
      %21 = arith.addi %20, %c1_i32_11 : i32
      %c0_12 = arith.constant 0 : index
      %22 = arith.index_cast %21 : i32 to index
      %c0_13 = arith.constant 0 : index
      %c0_14 = arith.constant 0 : index
      %23 = vector.load %arg2[%c0_12, %22, %c0_13, %c0_14] : memref<1x16x16x4xbf16, #tpu.memory_space<vmem>>, vector<1x1x16x4xbf16>
      %24 = vector.shape_cast %23 : vector<1x1x16x4xbf16> to vector<16x4xbf16>
      %25 = vector.extract_strided_slice %24 {offsets = [0, 0], sizes = [14, 4], strides = [1, 1]} : vector<16x4xbf16> to vector<14x4xbf16>
      %26 = vector.extract_strided_slice %24 {offsets = [1, 0], sizes = [14, 4], strides = [1, 1]} : vector<16x4xbf16> to vector<14x4xbf16>
      %27 = vector.extract_strided_slice %24 {offsets = [2, 0], sizes = [14, 4], strides = [1, 1]} : vector<16x4xbf16> to vector<14x4xbf16>
      %28 = arith.addi %0, %arg6 : i32
      %c2_i32 = arith.constant 2 : i32
      %29 = arith.addi %28, %c2_i32 : i32
      %c0_15 = arith.constant 0 : index
      %30 = arith.index_cast %29 : i32 to index
      %c0_16 = arith.constant 0 : index
      %c0_17 = arith.constant 0 : index
      %31 = vector.load %arg2[%c0_15, %30, %c0_16, %c0_17] : memref<1x16x16x4xbf16, #tpu.memory_space<vmem>>, vector<1x1x16x4xbf16>
      %32 = vector.shape_cast %31 : vector<1x1x16x4xbf16> to vector<16x4xbf16>
      %33 = vector.extract_strided_slice %32 {offsets = [0, 0], sizes = [14, 4], strides = [1, 1]} : vector<16x4xbf16> to vector<14x4xbf16>
      %34 = vector.extract_strided_slice %32 {offsets = [1, 0], sizes = [14, 4], strides = [1, 1]} : vector<16x4xbf16> to vector<14x4xbf16>
      %35 = vector.extract_strided_slice %32 {offsets = [2, 0], sizes = [14, 4], strides = [1, 1]} : vector<16x4xbf16> to vector<14x4xbf16>
      %cst_18 = arith.constant 0.000000e+00 : f32
      %36 = vector.broadcast %cst_18 : f32 to vector<14x128xf32>
      %37 = vector.extract_strided_slice %1 {offsets = [0, 0], sizes = [4, 128], strides = [1, 1]} : vector<36x128xbf16> to vector<4x128xbf16>
      %cst_19 = arith.constant dense<0.000000e+00> : vector<14x128xf32>
      %38 = tpu.matmul %17, %37, %cst_19 {dimension_numbers = #tpu.dot_dimension_numbers<[1], [0], [0], [1], [0, 0, 1, 1], [], []>} : vector<14x4xbf16>, vector<4x128xbf16>, vector<14x128xf32> -> vector<14x128xf32>
      %39 = arith.addf %36, %38 : vector<14x128xf32>
      %40 = vector.extract_strided_slice %1 {offsets = [4, 0], sizes = [4, 128], strides = [1, 1]} : vector<36x128xbf16> to vector<4x128xbf16>
      %cst_20 = arith.constant dense<0.000000e+00> : vector<14x128xf32>
      %41 = tpu.matmul %18, %40, %cst_20 {dimension_numbers = #tpu.dot_dimension_numbers<[1], [0], [0], [1], [0, 0, 1, 1], [], []>} : vector<14x4xbf16>, vector<4x128xbf16>, vector<14x128xf32> -> vector<14x128xf32>
      %42 = arith.addf %39, %41 : vector<14x128xf32>
      %43 = vector.extract_strided_slice %1 {offsets = [8, 0], sizes = [4, 128], strides = [1, 1]} : vector<36x128xbf16> to vector<4x128xbf16>
      %cst_21 = arith.constant dense<0.000000e+00> : vector<14x128xf32>
      %44 = tpu.matmul %19, %43, %cst_21 {dimension_numbers = #tpu.dot_dimension_numbers<[1], [0], [0], [1], [0, 0, 1, 1], [], []>} : vector<14x4xbf16>, vector<4x128xbf16>, vector<14x128xf32> -> vector<14x128xf32>
      %45 = arith.addf %42, %44 : vector<14x128xf32>
      %46 = vector.extract_strided_slice %1 {offsets = [12, 0], sizes = [4, 128], strides = [1, 1]} : vector<36x128xbf16> to vector<4x128xbf16>
      %cst_22 = arith.constant dense<0.000000e+00> : vector<14x128xf32>
      %47 = tpu.matmul %25, %46, %cst_22 {dimension_numbers = #tpu.dot_dimension_numbers<[1], [0], [0], [1], [0, 0, 1, 1], [], []>} : vector<14x4xbf16>, vector<4x128xbf16>, vector<14x128xf32> -> vector<14x128xf32>
      %48 = arith.addf %45, %47 : vector<14x128xf32>
      %49 = vector.extract_strided_slice %1 {offsets = [16, 0], sizes = [4, 128], strides = [1, 1]} : vector<36x128xbf16> to vector<4x128xbf16>
      %cst_23 = arith.constant dense<0.000000e+00> : vector<14x128xf32>
      %50 = tpu.matmul %26, %49, %cst_23 {dimension_numbers = #tpu.dot_dimension_numbers<[1], [0], [0], [1], [0, 0, 1, 1], [], []>} : vector<14x4xbf16>, vector<4x128xbf16>, vector<14x128xf32> -> vector<14x128xf32>
      %51 = arith.addf %48, %50 : vector<14x128xf32>
      %52 = vector.extract_strided_slice %1 {offsets = [20, 0], sizes = [4, 128], strides = [1, 1]} : vector<36x128xbf16> to vector<4x128xbf16>
      %cst_24 = arith.constant dense<0.000000e+00> : vector<14x128xf32>
      %53 = tpu.matmul %27, %52, %cst_24 {dimension_numbers = #tpu.dot_dimension_numbers<[1], [0], [0], [1], [0, 0, 1, 1], [], []>} : vector<14x4xbf16>, vector<4x128xbf16>, vector<14x128xf32> -> vector<14x128xf32>
      %54 = arith.addf %51, %53 : vector<14x128xf32>
      %55 = vector.extract_strided_slice %1 {offsets = [24, 0], sizes = [4, 128], strides = [1, 1]} : vector<36x128xbf16> to vector<4x128xbf16>
      %cst_25 = arith.constant dense<0.000000e+00> : vector<14x128xf32>
      %56 = tpu.matmul %33, %55, %cst_25 {dimension_numbers = #tpu.dot_dimension_numbers<[1], [0], [0], [1], [0, 0, 1, 1], [], []>} : vector<14x4xbf16>, vector<4x128xbf16>, vector<14x128xf32> -> vector<14x128xf32>
      %57 = arith.addf %54, %56 : vector<14x128xf32>
      %58 = vector.extract_strided_slice %1 {offsets = [28, 0], sizes = [4, 128], strides = [1, 1]} : vector<36x128xbf16> to vector<4x128xbf16>
      %cst_26 = arith.constant dense<0.000000e+00> : vector<14x128xf32>
      %59 = tpu.matmul %34, %58, %cst_26 {dimension_numbers = #tpu.dot_dimension_numbers<[1], [0], [0], [1], [0, 0, 1, 1], [], []>} : vector<14x4xbf16>, vector<4x128xbf16>, vector<14x128xf32> -> vector<14x128xf32>
      %60 = arith.addf %57, %59 : vector<14x128xf32>
      %61 = vector.extract_strided_slice %1 {offsets = [32, 0], sizes = [4, 128], strides = [1, 1]} : vector<36x128xbf16> to vector<4x128xbf16>
      %cst_27 = arith.constant dense<0.000000e+00> : vector<14x128xf32>
      %62 = tpu.matmul %35, %61, %cst_27 {dimension_numbers = #tpu.dot_dimension_numbers<[1], [0], [0], [1], [0, 0, 1, 1], [], []>} : vector<14x4xbf16>, vector<4x128xbf16>, vector<14x128xf32> -> vector<14x128xf32>
      %63 = arith.addf %60, %62 : vector<14x128xf32>
      %64 = arith.truncf %63 : vector<14x128xf32> to vector<14x128xbf16>
      %c0_28 = arith.constant 0 : index
      %65 = arith.index_cast %arg6 : i32 to index
      %c0_29 = arith.constant 0 : index
      %c0_30 = arith.constant 0 : index
      %66 = vector.load %arg4[%c0_28, %65, %c0_29, %c0_30] : memref<1x14x14x128xbf16, #tpu.memory_space<vmem>>, vector<1x1x14x128xbf16>
      %67 = vector.shape_cast %66 : vector<1x1x14x128xbf16> to vector<14x128xbf16>
      %68 = vector.shape_cast %64 : vector<14x128xbf16> to vector<1x1x14x128xbf16>
      tpu.vector_store %arg4[%c0_28, %65, %c0_29, %c0_30], %68 {strides = array<i32>} : memref<1x14x14x128xbf16, #tpu.memory_space<vmem>>, vector<1x1x14x128xbf16>,
      %cst_31 = arith.constant dense<0.000000e+00> : vector<128xf32>
      %69 = vector.multi_reduction <add>, %63, %cst_31 [0] : vector<14x128xf32> to vector<128xf32>
      %70 = vector.shape_cast %69 : vector<128xf32> to vector<1x128xf32>
      %71 = arith.addf %arg7, %70 : vector<1x128xf32>
      %72 = arith.mulf %63, %63 : vector<14x128xf32>
      %cst_32 = arith.constant dense<0.000000e+00> : vector<128xf32>
      %73 = vector.multi_reduction <add>, %72, %cst_32 [0] : vector<14x128xf32> to vector<128xf32>
      %74 = vector.shape_cast %73 : vector<128xf32> to vector<1x128xf32>
      %75 = arith.addf %arg8, %74 : vector<1x128xf32>
      scf.yield %71, %75 : vector<1x128xf32>, vector<1x128xf32>
    }
    %c14_i32_2 = arith.constant 14 : i32
    %5 = tpu.concatenate %4#0, %4#1 in 0 : vector<1x128xf32>, vector<1x128xf32> -> vector<2x128xf32>
    %c0_i32_3 = arith.constant 0 : i32
    %6 = arith.cmpi eq, %arg1, %c0_i32_3 : i32
    %7 = arith.extui %6 : i1 to i32
    %c0_i32_4 = arith.constant 0 : i32
    %8 = arith.cmpi ne, %7, %c0_i32_4 : i32
    scf.if %8 {
      %c0_7 = arith.constant 0 : index
      %c0_8 = arith.constant 0 : index
      %c0_9 = arith.constant 0 : index
      %12 = vector.load %arg5[%c0_7, %c0_8, %c0_9] : memref<1x2x128xf32, #tpu.memory_space<vmem>>, vector<1x2x128xf32>
      %13 = vector.shape_cast %12 : vector<1x2x128xf32> to vector<2x128xf32>
      %14 = vector.shape_cast %5 : vector<2x128xf32> to vector<1x2x128xf32>
      tpu.vector_store %arg5[%c0_7, %c0_8, %c0_9], %14 {strides = array<i32>} : memref<1x2x128xf32, #tpu.memory_space<vmem>>, vector<1x2x128xf32>,
    } else {
    }
    %c0_i32_5 = arith.constant 0 : i32
    %9 = arith.cmpi sgt, %arg1, %c0_i32_5 : i32
    %10 = arith.extui %9 : i1 to i32
    %c0_i32_6 = arith.constant 0 : i32
    %11 = arith.cmpi ne, %10, %c0_i32_6 : i32
    scf.if %11 {
      %c0_7 = arith.constant 0 : index
      %c0_8 = arith.constant 0 : index
      %c0_9 = arith.constant 0 : index
      %12 = vector.load %arg5[%c0_7, %c0_8, %c0_9] : memref<1x2x128xf32, #tpu.memory_space<vmem>>, vector<1x2x128xf32>
      %13 = vector.shape_cast %12 : vector<1x2x128xf32> to vector<2x128xf32>
      %14 = arith.addf %13, %5 : vector<2x128xf32>
      %c0_10 = arith.constant 0 : index
      %c0_11 = arith.constant 0 : index
      %c0_12 = arith.constant 0 : index
      %15 = vector.load %arg5[%c0_10, %c0_11, %c0_12] : memref<1x2x128xf32, #tpu.memory_space<vmem>>, vector<1x2x128xf32>
      %16 = vector.shape_cast %15 : vector<1x2x128xf32> to vector<2x128xf32>
      %17 = vector.shape_cast %14 : vector<2x128xf32> to vector<1x2x128xf32>
      tpu.vector_store %arg5[%c0_10, %c0_11, %c0_12], %17 {strides = array<i32>} : memref<1x2x128xf32, #tpu.memory_space<vmem>>, vector<1x2x128xf32>,
    } else {
    }
    return
  }
  func.func @transform_0(%arg0: i32, %arg1: i32) -> (i32, i32, i32, i32) {
    %c0_i32 = arith.constant 0 : i32
    %c0_i32_0 = arith.constant 0 : i32
    %c0_i32_1 = arith.constant 0 : i32
    %c0_i32_2 = arith.constant 0 : i32
    return %arg0, %c0_i32, %c0_i32_0, %c0_i32_1 : i32, i32, i32, i32
  }
  func.func @transform_1(%arg0: i32, %arg1: i32) -> (i32, i32) {
    %c0_i32 = arith.constant 0 : i32
    %c0_i32_0 = arith.constant 0 : i32
    %c0_i32_1 = arith.constant 0 : i32
    return %c0_i32, %c0_i32_0 : i32, i32
  }
  func.func @transform_2(%arg0: i32, %arg1: i32) -> (i32, i32, i32, i32) {
    %c0_i32 = arith.constant 0 : i32
    %c0_i32_0 = arith.constant 0 : i32
    %c0_i32_1 = arith.constant 0 : i32
    return %arg0, %arg1, %c0_i32, %c0_i32_0 : i32, i32, i32, i32
  }
  func.func @transform_3(%arg0: i32, %arg1: i32) -> (i32, i32, i32) {
    %c0_i32 = arith.constant 0 : i32
    %c0_i32_0 = arith.constant 0 : i32
    %c0_i32_1 = arith.constant 0 : i32
    return %arg0, %c0_i32, %c0_i32_0 : i32, i32, i32
  }
}

module attributes {stable_mosaic.version = 11 : i64} {
  func.func @kernel(%arg0: i32, %arg1: i32, %arg2: memref<1x14x14x128xbf16, #tpu.memory_space<vmem>>, %arg3: memref<1152x128xbf16, #tpu.memory_space<vmem>>, %arg4: memref<1x128xf32, #tpu.memory_space<vmem>>, %arg5: memref<1x128xf32, #tpu.memory_space<vmem>>, %arg6: memref<1x12x12x128xf32, #tpu.memory_space<vmem>>, %arg7: memref<1x2x128xf32, #tpu.memory_space<vmem>>) attributes {dimension_semantics = [#tpu.dimension_semantics<parallel>, #tpu.dimension_semantics<arbitrary>], iteration_bounds = array<i64: 2, 1>, scalar_prefetch = 0 : i64, scratch_operands = 0 : i64, tpu.core_type = #tpu.core_type<tc>, window_params = [{transform_indices = @transform_0, window_bounds = array<i64: 1, 14, 14, 128>}, {pipeline_mode = #tpu.pipeline_mode<synchronous>, transform_indices = @transform_1, window_bounds = array<i64: 1152, 128>}, {pipeline_mode = #tpu.pipeline_mode<synchronous>, transform_indices = @transform_2, window_bounds = array<i64: 1, 128>}, {pipeline_mode = #tpu.pipeline_mode<synchronous>, transform_indices = @transform_3, window_bounds = array<i64: 1, 128>}, {transform_indices = @transform_4, window_bounds = array<i64: 1, 12, 12, 128>}, {transform_indices = @transform_5, window_bounds = array<i64: 1, 2, 128>}]} {
    %c12_i32 = arith.constant 12 : i32
    %0 = arith.muli %arg1, %c12_i32 : i32
    %c0 = arith.constant 0 : index
    %c0_0 = arith.constant 0 : index
    %1 = vector.load %arg3[%c0, %c0_0] : memref<1152x128xbf16, #tpu.memory_space<vmem>>, vector<1152x128xbf16>
    %cst = arith.constant 0.000000e+00 : f32
    %2 = vector.broadcast %cst : f32 to vector<1x128xf32>
    %c0_i32 = arith.constant 0 : i32
    %c12_i32_1 = arith.constant 12 : i32
    %3 = arith.addi %c0_i32, %c12_i32_1 : i32
    %c1_i32 = arith.constant 1 : i32
    %4:2 = scf.for %arg8 = %c0_i32 to %3 step %c1_i32 iter_args(%arg9 = %2, %arg10 = %2) -> (vector<1x128xf32>, vector<1x128xf32>)  : i32 {
      %12 = arith.addi %0, %arg8 : i32
      %c0_i32_7 = arith.constant 0 : i32
      %13 = arith.addi %12, %c0_i32_7 : i32
      %c0_8 = arith.constant 0 : index
      %14 = arith.index_cast %13 : i32 to index
      %c0_9 = arith.constant 0 : index
      %c0_10 = arith.constant 0 : index
      %15 = vector.load %arg2[%c0_8, %14, %c0_9, %c0_10] : memref<1x14x14x128xbf16, #tpu.memory_space<vmem>>, vector<1x1x14x128xbf16>
      %16 = vector.shape_cast %15 : vector<1x1x14x128xbf16> to vector<14x128xbf16>
      %17 = arith.extf %16 : vector<14x128xbf16> to vector<14x128xf32>
      %c0_11 = arith.constant 0 : index
      %c0_12 = arith.constant 0 : index
      %18 = vector.load %arg4[%c0_11, %c0_12] : memref<1x128xf32, #tpu.memory_space<vmem>>, vector<1x128xf32>
      %19 = vector.broadcast %18 : vector<1x128xf32> to vector<14x128xf32>
      %20 = arith.mulf %17, %19 : vector<14x128xf32>
      %c0_13 = arith.constant 0 : index
      %c0_14 = arith.constant 0 : index
      %21 = vector.load %arg5[%c0_13, %c0_14] : memref<1x128xf32, #tpu.memory_space<vmem>>, vector<1x128xf32>
      %22 = vector.broadcast %21 : vector<1x128xf32> to vector<14x128xf32>
      %23 = arith.addf %20, %22 : vector<14x128xf32>
      %cst_15 = arith.constant 0.000000e+00 : f32
      %24 = vector.broadcast %cst_15 : f32 to vector<14x128xf32>
      %25 = arith.maximumf %23, %24 : vector<14x128xf32>
      %26 = arith.truncf %25 : vector<14x128xf32> to vector<14x128xbf16>
      %27 = vector.extract_strided_slice %26 {offsets = [0, 0], sizes = [12, 128], strides = [1, 1]} : vector<14x128xbf16> to vector<12x128xbf16>
      %28 = vector.extract_strided_slice %26 {offsets = [1, 0], sizes = [12, 128], strides = [1, 1]} : vector<14x128xbf16> to vector<12x128xbf16>
      %29 = vector.extract_strided_slice %26 {offsets = [2, 0], sizes = [12, 128], strides = [1, 1]} : vector<14x128xbf16> to vector<12x128xbf16>
      %30 = arith.addi %0, %arg8 : i32
      %c1_i32_16 = arith.constant 1 : i32
      %31 = arith.addi %30, %c1_i32_16 : i32
      %c0_17 = arith.constant 0 : index
      %32 = arith.index_cast %31 : i32 to index
      %c0_18 = arith.constant 0 : index
      %c0_19 = arith.constant 0 : index
      %33 = vector.load %arg2[%c0_17, %32, %c0_18, %c0_19] : memref<1x14x14x128xbf16, #tpu.memory_space<vmem>>, vector<1x1x14x128xbf16>
      %34 = vector.shape_cast %33 : vector<1x1x14x128xbf16> to vector<14x128xbf16>
      %35 = arith.extf %34 : vector<14x128xbf16> to vector<14x128xf32>
      %c0_20 = arith.constant 0 : index
      %c0_21 = arith.constant 0 : index
      %36 = vector.load %arg4[%c0_20, %c0_21] : memref<1x128xf32, #tpu.memory_space<vmem>>, vector<1x128xf32>
      %37 = vector.broadcast %36 : vector<1x128xf32> to vector<14x128xf32>
      %38 = arith.mulf %35, %37 : vector<14x128xf32>
      %c0_22 = arith.constant 0 : index
      %c0_23 = arith.constant 0 : index
      %39 = vector.load %arg5[%c0_22, %c0_23] : memref<1x128xf32, #tpu.memory_space<vmem>>, vector<1x128xf32>
      %40 = vector.broadcast %39 : vector<1x128xf32> to vector<14x128xf32>
      %41 = arith.addf %38, %40 : vector<14x128xf32>
      %cst_24 = arith.constant 0.000000e+00 : f32
      %42 = vector.broadcast %cst_24 : f32 to vector<14x128xf32>
      %43 = arith.maximumf %41, %42 : vector<14x128xf32>
      %44 = arith.truncf %43 : vector<14x128xf32> to vector<14x128xbf16>
      %45 = vector.extract_strided_slice %44 {offsets = [0, 0], sizes = [12, 128], strides = [1, 1]} : vector<14x128xbf16> to vector<12x128xbf16>
      %46 = vector.extract_strided_slice %44 {offsets = [1, 0], sizes = [12, 128], strides = [1, 1]} : vector<14x128xbf16> to vector<12x128xbf16>
      %47 = vector.extract_strided_slice %44 {offsets = [2, 0], sizes = [12, 128], strides = [1, 1]} : vector<14x128xbf16> to vector<12x128xbf16>
      %48 = arith.addi %0, %arg8 : i32
      %c2_i32 = arith.constant 2 : i32
      %49 = arith.addi %48, %c2_i32 : i32
      %c0_25 = arith.constant 0 : index
      %50 = arith.index_cast %49 : i32 to index
      %c0_26 = arith.constant 0 : index
      %c0_27 = arith.constant 0 : index
      %51 = vector.load %arg2[%c0_25, %50, %c0_26, %c0_27] : memref<1x14x14x128xbf16, #tpu.memory_space<vmem>>, vector<1x1x14x128xbf16>
      %52 = vector.shape_cast %51 : vector<1x1x14x128xbf16> to vector<14x128xbf16>
      %53 = arith.extf %52 : vector<14x128xbf16> to vector<14x128xf32>
      %c0_28 = arith.constant 0 : index
      %c0_29 = arith.constant 0 : index
      %54 = vector.load %arg4[%c0_28, %c0_29] : memref<1x128xf32, #tpu.memory_space<vmem>>, vector<1x128xf32>
      %55 = vector.broadcast %54 : vector<1x128xf32> to vector<14x128xf32>
      %56 = arith.mulf %53, %55 : vector<14x128xf32>
      %c0_30 = arith.constant 0 : index
      %c0_31 = arith.constant 0 : index
      %57 = vector.load %arg5[%c0_30, %c0_31] : memref<1x128xf32, #tpu.memory_space<vmem>>, vector<1x128xf32>
      %58 = vector.broadcast %57 : vector<1x128xf32> to vector<14x128xf32>
      %59 = arith.addf %56, %58 : vector<14x128xf32>
      %cst_32 = arith.constant 0.000000e+00 : f32
      %60 = vector.broadcast %cst_32 : f32 to vector<14x128xf32>
      %61 = arith.maximumf %59, %60 : vector<14x128xf32>
      %62 = arith.truncf %61 : vector<14x128xf32> to vector<14x128xbf16>
      %63 = vector.extract_strided_slice %62 {offsets = [0, 0], sizes = [12, 128], strides = [1, 1]} : vector<14x128xbf16> to vector<12x128xbf16>
      %64 = vector.extract_strided_slice %62 {offsets = [1, 0], sizes = [12, 128], strides = [1, 1]} : vector<14x128xbf16> to vector<12x128xbf16>
      %65 = vector.extract_strided_slice %62 {offsets = [2, 0], sizes = [12, 128], strides = [1, 1]} : vector<14x128xbf16> to vector<12x128xbf16>
      %66 = tpu.concatenate %27, %28, %29, %45, %46, %47, %63, %64, %65 in 1 : vector<12x128xbf16>, vector<12x128xbf16>, vector<12x128xbf16>, vector<12x128xbf16>, vector<12x128xbf16>, vector<12x128xbf16>, vector<12x128xbf16>, vector<12x128xbf16>, vector<12x128xbf16> -> vector<12x1152xbf16>
      %cst_33 = arith.constant dense<0.000000e+00> : vector<12x128xf32>
      %67 = tpu.matmul %66, %1, %cst_33 {dimension_numbers = #tpu.dot_dimension_numbers<[1], [0], [0], [1], [0, 0, 1, 1], [], []>} : vector<12x1152xbf16>, vector<1152x128xbf16>, vector<12x128xf32> -> vector<12x128xf32>
      %c0_34 = arith.constant 0 : index
      %68 = arith.index_cast %arg8 : i32 to index
      %c0_35 = arith.constant 0 : index
      %c0_36 = arith.constant 0 : index
      %69 = vector.load %arg6[%c0_34, %68, %c0_35, %c0_36] : memref<1x12x12x128xf32, #tpu.memory_space<vmem>>, vector<1x1x12x128xf32>
      %70 = vector.shape_cast %69 : vector<1x1x12x128xf32> to vector<12x128xf32>
      %71 = vector.shape_cast %67 : vector<12x128xf32> to vector<1x1x12x128xf32>
      tpu.vector_store %arg6[%c0_34, %68, %c0_35, %c0_36], %71 {strides = array<i32>} : memref<1x12x12x128xf32, #tpu.memory_space<vmem>>, vector<1x1x12x128xf32>,
      %cst_37 = arith.constant dense<0.000000e+00> : vector<128xf32>
      %72 = vector.multi_reduction <add>, %67, %cst_37 [0] : vector<12x128xf32> to vector<128xf32>
      %73 = vector.shape_cast %72 : vector<128xf32> to vector<1x128xf32>
      %74 = arith.addf %arg9, %73 : vector<1x128xf32>
      %75 = arith.mulf %67, %67 : vector<12x128xf32>
      %cst_38 = arith.constant dense<0.000000e+00> : vector<128xf32>
      %76 = vector.multi_reduction <add>, %75, %cst_38 [0] : vector<12x128xf32> to vector<128xf32>
      %77 = vector.shape_cast %76 : vector<128xf32> to vector<1x128xf32>
      %78 = arith.addf %arg10, %77 : vector<1x128xf32>
      scf.yield %74, %78 : vector<1x128xf32>, vector<1x128xf32>
    }
    %c12_i32_2 = arith.constant 12 : i32
    %5 = tpu.concatenate %4#0, %4#1 in 0 : vector<1x128xf32>, vector<1x128xf32> -> vector<2x128xf32>
    %c0_i32_3 = arith.constant 0 : i32
    %6 = arith.cmpi eq, %arg1, %c0_i32_3 : i32
    %7 = arith.extui %6 : i1 to i32
    %c0_i32_4 = arith.constant 0 : i32
    %8 = arith.cmpi ne, %7, %c0_i32_4 : i32
    scf.if %8 {
      %c0_7 = arith.constant 0 : index
      %c0_8 = arith.constant 0 : index
      %c0_9 = arith.constant 0 : index
      %12 = vector.load %arg7[%c0_7, %c0_8, %c0_9] : memref<1x2x128xf32, #tpu.memory_space<vmem>>, vector<1x2x128xf32>
      %13 = vector.shape_cast %12 : vector<1x2x128xf32> to vector<2x128xf32>
      %14 = vector.shape_cast %5 : vector<2x128xf32> to vector<1x2x128xf32>
      tpu.vector_store %arg7[%c0_7, %c0_8, %c0_9], %14 {strides = array<i32>} : memref<1x2x128xf32, #tpu.memory_space<vmem>>, vector<1x2x128xf32>,
    } else {
    }
    %c0_i32_5 = arith.constant 0 : i32
    %9 = arith.cmpi sgt, %arg1, %c0_i32_5 : i32
    %10 = arith.extui %9 : i1 to i32
    %c0_i32_6 = arith.constant 0 : i32
    %11 = arith.cmpi ne, %10, %c0_i32_6 : i32
    scf.if %11 {
      %c0_7 = arith.constant 0 : index
      %c0_8 = arith.constant 0 : index
      %c0_9 = arith.constant 0 : index
      %12 = vector.load %arg7[%c0_7, %c0_8, %c0_9] : memref<1x2x128xf32, #tpu.memory_space<vmem>>, vector<1x2x128xf32>
      %13 = vector.shape_cast %12 : vector<1x2x128xf32> to vector<2x128xf32>
      %14 = arith.addf %13, %5 : vector<2x128xf32>
      %c0_10 = arith.constant 0 : index
      %c0_11 = arith.constant 0 : index
      %c0_12 = arith.constant 0 : index
      %15 = vector.load %arg7[%c0_10, %c0_11, %c0_12] : memref<1x2x128xf32, #tpu.memory_space<vmem>>, vector<1x2x128xf32>
      %16 = vector.shape_cast %15 : vector<1x2x128xf32> to vector<2x128xf32>
      %17 = vector.shape_cast %14 : vector<2x128xf32> to vector<1x2x128xf32>
      tpu.vector_store %arg7[%c0_10, %c0_11, %c0_12], %17 {strides = array<i32>} : memref<1x2x128xf32, #tpu.memory_space<vmem>>, vector<1x2x128xf32>,
    } else {
    }
    return
  }
  func.func @transform_0(%arg0: i32, %arg1: i32) -> (i32, i32, i32, i32) {
    %c0_i32 = arith.constant 0 : i32
    %c0_i32_0 = arith.constant 0 : i32
    %c0_i32_1 = arith.constant 0 : i32
    %c0_i32_2 = arith.constant 0 : i32
    return %arg0, %c0_i32, %c0_i32_0, %c0_i32_1 : i32, i32, i32, i32
  }
  func.func @transform_1(%arg0: i32, %arg1: i32) -> (i32, i32) {
    %c0_i32 = arith.constant 0 : i32
    %c0_i32_0 = arith.constant 0 : i32
    %c0_i32_1 = arith.constant 0 : i32
    return %c0_i32, %c0_i32_0 : i32, i32
  }
  func.func @transform_2(%arg0: i32, %arg1: i32) -> (i32, i32) {
    %c0_i32 = arith.constant 0 : i32
    %c0_i32_0 = arith.constant 0 : i32
    %c0_i32_1 = arith.constant 0 : i32
    return %c0_i32, %c0_i32_0 : i32, i32
  }
  func.func @transform_3(%arg0: i32, %arg1: i32) -> (i32, i32) {
    %c0_i32 = arith.constant 0 : i32
    %c0_i32_0 = arith.constant 0 : i32
    %c0_i32_1 = arith.constant 0 : i32
    return %c0_i32, %c0_i32_0 : i32, i32
  }
  func.func @transform_4(%arg0: i32, %arg1: i32) -> (i32, i32, i32, i32) {
    %c0_i32 = arith.constant 0 : i32
    %c0_i32_0 = arith.constant 0 : i32
    %c0_i32_1 = arith.constant 0 : i32
    return %arg0, %arg1, %c0_i32, %c0_i32_0 : i32, i32, i32, i32
  }
  func.func @transform_5(%arg0: i32, %arg1: i32) -> (i32, i32, i32) {
    %c0_i32 = arith.constant 0 : i32
    %c0_i32_0 = arith.constant 0 : i32
    %c0_i32_1 = arith.constant 0 : i32
    return %arg0, %c0_i32, %c0_i32_0 : i32, i32, i32
  }
}

module attributes {stable_mosaic.version = 11 : i64} {
  func.func @kernel(%arg0: i32, %arg1: i32, %arg2: memref<1x12x6x2x128xf32, #tpu.memory_space<vmem>>, %arg3: memref<1x128xf32, #tpu.memory_space<vmem>>, %arg4: memref<1x128xf32, #tpu.memory_space<vmem>>, %arg5: memref<1x12x6x2x128xf32, #tpu.memory_space<vmem>>, %arg6: memref<1x6x6x128xf32, #tpu.memory_space<vmem>>) attributes {dimension_semantics = [#tpu.dimension_semantics<parallel>, #tpu.dimension_semantics<parallel>], iteration_bounds = array<i64: 2, 1>, scalar_prefetch = 0 : i64, scratch_operands = 0 : i64, tpu.core_type = #tpu.core_type<tc>, window_params = [{transform_indices = @transform_0, window_bounds = array<i64: 1, 12, 6, 2, 128>}, {pipeline_mode = #tpu.pipeline_mode<synchronous>, transform_indices = @transform_1, window_bounds = array<i64: 1, 128>}, {pipeline_mode = #tpu.pipeline_mode<synchronous>, transform_indices = @transform_2, window_bounds = array<i64: 1, 128>}, {transform_indices = @transform_3, window_bounds = array<i64: 1, 12, 6, 2, 128>}, {transform_indices = @transform_4, window_bounds = array<i64: 1, 6, 6, 128>}]} {
    %c0 = arith.constant 0 : index
    %c0_0 = arith.constant 0 : index
    %c0_1 = arith.constant 0 : index
    %c0_2 = arith.constant 0 : index
    %c0_3 = arith.constant 0 : index
    %0 = vector.load %arg2[%c0, %c0_0, %c0_1, %c0_2, %c0_3] : memref<1x12x6x2x128xf32, #tpu.memory_space<vmem>>, vector<1x12x6x2x128xf32>
    %1 = vector.shape_cast %0 : vector<1x12x6x2x128xf32> to vector<12x6x2x128xf32>
    %c0_4 = arith.constant 0 : index
    %c0_5 = arith.constant 0 : index
    %2 = vector.load %arg3[%c0_4, %c0_5] : memref<1x128xf32, #tpu.memory_space<vmem>>, vector<1x128xf32>
    %3 = vector.shape_cast %2 : vector<1x128xf32> to vector<1x1x1x128xf32>
    %4 = vector.broadcast %3 : vector<1x1x1x128xf32> to vector<12x6x2x128xf32>
    %5 = arith.mulf %1, %4 : vector<12x6x2x128xf32>
    %c0_6 = arith.constant 0 : index
    %c0_7 = arith.constant 0 : index
    %6 = vector.load %arg4[%c0_6, %c0_7] : memref<1x128xf32, #tpu.memory_space<vmem>>, vector<1x128xf32>
    %7 = vector.shape_cast %6 : vector<1x128xf32> to vector<1x1x1x128xf32>
    %8 = vector.broadcast %7 : vector<1x1x1x128xf32> to vector<12x6x2x128xf32>
    %9 = arith.addf %5, %8 : vector<12x6x2x128xf32>
    %cst = arith.constant 0.000000e+00 : f32
    %10 = vector.broadcast %cst : f32 to vector<12x6x2x128xf32>
    %11 = arith.maximumf %9, %10 : vector<12x6x2x128xf32>
    %c0_8 = arith.constant 0 : index
    %c0_9 = arith.constant 0 : index
    %c0_10 = arith.constant 0 : index
    %c0_11 = arith.constant 0 : index
    %c0_12 = arith.constant 0 : index
    %12 = vector.load %arg5[%c0_8, %c0_9, %c0_10, %c0_11, %c0_12] : memref<1x12x6x2x128xf32, #tpu.memory_space<vmem>>, vector<1x12x6x2x128xf32>
    %13 = vector.shape_cast %12 : vector<1x12x6x2x128xf32> to vector<12x6x2x128xf32>
    %14 = vector.shape_cast %11 : vector<12x6x2x128xf32> to vector<1x12x6x2x128xf32>
    tpu.vector_store %arg5[%c0_8, %c0_9, %c0_10, %c0_11, %c0_12], %14 {strides = array<i32>} : memref<1x12x6x2x128xf32, #tpu.memory_space<vmem>>, vector<1x12x6x2x128xf32>,
    %cst_13 = arith.constant dense<0xFF800000> : vector<12x6x128xf32>
    %15 = vector.multi_reduction <maximumf>, %11, %cst_13 [2] : vector<12x6x2x128xf32> to vector<12x6x128xf32>
    %16 = vector.shape_cast %15 : vector<12x6x128xf32> to vector<6x2x6x128xf32>
    %cst_14 = arith.constant dense<0xFF800000> : vector<6x6x128xf32>
    %17 = vector.multi_reduction <maximumf>, %16, %cst_14 [1] : vector<6x2x6x128xf32> to vector<6x6x128xf32>
    %c0_15 = arith.constant 0 : index
    %c0_16 = arith.constant 0 : index
    %c0_17 = arith.constant 0 : index
    %c0_18 = arith.constant 0 : index
    %18 = vector.load %arg6[%c0_15, %c0_16, %c0_17, %c0_18] : memref<1x6x6x128xf32, #tpu.memory_space<vmem>>, vector<1x6x6x128xf32>
    %19 = vector.shape_cast %18 : vector<1x6x6x128xf32> to vector<6x6x128xf32>
    %20 = vector.shape_cast %17 : vector<6x6x128xf32> to vector<1x6x6x128xf32>
    tpu.vector_store %arg6[%c0_15, %c0_16, %c0_17, %c0_18], %20 {strides = array<i32>} : memref<1x6x6x128xf32, #tpu.memory_space<vmem>>, vector<1x6x6x128xf32>,
    return
  }
  func.func @transform_0(%arg0: i32, %arg1: i32) -> (i32, i32, i32, i32, i32) {
    %c0_i32 = arith.constant 0 : i32
    %c0_i32_0 = arith.constant 0 : i32
    %c0_i32_1 = arith.constant 0 : i32
    %c0_i32_2 = arith.constant 0 : i32
    return %arg0, %arg1, %c0_i32, %c0_i32_0, %c0_i32_1 : i32, i32, i32, i32, i32
  }
  func.func @transform_1(%arg0: i32, %arg1: i32) -> (i32, i32) {
    %c0_i32 = arith.constant 0 : i32
    %c0_i32_0 = arith.constant 0 : i32
    %c0_i32_1 = arith.constant 0 : i32
    return %c0_i32, %c0_i32_0 : i32, i32
  }
  func.func @transform_2(%arg0: i32, %arg1: i32) -> (i32, i32) {
    %c0_i32 = arith.constant 0 : i32
    %c0_i32_0 = arith.constant 0 : i32
    %c0_i32_1 = arith.constant 0 : i32
    return %c0_i32, %c0_i32_0 : i32, i32
  }
  func.func @transform_3(%arg0: i32, %arg1: i32) -> (i32, i32, i32, i32, i32) {
    %c0_i32 = arith.constant 0 : i32
    %c0_i32_0 = arith.constant 0 : i32
    %c0_i32_1 = arith.constant 0 : i32
    %c0_i32_2 = arith.constant 0 : i32
    return %arg0, %arg1, %c0_i32, %c0_i32_0, %c0_i32_1 : i32, i32, i32, i32, i32
  }
  func.func @transform_4(%arg0: i32, %arg1: i32) -> (i32, i32, i32, i32) {
    %c0_i32 = arith.constant 0 : i32
    %c0_i32_0 = arith.constant 0 : i32
    %c0_i32_1 = arith.constant 0 : i32
    return %arg0, %arg1, %c0_i32, %c0_i32_0 : i32, i32, i32, i32
  }
}

</mosaic_0001>

<llo_original>
// kernel: down_conv_forward.3
$region0: #{down_conv_forward.3}
  #allocation0 [shape = 'u32[]', space=smem, size = 0x4, offset = 0x4, fixed_abs, tag = 'smem constant byte address 0x4 - core index']
  #allocation1 [shape = 'u32[144,128]{1,0:T(1,128)}', space=vmem, size = 0x12000, scoped, tag = 'internal scratch']
  %s0 = inlined_call_operand.vmem [shape: bf16[2,16,16,4], index: 0, kind: input, shape index: {}]
  %s1 = inlined_call_operand.vmem [shape: bf16[36,128], index: 1, kind: input, shape index: {}]
  %s2 = inlined_call_operand.vmem [shape: bf16[2,14,14,128], index: 2, kind: output, shape index: {0}]
  %s3 = inlined_call_operand.vmem [shape: f32[2,2,128], index: 3, kind: output, shape index: {1}]
  %4 = xla_tuple %s2, %s3
  %s5 = sld [smem:[#allocation0]]
  $region64: #{down_conv_forward.3} parent=0
    _
  %s7 = ssub.s32 1, %s5
  %s8 = scalar_select 0, %s7, %s5
  loop: start=0, step=1, limit=4
  $region2: #{down_conv_forward.3} parent=0 // loop_pre_header
    _
  $region3: #{down_conv_forward.3} parent=0 // loop_header
    %s10 = sphi 0, %s14
    %p11 = scmp.ge.s32.totalorder %s10, 4
    %s17 = sphi 0, %s29
    %s18 = sphi 0, %s25
    %s19 = sphi 0, %s17
    %s20 = sphi 0, %s18
    %s21 = sphi 0, %s19
    %s22 = sphi 0, %s20
    %s32 = sphi 0, %s34
    %s35 = sphi 0, %s32
    %s36 = sphi 0, %s35
    %s52 = sphi 0, %s36
    %s56 = sphi 0, %s56
    %s58 = sphi 0, %s56
    %s59 = sphi 0, %s58
    %s73 = sphi 0, %s59
    %s81 = sphi 0, %s83
    %s84 = sphi 0, %s81
    %s85 = sphi 0, %s84
    %s101 = sphi 0, %s85
    %s107 = sphi 0, %s109
    %s110 = sphi 0, %s107
    %s111 = sphi 0, %s110
    %s127 = sphi 0, %s111
  $region4: #{down_conv_forward.3} parent=0 // loop_header_branch
    %13 = sbr.rel (%p11) target = $region8
  $region5: #{down_conv_forward.3} parent=0 // loop_body
    %s15 = ssub.s32 %s10, 1
    %s16 = ssub.s32 %s10, 2
    %s23 = sadd.s32 1, %s18
    %p24 = scmp.ge.s32.totalorder %s23, 1
    %s25 = scalar_select %p24, 0, %s23
    %s26 = sadd.s32 1, %s17
    %s27 = scalar_select %p24, %s26, %s17
    %p28 = scmp.ge.s32.totalorder %s27, 2
    %s29 = scalar_select %p28, 0, %s27
    %s30 = ssub.s32 %s17, %s29
    %p31 = scmp.eq.s32.totalorder %s30, 0
    %s33 = sadd.s32 %s32, 1
    %s34 = scalar_select %p31, %s32, %s33
    %p37 = pneg %p31
    %p38 = scmp.eq.s32.totalorder %s10, 1
    %p39 = por %p37, %p38
    %p40 = scmp.ne.s32.totalorder %s32, %s35
    %p41 = scmp.eq.s32.totalorder %s10, 0
    %p42 = por %p40, %p41
    %p43 = scmp.ne.s32.totalorder %s32, %s35
    %p44 = scmp.eq.s32.totalorder %s15, 1
    %p45 = por %p43, %p44
    %p46 = scmp.ne.s32.totalorder %s35, %s36
    %p47 = scmp.eq.s32.totalorder %s15, 0
    %p48 = por %p46, %p47
    %p49 = scmp.ne.s32.totalorder %s35, %s36
    %p50 = scmp.eq.s32.totalorder %s16, 1
    %p51 = por %p49, %p50
    %p53 = scmp.ne.s32.totalorder %s36, %s52
    %p54 = scmp.eq.s32.totalorder %s16, 0
    %p55 = por %p53, %p54
    %s57 = sadd.s32 %s56, 1
    %p60 = scmp.eq.s32.totalorder %s10, 1
    %p61 = scmp.ne.s32.totalorder %s56, %s58
    %p62 = scmp.eq.s32.totalorder %s10, 0
    %p63 = por %p61, %p62
    %p64 = scmp.ne.s32.totalorder %s56, %s58
    %p65 = scmp.eq.s32.totalorder %s15, 1
    %p66 = por %p64, %p65
    %p67 = scmp.ne.s32.totalorder %s58, %s59
    %p68 = scmp.eq.s32.totalorder %s15, 0
    %p69 = por %p67, %p68
    %p70 = scmp.ne.s32.totalorder %s58, %s59
    %p71 = scmp.eq.s32.totalorder %s16, 1
    %p72 = por %p70, %p71
    %p74 = scmp.ne.s32.totalorder %s59, %s73
    %p75 = scmp.eq.s32.totalorder %s16, 0
    %p76 = por %p74, %p75
    %s77 = ssub.s32 %s17, %s29
    %s78 = ssub.s32 %s18, %s25
    %s79 = sor.u32 %s77, %s78
    %p80 = scmp.eq.s32.totalorder %s79, 0
    %s82 = sadd.s32 %s81, 1
    %s83 = scalar_select %p80, %s81, %s82
    %p86 = pneg %p80
    %p87 = scmp.eq.s32.totalorder %s10, 1
    %p88 = por %p86, %p87
    %p89 = scmp.ne.s32.totalorder %s81, %s84
    %p90 = scmp.eq.s32.totalorder %s10, 0
    %p91 = por %p89, %p90
    %p92 = scmp.ne.s32.totalorder %s81, %s84
    %p93 = scmp.eq.s32.totalorder %s15, 1
    %p94 = por %p92, %p93
    %p95 = scmp.ne.s32.totalorder %s84, %s85
    %p96 = scmp.eq.s32.totalorder %s15, 0
    %p97 = por %p95, %p96
    %p98 = scmp.ne.s32.totalorder %s84, %s85
    %p99 = scmp.eq.s32.totalorder %s16, 1
    %p100 = por %p98, %p99
    %p102 = scmp.ne.s32.totalorder %s85, %s101
    %p103 = scmp.eq.s32.totalorder %s16, 0
    %p104 = por %p102, %p103
    %s105 = ssub.s32 %s17, %s29
    %p106 = scmp.eq.s32.totalorder %s105, 0
    %s108 = sadd.s32 %s107, 1
    %s109 = scalar_select %p106, %s107, %s108
    %p112 = pneg %p106
    %p113 = scmp.eq.s32.totalorder %s10, 1
    %p114 = por %p112, %p113
    %p115 = scmp.ne.s32.totalorder %s107, %s110
    %p116 = scmp.eq.s32.totalorder %s10, 0
    %p117 = por %p115, %p116
    %p118 = scmp.ne.s32.totalorder %s107, %s110
    %p119 = scmp.eq.s32.totalorder %s15, 1
    %p120 = por %p118, %p119
    %p121 = scmp.ne.s32.totalorder %s110, %s111
    %p122 = scmp.eq.s32.totalorder %s15, 0
    %p123 = por %p121, %p122
    %p124 = scmp.ne.s32.totalorder %s110, %s111
    %p125 = scmp.eq.s32.totalorder %s16, 1
    %p126 = por %p124, %p125
    %p128 = scmp.ne.s32.totalorder %s111, %s127
    %p129 = scmp.eq.s32.totalorder %s16, 0
    %p130 = por %p128, %p129
    %p131 = scmp.le.s32.totalorder 1, %s10
    %p132 = scmp.lt.s32.totalorder %s10, 3
    %p133 = pnand %p131, %p132
    %p134 = pneg %p133
    // Predicated region
    $region9: #{down_conv_forward.3} parent=5 // pred_check
      _
    $region10: #{down_conv_forward.3} parent=5 // pred_check_branch
      %136 = sbr.rel (%p133) target = $region12
    $region11: #{down_conv_forward.3} parent=5 // pred_region
      %s137 = ssub.s32 %s10, 1
      // Predicated region
      $region13: #{down_conv_forward.3} parent=11 // pred_check
        %p138 = pneg %p69
      $region14: #{down_conv_forward.3} parent=11 // pred_check_branch
        %140 = sbr.rel (%p138) target = $region16
      $region15: #{down_conv_forward.3} parent=11 // pred_region
        _
      $region16: #{down_conv_forward.3} parent=11 // pred_fallthru
        _
    $region12: #{down_conv_forward.3} parent=5 // pred_fallthru
      _
    %p141 = scmp.lt.s32.totalorder %s10, 2
    // Predicated region
    $region17: #{down_conv_forward.3} parent=5 // pred_check
      %p142 = pneg %p141
    $region18: #{down_conv_forward.3} parent=5 // pred_check_branch
      %144 = sbr.rel (%p142) target = $region20
    $region19: #{down_conv_forward.3} parent=5 // pred_region
      // Predicated region
      $region21: #{down_conv_forward.3} parent=19 // pred_check
        %p145 = pneg %p42
      $region22: #{down_conv_forward.3} parent=19 // pred_check_branch
        %147 = sbr.rel (%p145) target = $region24
      $region23: #{down_conv_forward.3} parent=19 // pred_region
        %p148 = scmp.lt.s32.totalorder %s17, 1
        %s149 = scalar_select %p148, %s17, 1
        %s150 = smul.addr %s149, 32
        %s151 = smul.addr %s150, 4
        %s152 = scalar_lea.vmem %s0, %s151
      $region24: #{down_conv_forward.3} parent=19 // pred_fallthru
        _
    $region20: #{down_conv_forward.3} parent=5 // pred_fallthru
      _
    %p153 = scmp.le.s32.totalorder 1, %s10
    %p154 = scmp.lt.s32.totalorder %s10, 3
    %p155 = pnand %p153, %p154
    %p156 = pneg %p155
    // Predicated region
    $region25: #{down_conv_forward.3} parent=5 // pred_check
      _
    $region26: #{down_conv_forward.3} parent=5 // pred_check_branch
      %158 = sbr.rel (%p155) target = $region28
    $region27: #{down_conv_forward.3} parent=5 // pred_region
      %s159 = ssub.s32 %s10, 1
      %p160 = scmp.lt.s32.totalorder %s19, 1
      %s161 = scalar_select %p160, %s19, 1
      %s162 = smul.addr %s161, 32
      %s163 = smul.addr %s162, 4
      %s164 = scalar_lea.vmem %s0, %s163
      %p165 = pneg %p48
      %p166 = pneg %p45
      %p167 = pneg %p69
      %p168 = pneg %p66
      %p169 = pneg %p97
      %p170 = pneg %p94
      %s171 = smul.u32 14, %s20
      %p172 = scmp.lt.s32.totalorder %s19, 1
      %s173 = scalar_select %p172, %s19, 1
      %p174 = scmp.lt.s32.totalorder %s171, 13
      %s175 = scalar_select %p174, %s171, 13
      %s176 = smul.addr %s175, 2
      %s177 = smul.addr %s173, 28
      %s178 = sadd.s32 %s176, %s177
      %s179 = smul.addr %s178, 4
      %s180 = scalar_lea.vmem %s2, %s179
      %p181 = pneg %p123
      %p182 = pneg %p120
      %p183 = scmp.lt.s32.totalorder %s19, 1
      %s184 = scalar_select %p183, %s19, 1
      %s185 = smul.addr %s184, 2
      %s186 = scalar_lea.vmem %s3, %s185
      %p187 = scmp.lt.s32.totalorder %s19, 1
      %s188 = scalar_select %p187, %s19, 1
      %s189 = smul.addr %s188, 32
      %s190 = smul.addr %s189, 4
      %s191 = scalar_lea.vmem %s0, %s190
      %s192 = smul.u32 14, %s20
      %p193 = scmp.lt.s32.totalorder %s19, 1
      %s194 = scalar_select %p193, %s19, 1
      %p195 = scmp.lt.s32.totalorder %s192, 13
      %s196 = scalar_select %p195, %s192, 13
      %s197 = smul.addr %s196, 2
      %s198 = smul.addr %s194, 28
      %s199 = sadd.s32 %s197, %s198
      %s200 = smul.addr %s199, 4
      %s201 = scalar_lea.vmem %s2, %s200
      %s202 = smul.u32 14, %s20
      %p203 = scmp.lt.s32.totalorder %s19, 1
      %s204 = scalar_select %p203, %s19, 1
      %s205 = smul.addr %s204, 2
      %s206 = scalar_lea.vmem %s3, %s205
      %s208 = smul.u32 %s20, 14
      %v209 = vld [vmem:[%s1] sm:$0xf]
      %v210 = vld [vmem:[%s1 + $0x4] sm:$0xf]
      %v211 = vld [vmem:[%s1 + $0x8] sm:$0xf]
      %v212 = vld [vmem:[%s1 + $0xc] sm:$0xf]
      %v213 = vld [vmem:[%s1 + $0x10] sm:$0x3]
      loop: start=0, step=1, limit=14
      $region29: #{down_conv_forward.3} parent=27 // loop_pre_header
        _
      $region30: #{down_conv_forward.3} parent=27 // loop_header
        %s215 = sphi 0, %s219
        %p216 = scmp.ge.s32.totalorder %s215, 14
        %v220 = vphi 0.0, %v753
        %v221 = vphi 0.0, %v764
      $region31: #{down_conv_forward.3} parent=27 // loop_header_branch
        %218 = sbr.rel (%p216) target = $region35
      $region32: #{down_conv_forward.3} parent=27 // loop_body
        %s222 = sadd.s32 %s208, %s215
        %s223 = smul.u32 %s222, 2
        %s224 = smul.addr %s223, 4
        %s225 = scalar_lea.vmem %s191, %s224
        %v226 = vld [vmem:[%s225] sm:$0xf]
        %v227 = vld [vmem:[%s225 + $0x4] sm:$0xf]
        %s228 = sadd.s32 %s222, 1
        %s229 = smul.u32 %s228, 2
        %s230 = smul.addr %s229, 4
        %s231 = scalar_lea.vmem %s191, %s230
        %v232 = vld [vmem:[%s231] sm:$0xf]
        %v233 = vld [vmem:[%s231 + $0x4] sm:$0xf]
        %s234 = sadd.s32 %s222, 2
        %s235 = smul.u32 %s234, 2
        %s236 = smul.addr %s235, 4
        %s237 = scalar_lea.vmem %s191, %s236
        %v238 = vld [vmem:[%s237] sm:$0xf]
        %v239 = vld [vmem:[%s237 + $0x4] sm:$0xf]
        %v242 = vunpack.c.l.b16 %v226
        %v243 = vunpack.c.l.b16 %v227
        %v244 = vpack.c.b16 %v243, %v242
        %v246 = vshrl.u32 %v244, 16
        %v248 = vshll.u32 %v244, 16
        %v250 = vrot.slane %v248, 1
        %v251 = vor.u32 %v246, %v250
        %v253 = vunpack.c.l.b16 %v209
        %v254 = vpack.c.b16 %v253, %v253
        %v255 = vrot.slane %v254, 2
        %vm256 = vcmask 31744
        %v258 = vsel %vm256, %v251, 0
        %vm260 = vcmask 1041408
        %v262 = vsel %vm260, %v255, 0
        %264 = vmatprep.subr.bf16.mxu0 0
        %265 = vmatpush1.bf16.msra.mxu0 0
        %266 = vmatprep.subr.bf16.mxu0 0
        %267 = vmatpush1.bf16.msra.mxu0 0
        %268 = vmatprep.subr.bf16.mxu0 0
        %269 = vmatpush1.bf16.msra.mxu0 0
        %270 = vmatprep.subr.bf16.mxu0 0
        %271 = vmatpush1.bf16.msra.mxu0 0
        %272 = vmatprep.subr.bf16.mxu0 0
        %273 = vmatpush1.bf16.msra.mxu0 0
        %274 = vmatprep.subr.bf16.mxu0 0
        %275 = vmatpush1.bf16.msra.mxu0 0
        %276 = vmatprep.subr.bf16.mxu0 0
        %277 = vmatpush1.bf16.msra.mxu0 0
        %278 = vmatprep.subr.bf16.mxu0 0
        %279 = vmatpush1.bf16.msra.mxu0 %v262
        %280 = vmatprep.subr.bf16.mxu0 0
        %281 = vmatpush2.bf16.msra.mxu0 0
        %282 = vmatprep.subr.bf16.mxu0 0
        %283 = vmatpush2.bf16.msra.mxu0 0
        %284 = vmatprep.subr.bf16.mxu0 0
        %285 = vmatpush2.bf16.msra.mxu0 0
        %286 = vmatprep.subr.bf16.mxu0 0
        %287 = vmatpush2.bf16.msra.mxu0 0
        %288 = vmatprep.subr.bf16.mxu0 0
        %289 = vmatpush2.bf16.msra.mxu0 0
        %290 = vmatprep.subr.bf16.mxu0 0
        %291 = vmatpush2.bf16.msra.mxu0 0
        %292 = vmatprep.subr.bf16.mxu0 0
        %293 = vmatpush2.bf16.msra.mxu0 0
        %294 = vmatprep.subr.bf16.mxu0 0
        %295 = vmatpush2.bf16.msra.mxu0 0
        %296 = vmatprep.mubr.bf16.mxu0 0
        %297 = vmatmul.mubr.bf16.gmra.mxu0 %v258
        %v298 = vpop.f32.mrf.mxu0
        %v299 = vadd.f32 0.0, %v298
        %v300 = vpop.f32.mrf.mxu0
        %v301 = vpop.f32.mrf.mxu0
        %v302 = vadd.f32 0.0, %v301
        %v303 = vpop.f32.mrf.mxu0
        %304 = vdwg.mxu0
        %v305 = vsel %vm256, %v244, 0
        %v308 = vsel %vm260, %v209, 0
        %310 = vmatprep.subr.bf16.mxu0 0
        %311 = vmatpush1.bf16.msra.mxu0 0
        %312 = vmatprep.subr.bf16.mxu0 0
        %313 = vmatpush1.bf16.msra.mxu0 0
        %314 = vmatprep.subr.bf16.mxu0 0
        %315 = vmatpush1.bf16.msra.mxu0 0
        %316 = vmatprep.subr.bf16.mxu0 0
        %317 = vmatpush1.bf16.msra.mxu0 0
        %318 = vmatprep.subr.bf16.mxu0 0
        %319 = vmatpush1.bf16.msra.mxu0 0
        %320 = vmatprep.subr.bf16.mxu0 0
        %321 = vmatpush1.bf16.msra.mxu0 0
        %322 = vmatprep.subr.bf16.mxu0 0
        %323 = vmatpush1.bf16.msra.mxu0 0
        %324 = vmatprep.subr.bf16.mxu0 0
        %325 = vmatpush1.bf16.msra.mxu0 %v308
        %326 = vmatprep.subr.bf16.mxu0 0
        %327 = vmatpush2.bf16.msra.mxu0 0
        %328 = vmatprep.subr.bf16.mxu0 0
        %329 = vmatpush2.bf16.msra.mxu0 0
        %330 = vmatprep.subr.bf16.mxu0 0
        %331 = vmatpush2.bf16.msra.mxu0 0
        %332 = vmatprep.subr.bf16.mxu0 0
        %333 = vmatpush2.bf16.msra.mxu0 0
        %334 = vmatprep.subr.bf16.mxu0 0
        %335 = vmatpush2.bf16.msra.mxu0 0
        %336 = vmatprep.subr.bf16.mxu0 0
        %337 = vmatpush2.bf16.msra.mxu0 0
        %338 = vmatprep.subr.bf16.mxu0 0
        %339 = vmatpush2.bf16.msra.mxu0 0
        %340 = vmatprep.subr.bf16.mxu0 0
        %341 = vmatpush2.bf16.msra.mxu0 0
        %342 = vmatprep.mubr.bf16.mxu0 0
        %343 = vmatmul.mubr.bf16.gmra.mxu0 %v305
        %v344 = vpop.f32.mrf.mxu0
        %v345 = vadd.f32 %v299, %v344
        %v346 = vpop.f32.mrf.mxu0
        %v347 = vpop.f32.mrf.mxu0
        %v348 = vadd.f32 %v302, %v347
        %v349 = vpop.f32.mrf.mxu0
        %350 = vdwg.mxu0
        %v351 = vrot.slane %v244, 1
        %v353 = vsel %vm256, %v351, 0
        %v356 = vsel %vm260, %v210, 0
        %358 = vmatprep.subr.bf16.mxu0 0
        %359 = vmatpush1.bf16.msra.mxu0 0
        %360 = vmatprep.subr.bf16.mxu0 0
        %361 = vmatpush1.bf16.msra.mxu0 0
        %362 = vmatprep.subr.bf16.mxu0 0
        %363 = vmatpush1.bf16.msra.mxu0 0
        %364 = vmatprep.subr.bf16.mxu0 0
        %365 = vmatpush1.bf16.msra.mxu0 0
        %366 = vmatprep.subr.bf16.mxu0 0
        %367 = vmatpush1.bf16.msra.mxu0 0
        %368 = vmatprep.subr.bf16.mxu0 0
        %369 = vmatpush1.bf16.msra.mxu0 0
        %370 = vmatprep.subr.bf16.mxu0 0
        %371 = vmatpush1.bf16.msra.mxu0 0
        %372 = vmatprep.subr.bf16.mxu0 0
        %373 = vmatpush1.bf16.msra.mxu0 %v356
        %374 = vmatprep.subr.bf16.mxu0 0
        %375 = vmatpush2.bf16.msra.mxu0 0
        %376 = vmatprep.subr.bf16.mxu0 0
        %377 = vmatpush2.bf16.msra.mxu0 0
        %378 = vmatprep.subr.bf16.mxu0 0
        %379 = vmatpush2.bf16.msra.mxu0 0
        %380 = vmatprep.subr.bf16.mxu0 0
        %381 = vmatpush2.bf16.msra.mxu0 0
        %382 = vmatprep.subr.bf16.mxu0 0
        %383 = vmatpush2.bf16.msra.mxu0 0
        %384 = vmatprep.subr.bf16.mxu0 0
        %385 = vmatpush2.bf16.msra.mxu0 0
        %386 = vmatprep.subr.bf16.mxu0 0
        %387 = vmatpush2.bf16.msra.mxu0 0
        %388 = vmatprep.subr.bf16.mxu0 0
        %389 = vmatpush2.bf16.msra.mxu0 0
        %390 = vmatprep.mubr.bf16.mxu0 0
        %391 = vmatmul.mubr.bf16.gmra.mxu0 %v353
        %v392 = vpop.f32.mrf.mxu0
        %v393 = vadd.f32 0.0, %v392
        %v394 = vpop.f32.mrf.mxu0
        %v395 = vpop.f32.mrf.mxu0
        %v396 = vadd.f32 0.0, %v395
        %v397 = vpop.f32.mrf.mxu0
        %398 = vdwg.mxu0
        %v399 = vadd.f32 %v345, %v393
        %v400 = vadd.f32 %v348, %v396
        %v403 = vunpack.c.l.b16 %v232
        %v404 = vunpack.c.l.b16 %v233
        %v405 = vpack.c.b16 %v404, %v403
        %v407 = vunpack.c.l.b16 %v210
        %v408 = vpack.c.b16 %v407, %v407
        %v409 = vrot.slane %v408, 2
        %v411 = vsel %vm256, %v405, 0
        %v414 = vsel %vm260, %v409, 0
        %416 = vmatprep.subr.bf16.mxu0 0
        %417 = vmatpush1.bf16.msra.mxu0 0
        %418 = vmatprep.subr.bf16.mxu0 0
        %419 = vmatpush1.bf16.msra.mxu0 0
        %420 = vmatprep.subr.bf16.mxu0 0
        %421 = vmatpush1.bf16.msra.mxu0 0
        %422 = vmatprep.subr.bf16.mxu0 0
        %423 = vmatpush1.bf16.msra.mxu0 0
        %424 = vmatprep.subr.bf16.mxu0 0
        %425 = vmatpush1.bf16.msra.mxu0 0
        %426 = vmatprep.subr.bf16.mxu0 0
        %427 = vmatpush1.bf16.msra.mxu0 0
        %428 = vmatprep.subr.bf16.mxu0 0
        %429 = vmatpush1.bf16.msra.mxu0 0
        %430 = vmatprep.subr.bf16.mxu0 0
        %431 = vmatpush1.bf16.msra.mxu0 %v414
        %432 = vmatprep.subr.bf16.mxu0 0
        %433 = vmatpush2.bf16.msra.mxu0 0
        %434 = vmatprep.subr.bf16.mxu0 0
        %435 = vmatpush2.bf16.msra.mxu0 0
        %436 = vmatprep.subr.bf16.mxu0 0
        %437 = vmatpush2.bf16.msra.mxu0 0
        %438 = vmatprep.subr.bf16.mxu0 0
        %439 = vmatpush2.bf16.msra.mxu0 0
        %440 = vmatprep.subr.bf16.mxu0 0
        %441 = vmatpush2.bf16.msra.mxu0 0
        %442 = vmatprep.subr.bf16.mxu0 0
        %443 = vmatpush2.bf16.msra.mxu0 0
        %444 = vmatprep.subr.bf16.mxu0 0
        %445 = vmatpush2.bf16.msra.mxu0 0
        %446 = vmatprep.subr.bf16.mxu0 0
        %447 = vmatpush2.bf16.msra.mxu0 0
        %448 = vmatprep.mubr.bf16.mxu0 0
        %449 = vmatmul.mubr.bf16.gmra.mxu0 %v411
        %v450 = vpop.f32.mrf.mxu0
        %v451 = vadd.f32 0.0, %v450
        %v452 = vpop.f32.mrf.mxu0
        %v453 = vpop.f32.mrf.mxu0
        %v454 = vadd.f32 0.0, %v453
        %v455 = vpop.f32.mrf.mxu0
        %456 = vdwg.mxu0
        %v457 = vadd.f32 %v399, %v451
        %v458 = vadd.f32 %v400, %v454
        %v459 = vshrl.u32 %v405, 16
        %v461 = vshll.u32 %v405, 16
        %v463 = vrot.slane %v461, 1
        %v464 = vor.u32 %v459, %v463
        %v466 = vsel %vm256, %v464, 0
        %v469 = vsel %vm260, %v211, 0
        %471 = vmatprep.subr.bf16.mxu0 0
        %472 = vmatpush1.bf16.msra.mxu0 0
        %473 = vmatprep.subr.bf16.mxu0 0
        %474 = vmatpush1.bf16.msra.mxu0 0
        %475 = vmatprep.subr.bf16.mxu0 0
        %476 = vmatpush1.bf16.msra.mxu0 0
        %477 = vmatprep.subr.bf16.mxu0 0
        %478 = vmatpush1.bf16.msra.mxu0 0
        %479 = vmatprep.subr.bf16.mxu0 0
        %480 = vmatpush1.bf16.msra.mxu0 0
        %481 = vmatprep.subr.bf16.mxu0 0
        %482 = vmatpush1.bf16.msra.mxu0 0
        %483 = vmatprep.subr.bf16.mxu0 0
        %484 = vmatpush1.bf16.msra.mxu0 0
        %485 = vmatprep.subr.bf16.mxu0 0
        %486 = vmatpush1.bf16.msra.mxu0 %v469
        %487 = vmatprep.subr.bf16.mxu0 0
        %488 = vmatpush2.bf16.msra.mxu0 0
        %489 = vmatprep.subr.bf16.mxu0 0
        %490 = vmatpush2.bf16.msra.mxu0 0
        %491 = vmatprep.subr.bf16.mxu0 0
        %492 = vmatpush2.bf16.msra.mxu0 0
        %493 = vmatprep.subr.bf16.mxu0 0
        %494 = vmatpush2.bf16.msra.mxu0 0
        %495 = vmatprep.subr.bf16.mxu0 0
        %496 = vmatpush2.bf16.msra.mxu0 0
        %497 = vmatprep.subr.bf16.mxu0 0
        %498 = vmatpush2.bf16.msra.mxu0 0
        %499 = vmatprep.subr.bf16.mxu0 0
        %500 = vmatpush2.bf16.msra.mxu0 0
        %501 = vmatprep.subr.bf16.mxu0 0
        %502 = vmatpush2.bf16.msra.mxu0 0
        %503 = vmatprep.mubr.bf16.mxu0 0
        %504 = vmatmul.mubr.bf16.gmra.mxu0 %v466
        %v505 = vpop.f32.mrf.mxu0
        %v506 = vadd.f32 0.0, %v505
        %v507 = vpop.f32.mrf.mxu0
        %v508 = vpop.f32.mrf.mxu0
        %v509 = vadd.f32 0.0, %v508
        %v510 = vpop.f32.mrf.mxu0
        %511 = vdwg.mxu0
        %v512 = vadd.f32 %v457, %v506
        %v513 = vadd.f32 %v458, %v509
        %v514 = vrot.slane %v405, 1
        %v516 = vunpack.c.l.b16 %v211
        %v517 = vpack.c.b16 %v516, %v516
        %v518 = vrot.slane %v517, 2
        %v520 = vsel %vm256, %v514, 0
        %v523 = vsel %vm260, %v518, 0
        %525 = vmatprep.subr.bf16.mxu0 0
        %526 = vmatpush1.bf16.msra.mxu0 0
        %527 = vmatprep.subr.bf16.mxu0 0
        %528 = vmatpush1.bf16.msra.mxu0 0
        %529 = vmatprep.subr.bf16.mxu0 0
        %530 = vmatpush1.bf16.msra.mxu0 0
        %531 = vmatprep.subr.bf16.mxu0 0
        %532 = vmatpush1.bf16.msra.mxu0 0
        %533 = vmatprep.subr.bf16.mxu0 0
        %534 = vmatpush1.bf16.msra.mxu0 0
        %535 = vmatprep.subr.bf16.mxu0 0
        %536 = vmatpush1.bf16.msra.mxu0 0
        %537 = vmatprep.subr.bf16.mxu0 0
        %538 = vmatpush1.bf16.msra.mxu0 0
        %539 = vmatprep.subr.bf16.mxu0 0
        %540 = vmatpush1.bf16.msra.mxu0 %v523
        %541 = vmatprep.subr.bf16.mxu0 0
        %542 = vmatpush2.bf16.msra.mxu0 0
        %543 = vmatprep.subr.bf16.mxu0 0
        %544 = vmatpush2.bf16.msra.mxu0 0
        %545 = vmatprep.subr.bf16.mxu0 0
        %546 = vmatpush2.bf16.msra.mxu0 0
        %547 = vmatprep.subr.bf16.mxu0 0
        %548 = vmatpush2.bf16.msra.mxu0 0
        %549 = vmatprep.subr.bf16.mxu0 0
        %550 = vmatpush2.bf16.msra.mxu0 0
        %551 = vmatprep.subr.bf16.mxu0 0
        %552 = vmatpush2.bf16.msra.mxu0 0
        %553 = vmatprep.subr.bf16.mxu0 0
        %554 = vmatpush2.bf16.msra.mxu0 0
        %555 = vmatprep.subr.bf16.mxu0 0
        %556 = vmatpush2.bf16.msra.mxu0 0
        %557 = vmatprep.mubr.bf16.mxu0 0
        %558 = vmatmul.mubr.bf16.gmra.mxu0 %v520
        %v559 = vpop.f32.mrf.mxu0
        %v560 = vadd.f32 0.0, %v559
        %v561 = vpop.f32.mrf.mxu0
        %v562 = vpop.f32.mrf.mxu0
        %v563 = vadd.f32 0.0, %v562
        %v564 = vpop.f32.mrf.mxu0
        %565 = vdwg.mxu0
        %v566 = vadd.f32 %v512, %v560
        %v567 = vadd.f32 %v513, %v563
        %v570 = vunpack.c.l.b16 %v238
        %v571 = vunpack.c.l.b16 %v239
        %v572 = vpack.c.b16 %v571, %v570
        %v574 = vsel %vm256, %v572, 0
        %v577 = vsel %vm260, %v212, 0
        %579 = vmatprep.subr.bf16.mxu0 0
        %580 = vmatpush1.bf16.msra.mxu0 0
        %581 = vmatprep.subr.bf16.mxu0 0
        %582 = vmatpush1.bf16.msra.mxu0 0
        %583 = vmatprep.subr.bf16.mxu0 0
        %584 = vmatpush1.bf16.msra.mxu0 0
        %585 = vmatprep.subr.bf16.mxu0 0
        %586 = vmatpush1.bf16.msra.mxu0 0
        %587 = vmatprep.subr.bf16.mxu0 0
        %588 = vmatpush1.bf16.msra.mxu0 0
        %589 = vmatprep.subr.bf16.mxu0 0
        %590 = vmatpush1.bf16.msra.mxu0 0
        %591 = vmatprep.subr.bf16.mxu0 0
        %592 = vmatpush1.bf16.msra.mxu0 0
        %593 = vmatprep.subr.bf16.mxu0 0
        %594 = vmatpush1.bf16.msra.mxu0 %v577
        %595 = vmatprep.subr.bf16.mxu0 0
        %596 = vmatpush2.bf16.msra.mxu0 0
        %597 = vmatprep.subr.bf16.mxu0 0
        %598 = vmatpush2.bf16.msra.mxu0 0
        %599 = vmatprep.subr.bf16.mxu0 0
        %600 = vmatpush2.bf16.msra.mxu0 0
        %601 = vmatprep.subr.bf16.mxu0 0
        %602 = vmatpush2.bf16.msra.mxu0 0
        %603 = vmatprep.subr.bf16.mxu0 0
        %604 = vmatpush2.bf16.msra.mxu0 0
        %605 = vmatprep.subr.bf16.mxu0 0
        %606 = vmatpush2.bf16.msra.mxu0 0
        %607 = vmatprep.subr.bf16.mxu0 0
        %608 = vmatpush2.bf16.msra.mxu0 0
        %609 = vmatprep.subr.bf16.mxu0 0
        %610 = vmatpush2.bf16.msra.mxu0 0
        %611 = vmatprep.mubr.bf16.mxu0 0
        %612 = vmatmul.mubr.bf16.gmra.mxu0 %v574
        %v613 = vpop.f32.mrf.mxu0
        %v614 = vadd.f32 0.0, %v613
        %v615 = vpop.f32.mrf.mxu0
        %v616 = vpop.f32.mrf.mxu0
        %v617 = vadd.f32 0.0, %v616
        %v618 = vpop.f32.mrf.mxu0
        %619 = vdwg.mxu0
        %v620 = vadd.f32 %v566, %v614
        %v621 = vadd.f32 %v567, %v617
        %v622 = vshrl.u32 %v572, 16
        %v624 = vshll.u32 %v572, 16
        %v626 = vrot.slane %v624, 1
        %v627 = vor.u32 %v622, %v626
        %v629 = vunpack.c.l.b16 %v212
        %v630 = vpack.c.b16 %v629, %v629
        %v631 = vrot.slane %v630, 2
        %v633 = vsel %vm256, %v627, 0
        %v636 = vsel %vm260, %v631, 0
        %638 = vmatprep.subr.bf16.mxu0 0
        %639 = vmatpush1.bf16.msra.mxu0 0
        %640 = vmatprep.subr.bf16.mxu0 0
        %641 = vmatpush1.bf16.msra.mxu0 0
        %642 = vmatprep.subr.bf16.mxu0 0
        %643 = vmatpush1.bf16.msra.mxu0 0
        %644 = vmatprep.subr.bf16.mxu0 0
        %645 = vmatpush1.bf16.msra.mxu0 0
        %646 = vmatprep.subr.bf16.mxu0 0
        %647 = vmatpush1.bf16.msra.mxu0 0
        %648 = vmatprep.subr.bf16.mxu0 0
        %649 = vmatpush1.bf16.msra.mxu0 0
        %650 = vmatprep.subr.bf16.mxu0 0
        %651 = vmatpush1.bf16.msra.mxu0 0
        %652 = vmatprep.subr.bf16.mxu0 0
        %653 = vmatpush1.bf16.msra.mxu0 %v636
        %654 = vmatprep.subr.bf16.mxu0 0
        %655 = vmatpush2.bf16.msra.mxu0 0
        %656 = vmatprep.subr.bf16.mxu0 0
        %657 = vmatpush2.bf16.msra.mxu0 0
        %658 = vmatprep.subr.bf16.mxu0 0
        %659 = vmatpush2.bf16.msra.mxu0 0
        %660 = vmatprep.subr.bf16.mxu0 0
        %661 = vmatpush2.bf16.msra.mxu0 0
        %662 = vmatprep.subr.bf16.mxu0 0
        %663 = vmatpush2.bf16.msra.mxu0 0
        %664 = vmatprep.subr.bf16.mxu0 0
        %665 = vmatpush2.bf16.msra.mxu0 0
        %666 = vmatprep.subr.bf16.mxu0 0
        %667 = vmatpush2.bf16.msra.mxu0 0
        %668 = vmatprep.subr.bf16.mxu0 0
        %669 = vmatpush2.bf16.msra.mxu0 0
        %670 = vmatprep.mubr.bf16.mxu0 0
        %671 = vmatmul.mubr.bf16.gmra.mxu0 %v633
        %v672 = vpop.f32.mrf.mxu0
        %v673 = vadd.f32 0.0, %v672
        %v674 = vpop.f32.mrf.mxu0
        %v675 = vpop.f32.mrf.mxu0
        %v676 = vadd.f32 0.0, %v675
        %v677 = vpop.f32.mrf.mxu0
        %678 = vdwg.mxu0
        %v679 = vadd.f32 %v620, %v673
        %v680 = vadd.f32 %v621, %v676
        %v681 = vrot.slane %v572, 1
        %v683 = vsel %vm256, %v681, 0
        %v686 = vsel %vm260, %v213, 0
        %688 = vmatprep.subr.bf16.mxu0 0
        %689 = vmatpush1.bf16.msra.mxu0 0
        %690 = vmatprep.subr.bf16.mxu0 0
        %691 = vmatpush1.bf16.msra.mxu0 0
        %692 = vmatprep.subr.bf16.mxu0 0
        %693 = vmatpush1.bf16.msra.mxu0 0
        %694 = vmatprep.subr.bf16.mxu0 0
        %695 = vmatpush1.bf16.msra.mxu0 0
        %696 = vmatprep.subr.bf16.mxu0 0
        %697 = vmatpush1.bf16.msra.mxu0 0
        %698 = vmatprep.subr.bf16.mxu0 0
        %699 = vmatpush1.bf16.msra.mxu0 0
        %700 = vmatprep.subr.bf16.mxu0 0
        %701 = vmatpush1.bf16.msra.mxu0 0
        %702 = vmatprep.subr.bf16.mxu0 0
        %703 = vmatpush1.bf16.msra.mxu0 %v686
        %704 = vmatprep.subr.bf16.mxu0 0
        %705 = vmatpush2.bf16.msra.mxu0 0
        %706 = vmatprep.subr.bf16.mxu0 0
        %707 = vmatpush2.bf16.msra.mxu0 0
        %708 = vmatprep.subr.bf16.mxu0 0
        %709 = vmatpush2.bf16.msra.mxu0 0
        %710 = vmatprep.subr.bf16.mxu0 0
        %711 = vmatpush2.bf16.msra.mxu0 0
        %712 = vmatprep.subr.bf16.mxu0 0
        %713 = vmatpush2.bf16.msra.mxu0 0
        %714 = vmatprep.subr.bf16.mxu0 0
        %715 = vmatpush2.bf16.msra.mxu0 0
        %716 = vmatprep.subr.bf16.mxu0 0
        %717 = vmatpush2.bf16.msra.mxu0 0
        %718 = vmatprep.subr.bf16.mxu0 0
        %719 = vmatpush2.bf16.msra.mxu0 0
        %720 = vmatprep.mubr.bf16.mxu0 0
        %721 = vmatmul.mubr.bf16.gmra.mxu0 %v683
        %v722 = vpop.f32.mrf.mxu0
        %v723 = vadd.f32 0.0, %v722
        %v724 = vpop.f32.mrf.mxu0
        %v725 = vpop.f32.mrf.mxu0
        %v726 = vadd.f32 0.0, %v725
        %v727 = vpop.f32.mrf.mxu0
        %728 = vdwg.mxu0
        %v729 = vadd.f32 %v679, %v723
        %v730 = vadd.f32 %v680, %v726
        %v731 = vpack.c.bf16 %v730, %v729
        %v733 = vunpack.c.l.b16 %v731
        %v734 = vunpack.c.h.b16 %v731
        %v735 = vpack.c.b16 %v733, %v733
        %v736 = vpack.c.b16 %v734, %v734
        %s739 = smul.u32 %s215, 2
        %s740 = smul.addr %s739, 4
        %s741 = scalar_lea.vmem %s201, %s740
        %742 = vst [vmem:[%s741] sm:$0xf] %v735
        %743 = vst [vmem:[%s741 + $0x4] sm:$0x7] %v736
        %vm744 = vcmask 1045504
        %v745 = vsel %vm744, %v730, 0.0
        %v746 = vadd.f32 %v729, %v745
        %v747 = vrot.slane %v746, 4
        %v748 = vadd.f32 %v746, %v747
        %v749 = vrot.slane %v748, 2
        %v750 = vadd.f32 %v748, %v749
        %v751 = vrot.slane %v750, 1
        %v752 = vadd.f32 %v750, %v751
        %v753 = vadd.f32 %v220, %v752
        %v754 = vmul.f32 %v729, %v729
        %v755 = vmul.f32 %v730, %v730
        %v756 = vsel %vm744, %v755, 0.0
        %v757 = vadd.f32 %v754, %v756
        %v758 = vrot.slane %v757, 4
        %v759 = vadd.f32 %v757, %v758
        %v760 = vrot.slane %v759, 2
        %v761 = vadd.f32 %v759, %v760
        %v762 = vrot.slane %v761, 1
        %v763 = vadd.f32 %v761, %v762
        %v764 = vadd.f32 %v221, %v763
      $region33: #{down_conv_forward.3} parent=27 // loop_footer
        %s219 = sadd.s32 1, %s215
      $region34: #{down_conv_forward.3} parent=27 // loop_footer_branch
        %214 = sbr.rel target = $region30
      $region35: #{down_conv_forward.3} parent=27 // loop_exit
        _
      %vm765 = vcmask 1040384
      %v766 = vsel %vm765, %v220, %v221
      %p767 = scmp.eq.s32.totalorder %s20, 0
      // Predicated region
      $region36: #{down_conv_forward.3} parent=27 // pred_check
        %p768 = pneg %p767
      $region37: #{down_conv_forward.3} parent=27 // pred_check_branch
        %770 = sbr.rel (%p768) target = $region39
      $region38: #{down_conv_forward.3} parent=27 // pred_region
        %771 = vst [vmem:[%s206] sm:$0x3] %v766
      $region39: #{down_conv_forward.3} parent=27 // pred_fallthru
        _
      %p772 = scmp.gt.s32.totalorder %s20, 0
      // Predicated region
      $region40: #{down_conv_forward.3} parent=27 // pred_check
        %p773 = pneg %p772
      $region41: #{down_conv_forward.3} parent=27 // pred_check_branch
        %775 = sbr.rel (%p773) target = $region43
      $region42: #{down_conv_forward.3} parent=27 // pred_region
        %v776 = vld [vmem:[%s206] sm:$0x3]
        %v777 = vadd.f32 %v776, %v766
        %778 = vst [vmem:[%s206] sm:$0x3] %v777
      $region43: #{down_conv_forward.3} parent=27 // pred_fallthru
        _
      %s779 = smul.u32 14, %s20
      %p780 = scmp.lt.s32.totalorder %s19, 1
      %s781 = scalar_select %p780, %s19, 1
      %p782 = scmp.lt.s32.totalorder %s779, 13
      %s783 = scalar_select %p782, %s779, 13
      %s784 = smul.addr %s783, 2
      %s785 = smul.addr %s781, 28
      %s786 = sadd.s32 %s784, %s785
      %s787 = smul.addr %s786, 4
      %s788 = scalar_lea.vmem %s2, %s787
      %p789 = scmp.lt.s32.totalorder %s19, 1
      %s790 = scalar_select %p789, %s19, 1
      %s791 = smul.addr %s790, 2
      %s792 = scalar_lea.vmem %s3, %s791
      // Predicated region
      $region44: #{down_conv_forward.3} parent=27 // pred_check
        %p793 = pneg %p94
      $region45: #{down_conv_forward.3} parent=27 // pred_check_branch
        %795 = sbr.rel (%p793) target = $region47
      $region46: #{down_conv_forward.3} parent=27 // pred_region
        %s796 = smul.u32 14, %s20
      $region47: #{down_conv_forward.3} parent=27 // pred_fallthru
        _
      // Predicated region
      $region48: #{down_conv_forward.3} parent=27 // pred_check
        %p797 = pneg %p120
      $region49: #{down_conv_forward.3} parent=27 // pred_check_branch
        %799 = sbr.rel (%p797) target = $region51
      $region50: #{down_conv_forward.3} parent=27 // pred_region
        _
      $region51: #{down_conv_forward.3} parent=27 // pred_fallthru
        _
    $region28: #{down_conv_forward.3} parent=5 // pred_fallthru
      _
    %p800 = scmp.le.s32.totalorder 2, %s10
    // Predicated region
    $region52: #{down_conv_forward.3} parent=5 // pred_check
      %p801 = pneg %p800
    $region53: #{down_conv_forward.3} parent=5 // pred_check_branch
      %803 = sbr.rel (%p801) target = $region55
    $region54: #{down_conv_forward.3} parent=5 // pred_region
      %s804 = ssub.s32 %s10, 2
      // Predicated region
      $region56: #{down_conv_forward.3} parent=54 // pred_check
        %p805 = pneg %p100
      $region57: #{down_conv_forward.3} parent=54 // pred_check_branch
        %807 = sbr.rel (%p805) target = $region59
      $region58: #{down_conv_forward.3} parent=54 // pred_region
        %s808 = smul.u32 14, %s22
        %p809 = scmp.lt.s32.totalorder %s21, 1
        %s810 = scalar_select %p809, %s21, 1
        %p811 = scmp.lt.s32.totalorder %s808, 13
        %s812 = scalar_select %p811, %s808, 13
        %s813 = smul.addr %s812, 2
        %s814 = smul.addr %s810, 28
        %s815 = sadd.s32 %s813, %s814
        %s816 = smul.addr %s815, 4
        %s817 = scalar_lea.vmem %s2, %s816
      $region59: #{down_conv_forward.3} parent=54 // pred_fallthru
        _
      // Predicated region
      $region60: #{down_conv_forward.3} parent=54 // pred_check
        %p818 = pneg %p126
      $region61: #{down_conv_forward.3} parent=54 // pred_check_branch
        %820 = sbr.rel (%p818) target = $region63
      $region62: #{down_conv_forward.3} parent=54 // pred_region
        %p821 = scmp.lt.s32.totalorder %s21, 1
        %s822 = scalar_select %p821, %s21, 1
        %s823 = smul.addr %s822, 2
        %s824 = scalar_lea.vmem %s3, %s823
      $region63: #{down_conv_forward.3} parent=54 // pred_fallthru
        _
    $region55: #{down_conv_forward.3} parent=5 // pred_fallthru
      _
  $region6: #{down_conv_forward.3} parent=0 // loop_footer
    %s14 = sadd.s32 1, %s10
  $region7: #{down_conv_forward.3} parent=0 // loop_footer_branch
    %9 = sbr.rel target = $region3
  $region8: #{down_conv_forward.3} parent=0 // loop_exit
    _

// kernel: down_conv_forward.4
$region0: #{down_conv_forward.4}
  #allocation0 [shape = 'u32[]', space=smem, size = 0x4, offset = 0x4, fixed_abs, tag = 'smem constant byte address 0x4 - core index']
  #allocation1 [shape = 'u32[144,128]{1,0:T(1,128)}', space=vmem, size = 0x12000, scoped, tag = 'internal scratch']
  %s0 = inlined_call_operand.vmem [shape: bf16[2,14,14,128], index: 0, kind: input, shape index: {}]
  %s1 = inlined_call_operand.vmem [shape: bf16[1152,128], index: 1, kind: input, shape index: {}]
  %s2 = inlined_call_operand.vmem [shape: f32[1,128], index: 2, kind: input, shape index: {}]
  %s3 = inlined_call_operand.vmem [shape: f32[1,128], index: 3, kind: input, shape index: {}]
  %s4 = inlined_call_operand.vmem [shape: f32[2,12,12,128], index: 4, kind: output, shape index: {0}]
  %s5 = inlined_call_operand.vmem [shape: f32[2,2,128], index: 5, kind: output, shape index: {1}]
  %6 = xla_tuple %s4, %s5
  %s7 = sld [smem:[#allocation0]]
  $region72: #{down_conv_forward.4} parent=0
    _
  %s9 = ssub.s32 1, %s7
  %s10 = scalar_select 0, %s9, %s7
  loop: start=0, step=1, limit=4
  $region2: #{down_conv_forward.4} parent=0 // loop_pre_header
    _
  $region3: #{down_conv_forward.4} parent=0 // loop_header
    %s12 = sphi 0, %s16
    %p13 = scmp.ge.s32.totalorder %s12, 4
    %s19 = sphi 0, %s31
    %s20 = sphi 0, %s27
    %s21 = sphi 0, %s19
    %s22 = sphi 0, %s20
    %s23 = sphi 0, %s21
    %s24 = sphi 0, %s22
    %s34 = sphi 0, %s36
    %s37 = sphi 0, %s34
    %s38 = sphi 0, %s37
    %s54 = sphi 0, %s38
    %s58 = sphi 0, %s58
    %s60 = sphi 0, %s58
    %s61 = sphi 0, %s60
    %s75 = sphi 0, %s61
    %s79 = sphi 0, %s79
    %s81 = sphi 0, %s79
    %s82 = sphi 0, %s81
    %s96 = sphi 0, %s82
    %s100 = sphi 0, %s100
    %s102 = sphi 0, %s100
    %s103 = sphi 0, %s102
    %s117 = sphi 0, %s103
    %s125 = sphi 0, %s127
    %s128 = sphi 0, %s125
    %s129 = sphi 0, %s128
    %s145 = sphi 0, %s129
    %s151 = sphi 0, %s153
    %s154 = sphi 0, %s151
    %s155 = sphi 0, %s154
    %s171 = sphi 0, %s155
  $region4: #{down_conv_forward.4} parent=0 // loop_header_branch
    %15 = sbr.rel (%p13) target = $region8
  $region5: #{down_conv_forward.4} parent=0 // loop_body
    %s17 = ssub.s32 %s12, 1
    %s18 = ssub.s32 %s12, 2
    %s25 = sadd.s32 1, %s20
    %p26 = scmp.ge.s32.totalorder %s25, 1
    %s27 = scalar_select %p26, 0, %s25
    %s28 = sadd.s32 1, %s19
    %s29 = scalar_select %p26, %s28, %s19
    %p30 = scmp.ge.s32.totalorder %s29, 2
    %s31 = scalar_select %p30, 0, %s29
    %s32 = ssub.s32 %s19, %s31
    %p33 = scmp.eq.s32.totalorder %s32, 0
    %s35 = sadd.s32 %s34, 1
    %s36 = scalar_select %p33, %s34, %s35
    %p39 = pneg %p33
    %p40 = scmp.eq.s32.totalorder %s12, 1
    %p41 = por %p39, %p40
    %p42 = scmp.ne.s32.totalorder %s34, %s37
    %p43 = scmp.eq.s32.totalorder %s12, 0
    %p44 = por %p42, %p43
    %p45 = scmp.ne.s32.totalorder %s34, %s37
    %p46 = scmp.eq.s32.totalorder %s17, 1
    %p47 = por %p45, %p46
    %p48 = scmp.ne.s32.totalorder %s37, %s38
    %p49 = scmp.eq.s32.totalorder %s17, 0
    %p50 = por %p48, %p49
    %p51 = scmp.ne.s32.totalorder %s37, %s38
    %p52 = scmp.eq.s32.totalorder %s18, 1
    %p53 = por %p51, %p52
    %p55 = scmp.ne.s32.totalorder %s38, %s54
    %p56 = scmp.eq.s32.totalorder %s18, 0
    %p57 = por %p55, %p56
    %s59 = sadd.s32 %s58, 1
    %p62 = scmp.eq.s32.totalorder %s12, 1
    %p63 = scmp.ne.s32.totalorder %s58, %s60
    %p64 = scmp.eq.s32.totalorder %s12, 0
    %p65 = por %p63, %p64
    %p66 = scmp.ne.s32.totalorder %s58, %s60
    %p67 = scmp.eq.s32.totalorder %s17, 1
    %p68 = por %p66, %p67
    %p69 = scmp.ne.s32.totalorder %s60, %s61
    %p70 = scmp.eq.s32.totalorder %s17, 0
    %p71 = por %p69, %p70
    %p72 = scmp.ne.s32.totalorder %s60, %s61
    %p73 = scmp.eq.s32.totalorder %s18, 1
    %p74 = por %p72, %p73
    %p76 = scmp.ne.s32.totalorder %s61, %s75
    %p77 = scmp.eq.s32.totalorder %s18, 0
    %p78 = por %p76, %p77
    %s80 = sadd.s32 %s79, 1
    %p83 = scmp.eq.s32.totalorder %s12, 1
    %p84 = scmp.ne.s32.totalorder %s79, %s81
    %p85 = scmp.eq.s32.totalorder %s12, 0
    %p86 = por %p84, %p85
    %p87 = scmp.ne.s32.totalorder %s79, %s81
    %p88 = scmp.eq.s32.totalorder %s17, 1
    %p89 = por %p87, %p88
    %p90 = scmp.ne.s32.totalorder %s81, %s82
    %p91 = scmp.eq.s32.totalorder %s17, 0
    %p92 = por %p90, %p91
    %p93 = scmp.ne.s32.totalorder %s81, %s82
    %p94 = scmp.eq.s32.totalorder %s18, 1
    %p95 = por %p93, %p94
    %p97 = scmp.ne.s32.totalorder %s82, %s96
    %p98 = scmp.eq.s32.totalorder %s18, 0
    %p99 = por %p97, %p98
    %s101 = sadd.s32 %s100, 1
    %p104 = scmp.eq.s32.totalorder %s12, 1
    %p105 = scmp.ne.s32.totalorder %s100, %s102
    %p106 = scmp.eq.s32.totalorder %s12, 0
    %p107 = por %p105, %p106
    %p108 = scmp.ne.s32.totalorder %s100, %s102
    %p109 = scmp.eq.s32.totalorder %s17, 1
    %p110 = por %p108, %p109
    %p111 = scmp.ne.s32.totalorder %s102, %s103
    %p112 = scmp.eq.s32.totalorder %s17, 0
    %p113 = por %p111, %p112
    %p114 = scmp.ne.s32.totalorder %s102, %s103
    %p115 = scmp.eq.s32.totalorder %s18, 1
    %p116 = por %p114, %p115
    %p118 = scmp.ne.s32.totalorder %s103, %s117
    %p119 = scmp.eq.s32.totalorder %s18, 0
    %p120 = por %p118, %p119
    %s121 = ssub.s32 %s19, %s31
    %s122 = ssub.s32 %s20, %s27
    %s123 = sor.u32 %s121, %s122
    %p124 = scmp.eq.s32.totalorder %s123, 0
    %s126 = sadd.s32 %s125, 1
    %s127 = scalar_select %p124, %s125, %s126
    %p130 = pneg %p124
    %p131 = scmp.eq.s32.totalorder %s12, 1
    %p132 = por %p130, %p131
    %p133 = scmp.ne.s32.totalorder %s125, %s128
    %p134 = scmp.eq.s32.totalorder %s12, 0
    %p135 = por %p133, %p134
    %p136 = scmp.ne.s32.totalorder %s125, %s128
    %p137 = scmp.eq.s32.totalorder %s17, 1
    %p138 = por %p136, %p137
    %p139 = scmp.ne.s32.totalorder %s128, %s129
    %p140 = scmp.eq.s32.totalorder %s17, 0
    %p141 = por %p139, %p140
    %p142 = scmp.ne.s32.totalorder %s128, %s129
    %p143 = scmp.eq.s32.totalorder %s18, 1
    %p144 = por %p142, %p143
    %p146 = scmp.ne.s32.totalorder %s129, %s145
    %p147 = scmp.eq.s32.totalorder %s18, 0
    %p148 = por %p146, %p147
    %s149 = ssub.s32 %s19, %s31
    %p150 = scmp.eq.s32.totalorder %s149, 0
    %s152 = sadd.s32 %s151, 1
    %s153 = scalar_select %p150, %s151, %s152
    %p156 = pneg %p150
    %p157 = scmp.eq.s32.totalorder %s12, 1
    %p158 = por %p156, %p157
    %p159 = scmp.ne.s32.totalorder %s151, %s154
    %p160 = scmp.eq.s32.totalorder %s12, 0
    %p161 = por %p159, %p160
    %p162 = scmp.ne.s32.totalorder %s151, %s154
    %p163 = scmp.eq.s32.totalorder %s17, 1
    %p164 = por %p162, %p163
    %p165 = scmp.ne.s32.totalorder %s154, %s155
    %p166 = scmp.eq.s32.totalorder %s17, 0
    %p167 = por %p165, %p166
    %p168 = scmp.ne.s32.totalorder %s154, %s155
    %p169 = scmp.eq.s32.totalorder %s18, 1
    %p170 = por %p168, %p169
    %p172 = scmp.ne.s32.totalorder %s155, %s171
    %p173 = scmp.eq.s32.totalorder %s18, 0
    %p174 = por %p172, %p173
    %p175 = scmp.le.s32.totalorder 1, %s12
    %p176 = scmp.lt.s32.totalorder %s12, 3
    %p177 = pnand %p175, %p176
    %p178 = pneg %p177
    // Predicated region
    $region9: #{down_conv_forward.4} parent=5 // pred_check
      _
    $region10: #{down_conv_forward.4} parent=5 // pred_check_branch
      %180 = sbr.rel (%p177) target = $region12
    $region11: #{down_conv_forward.4} parent=5 // pred_region
      %s181 = ssub.s32 %s12, 1
      // Predicated region
      $region13: #{down_conv_forward.4} parent=11 // pred_check
        %p182 = pneg %p71
      $region14: #{down_conv_forward.4} parent=11 // pred_check_branch
        %184 = sbr.rel (%p182) target = $region16
      $region15: #{down_conv_forward.4} parent=11 // pred_region
        _
      $region16: #{down_conv_forward.4} parent=11 // pred_fallthru
        _
      // Predicated region
      $region17: #{down_conv_forward.4} parent=11 // pred_check
        %p185 = pneg %p92
      $region18: #{down_conv_forward.4} parent=11 // pred_check_branch
        %187 = sbr.rel (%p185) target = $region20
      $region19: #{down_conv_forward.4} parent=11 // pred_region
        _
      $region20: #{down_conv_forward.4} parent=11 // pred_fallthru
        _
      // Predicated region
      $region21: #{down_conv_forward.4} parent=11 // pred_check
        %p188 = pneg %p113
      $region22: #{down_conv_forward.4} parent=11 // pred_check_branch
        %190 = sbr.rel (%p188) target = $region24
      $region23: #{down_conv_forward.4} parent=11 // pred_region
        _
      $region24: #{down_conv_forward.4} parent=11 // pred_fallthru
        _
    $region12: #{down_conv_forward.4} parent=5 // pred_fallthru
      _
    %p191 = scmp.lt.s32.totalorder %s12, 2
    // Predicated region
    $region25: #{down_conv_forward.4} parent=5 // pred_check
      %p192 = pneg %p191
    $region26: #{down_conv_forward.4} parent=5 // pred_check_branch
      %194 = sbr.rel (%p192) target = $region28
    $region27: #{down_conv_forward.4} parent=5 // pred_region
      // Predicated region
      $region29: #{down_conv_forward.4} parent=27 // pred_check
        %p195 = pneg %p44
      $region30: #{down_conv_forward.4} parent=27 // pred_check_branch
        %197 = sbr.rel (%p195) target = $region32
      $region31: #{down_conv_forward.4} parent=27 // pred_region
        %p198 = scmp.lt.s32.totalorder %s19, 1
        %s199 = scalar_select %p198, %s19, 1
        %s200 = smul.addr %s199, 28
        %s201 = smul.addr %s200, 4
        %s202 = scalar_lea.vmem %s0, %s201
      $region32: #{down_conv_forward.4} parent=27 // pred_fallthru
        _
    $region28: #{down_conv_forward.4} parent=5 // pred_fallthru
      _
    %p203 = scmp.le.s32.totalorder 1, %s12
    %p204 = scmp.lt.s32.totalorder %s12, 3
    %p205 = pnand %p203, %p204
    %p206 = pneg %p205
    // Predicated region
    $region33: #{down_conv_forward.4} parent=5 // pred_check
      _
    $region34: #{down_conv_forward.4} parent=5 // pred_check_branch
      %208 = sbr.rel (%p205) target = $region36
    $region35: #{down_conv_forward.4} parent=5 // pred_region
      %s209 = ssub.s32 %s12, 1
      %p210 = scmp.lt.s32.totalorder %s21, 1
      %s211 = scalar_select %p210, %s21, 1
      %s212 = smul.addr %s211, 28
      %s213 = smul.addr %s212, 4
      %s214 = scalar_lea.vmem %s0, %s213
      %p215 = pneg %p50
      %p216 = pneg %p47
      %p217 = pneg %p71
      %p218 = pneg %p68
      %p219 = pneg %p92
      %p220 = pneg %p89
      %p221 = pneg %p113
      %p222 = pneg %p110
      %p223 = pneg %p141
      %p224 = pneg %p138
      %s225 = smul.u32 12, %s22
      %p226 = scmp.lt.s32.totalorder %s21, 1
      %s227 = scalar_select %p226, %s21, 1
      %p228 = scmp.lt.s32.totalorder %s225, 11
      %s229 = scalar_select %p228, %s225, 11
      %s230 = smul.addr %s229, 2
      %s231 = smul.addr %s227, 24
      %s232 = sadd.s32 %s230, %s231
      %s233 = smul.addr %s232, 8
      %s234 = scalar_lea.vmem %s4, %s233
      %p235 = pneg %p167
      %p236 = pneg %p164
      %p237 = scmp.lt.s32.totalorder %s21, 1
      %s238 = scalar_select %p237, %s21, 1
      %s239 = smul.addr %s238, 2
      %s240 = scalar_lea.vmem %s5, %s239
      %p241 = scmp.lt.s32.totalorder %s21, 1
      %s242 = scalar_select %p241, %s21, 1
      %s243 = smul.addr %s242, 28
      %s244 = smul.addr %s243, 4
      %s245 = scalar_lea.vmem %s0, %s244
      %s246 = smul.u32 12, %s22
      %p247 = scmp.lt.s32.totalorder %s21, 1
      %s248 = scalar_select %p247, %s21, 1
      %p249 = scmp.lt.s32.totalorder %s246, 11
      %s250 = scalar_select %p249, %s246, 11
      %s251 = smul.addr %s250, 2
      %s252 = smul.addr %s248, 24
      %s253 = sadd.s32 %s251, %s252
      %s254 = smul.addr %s253, 8
      %s255 = scalar_lea.vmem %s4, %s254
      %s256 = smul.u32 12, %s22
      %p257 = scmp.lt.s32.totalorder %s21, 1
      %s258 = scalar_select %p257, %s21, 1
      %s259 = smul.addr %s258, 2
      %s260 = scalar_lea.vmem %s5, %s259
      %s262 = smul.u32 %s22, 12
      %v263 = vld [vmem:[%s1] sm:$0xf]
      %v264 = vld [vmem:[%s1 + $0x4] sm:$0xf]
      %v265 = vld [vmem:[%s1 + $0x8] sm:$0xf]
      %v266 = vld [vmem:[%s1 + $0xc] sm:$0xf]
      %v267 = vld [vmem:[%s1 + $0x10] sm:$0xf]
      %v268 = vld [vmem:[%s1 + $0x14] sm:$0xf]
      %v269 = vld [vmem:[%s1 + $0x18] sm:$0xf]
      %v270 = vld [vmem:[%s1 + $0x1c] sm:$0xf]
      %v271 = vld [vmem:[%s1 + $0x20] sm:$0xf]
      %v272 = vld [vmem:[%s1 + $0x24] sm:$0xf]
      %v273 = vld [vmem:[%s1 + $0x28] sm:$0xf]
      %v274 = vld [vmem:[%s1 + $0x2c] sm:$0xf]
      %v275 = vld [vmem:[%s1 + $0x30] sm:$0xf]
      %v276 = vld [vmem:[%s1 + $0x34] sm:$0xf]
      %v277 = vld [vmem:[%s1 + $0x38] sm:$0xf]
      %v278 = vld [vmem:[%s1 + $0x3c] sm:$0xf]
      %v279 = vld [vmem:[%s1 + $0x40] sm:$0xf]
      %v280 = vld [vmem:[%s1 + $0x44] sm:$0xf]
      %v281 = vld [vmem:[%s1 + $0x48] sm:$0xf]
      %v282 = vld [vmem:[%s1 + $0x4c] sm:$0xf]
      %v283 = vld [vmem:[%s1 + $0x50] sm:$0xf]
      %v284 = vld [vmem:[%s1 + $0x54] sm:$0xf]
      %v285 = vld [vmem:[%s1 + $0x58] sm:$0xf]
      %v286 = vld [vmem:[%s1 + $0x5c] sm:$0xf]
      %v287 = vld [vmem:[%s1 + $0x60] sm:$0xf]
      %v288 = vld [vmem:[%s1 + $0x64] sm:$0xf]
      %v289 = vld [vmem:[%s1 + $0x68] sm:$0xf]
      %v290 = vld [vmem:[%s1 + $0x6c] sm:$0xf]
      %v291 = vld [vmem:[%s1 + $0x70] sm:$0xf]
      %v292 = vld [vmem:[%s1 + $0x74] sm:$0xf]
      %v293 = vld [vmem:[%s1 + $0x78] sm:$0xf]
      %v294 = vld [vmem:[%s1 + $0x7c] sm:$0xf]
      %v295 = vld [vmem:[%s1 + $0x80] sm:$0xf]
      %v296 = vld [vmem:[%s1 + $0x84] sm:$0xf]
      %v297 = vld [vmem:[%s1 + $0x88] sm:$0xf]
      %v298 = vld [vmem:[%s1 + $0x8c] sm:$0xf]
      %v299 = vld [vmem:[%s1 + $0x90] sm:$0xf]
      %v300 = vld [vmem:[%s1 + $0x94] sm:$0xf]
      %v301 = vld [vmem:[%s1 + $0x98] sm:$0xf]
      %v302 = vld [vmem:[%s1 + $0x9c] sm:$0xf]
      %v303 = vld [vmem:[%s1 + $0xa0] sm:$0xf]
      %v304 = vld [vmem:[%s1 + $0xa4] sm:$0xf]
      %v305 = vld [vmem:[%s1 + $0xa8] sm:$0xf]
      %v306 = vld [vmem:[%s1 + $0xac] sm:$0xf]
      %v307 = vld [vmem:[%s1 + $0xb0] sm:$0xf]
      %v308 = vld [vmem:[%s1 + $0xb4] sm:$0xf]
      %v309 = vld [vmem:[%s1 + $0xb8] sm:$0xf]
      %v310 = vld [vmem:[%s1 + $0xbc] sm:$0xf]
      %v311 = vld [vmem:[%s1 + $0xc0] sm:$0xf]
      %v312 = vld [vmem:[%s1 + $0xc4] sm:$0xf]
      %v313 = vld [vmem:[%s1 + $0xc8] sm:$0xf]
      %v314 = vld [vmem:[%s1 + $0xcc] sm:$0xf]
      %v315 = vld [vmem:[%s1 + $0xd0] sm:$0xf]
      %v316 = vld [vmem:[%s1 + $0xd4] sm:$0xf]
      %v317 = vld [vmem:[%s1 + $0xd8] sm:$0xf]
      %v318 = vld [vmem:[%s1 + $0xdc] sm:$0xf]
      %v319 = vld [vmem:[%s1 + $0xe0] sm:$0xf]
      %v320 = vld [vmem:[%s1 + $0xe4] sm:$0xf]
      %v321 = vld [vmem:[%s1 + $0xe8] sm:$0xf]
      %v322 = vld [vmem:[%s1 + $0xec] sm:$0xf]
      %v323 = vld [vmem:[%s1 + $0xf0] sm:$0xf]
      %v324 = vld [vmem:[%s1 + $0xf4] sm:$0xf]
      %v325 = vld [vmem:[%s1 + $0xf8] sm:$0xf]
      %v326 = vld [vmem:[%s1 + $0xfc] sm:$0xf]
      %v327 = vld [vmem:[%s1 + $0x100] sm:$0xf]
      %v328 = vld [vmem:[%s1 + $0x104] sm:$0xf]
      %v329 = vld [vmem:[%s1 + $0x108] sm:$0xf]
      %v330 = vld [vmem:[%s1 + $0x10c] sm:$0xf]
      %v331 = vld [vmem:[%s1 + $0x110] sm:$0xf]
      %v332 = vld [vmem:[%s1 + $0x114] sm:$0xf]
      %v333 = vld [vmem:[%s1 + $0x118] sm:$0xf]
      %v334 = vld [vmem:[%s1 + $0x11c] sm:$0xf]
      %v335 = vld [vmem:[%s1 + $0x120] sm:$0xf]
      %v336 = vld [vmem:[%s1 + $0x124] sm:$0xf]
      %v337 = vld [vmem:[%s1 + $0x128] sm:$0xf]
      %v338 = vld [vmem:[%s1 + $0x12c] sm:$0xf]
      %v339 = vld [vmem:[%s1 + $0x130] sm:$0xf]
      %v340 = vld [vmem:[%s1 + $0x134] sm:$0xf]
      %v341 = vld [vmem:[%s1 + $0x138] sm:$0xf]
      %v342 = vld [vmem:[%s1 + $0x13c] sm:$0xf]
      %v343 = vld [vmem:[%s1 + $0x140] sm:$0xf]
      %v344 = vld [vmem:[%s1 + $0x144] sm:$0xf]
      %v345 = vld [vmem:[%s1 + $0x148] sm:$0xf]
      %v346 = vld [vmem:[%s1 + $0x14c] sm:$0xf]
      %v347 = vld [vmem:[%s1 + $0x150] sm:$0xf]
      %v348 = vld [vmem:[%s1 + $0x154] sm:$0xf]
      %v349 = vld [vmem:[%s1 + $0x158] sm:$0xf]
      %v350 = vld [vmem:[%s1 + $0x15c] sm:$0xf]
      %v351 = vld [vmem:[%s1 + $0x160] sm:$0xf]
      %v352 = vld [vmem:[%s1 + $0x164] sm:$0xf]
      %v353 = vld [vmem:[%s1 + $0x168] sm:$0xf]
      %v354 = vld [vmem:[%s1 + $0x16c] sm:$0xf]
      %v355 = vld [vmem:[%s1 + $0x170] sm:$0xf]
      %v356 = vld [vmem:[%s1 + $0x174] sm:$0xf]
      %v357 = vld [vmem:[%s1 + $0x178] sm:$0xf]
      %v358 = vld [vmem:[%s1 + $0x17c] sm:$0xf]
      %v359 = vld [vmem:[%s1 + $0x180] sm:$0xf]
      %v360 = vld [vmem:[%s1 + $0x184] sm:$0xf]
      %v361 = vld [vmem:[%s1 + $0x188] sm:$0xf]
      %v362 = vld [vmem:[%s1 + $0x18c] sm:$0xf]
      %v363 = vld [vmem:[%s1 + $0x190] sm:$0xf]
      %v364 = vld [vmem:[%s1 + $0x194] sm:$0xf]
      %v365 = vld [vmem:[%s1 + $0x198] sm:$0xf]
      %v366 = vld [vmem:[%s1 + $0x19c] sm:$0xf]
      %v367 = vld [vmem:[%s1 + $0x1a0] sm:$0xf]
      %v368 = vld [vmem:[%s1 + $0x1a4] sm:$0xf]
      %v369 = vld [vmem:[%s1 + $0x1a8] sm:$0xf]
      %v370 = vld [vmem:[%s1 + $0x1ac] sm:$0xf]
      %v371 = vld [vmem:[%s1 + $0x1b0] sm:$0xf]
      %v372 = vld [vmem:[%s1 + $0x1b4] sm:$0xf]
      %v373 = vld [vmem:[%s1 + $0x1b8] sm:$0xf]
      %v374 = vld [vmem:[%s1 + $0x1bc] sm:$0xf]
      %v375 = vld [vmem:[%s1 + $0x1c0] sm:$0xf]
      %v376 = vld [vmem:[%s1 + $0x1c4] sm:$0xf]
      %v377 = vld [vmem:[%s1 + $0x1c8] sm:$0xf]
      %v378 = vld [vmem:[%s1 + $0x1cc] sm:$0xf]
      %v379 = vld [vmem:[%s1 + $0x1d0] sm:$0xf]
      %v380 = vld [vmem:[%s1 + $0x1d4] sm:$0xf]
      %v381 = vld [vmem:[%s1 + $0x1d8] sm:$0xf]
      %v382 = vld [vmem:[%s1 + $0x1dc] sm:$0xf]
      %v383 = vld [vmem:[%s1 + $0x1e0] sm:$0xf]
      %v384 = vld [vmem:[%s1 + $0x1e4] sm:$0xf]
      %v385 = vld [vmem:[%s1 + $0x1e8] sm:$0xf]
      %v386 = vld [vmem:[%s1 + $0x1ec] sm:$0xf]
      %v387 = vld [vmem:[%s1 + $0x1f0] sm:$0xf]
      %v388 = vld [vmem:[%s1 + $0x1f4] sm:$0xf]
      %v389 = vld [vmem:[%s1 + $0x1f8] sm:$0xf]
      %v390 = vld [vmem:[%s1 + $0x1fc] sm:$0xf]
      %v391 = vld [vmem:[%s1 + $0x200] sm:$0xf]
      %v392 = vld [vmem:[%s1 + $0x204] sm:$0xf]
      %v393 = vld [vmem:[%s1 + $0x208] sm:$0xf]
      %v394 = vld [vmem:[%s1 + $0x20c] sm:$0xf]
      %v395 = vld [vmem:[%s1 + $0x210] sm:$0xf]
      %v396 = vld [vmem:[%s1 + $0x214] sm:$0xf]
      %v397 = vld [vmem:[%s1 + $0x218] sm:$0xf]
      %v398 = vld [vmem:[%s1 + $0x21c] sm:$0xf]
      %v399 = vld [vmem:[%s1 + $0x220] sm:$0xf]
      %v400 = vld [vmem:[%s1 + $0x224] sm:$0xf]
      %v401 = vld [vmem:[%s1 + $0x228] sm:$0xf]
      %v402 = vld [vmem:[%s1 + $0x22c] sm:$0xf]
      %v403 = vld [vmem:[%s1 + $0x230] sm:$0xf]
      %v404 = vld [vmem:[%s1 + $0x234] sm:$0xf]
      %v405 = vld [vmem:[%s1 + $0x238] sm:$0xf]
      %v406 = vld [vmem:[%s1 + $0x23c] sm:$0xf]
      loop: start=0, step=1, limit=12
      $region37: #{down_conv_forward.4} parent=35 // loop_pre_header
        _
      $region38: #{down_conv_forward.4} parent=35 // loop_header
        %s408 = sphi 0, %s412
        %p409 = scmp.ge.s32.totalorder %s408, 12
        %v413 = vphi 0.0, %v1157
        %v414 = vphi 0.0, %v1168
      $region39: #{down_conv_forward.4} parent=35 // loop_header_branch
        %411 = sbr.rel (%p409) target = $region43
      $region40: #{down_conv_forward.4} parent=35 // loop_body
        %s415 = sadd.s32 %s262, %s408
        %s416 = smul.u32 %s415, 2
        %s417 = smul.addr %s416, 4
        %s418 = scalar_lea.vmem %s245, %s417
        %v419 = vld [vmem:[%s418] sm:$0xf]
        %v420 = vld [vmem:[%s418 + $0x4] sm:$0x7]
        %v421 = vunpack.c.l.bf16 %v419
        %v422 = vunpack.c.l.bf16 %v420
        %v423 = vld [vmem:[%s2] sm:$0x1]
        %v425 = vlaneseq
        %v426 = vshrl.u32 %v425, 7
        %v427 = vsub.s32 0, %v426
        %v428 = vrot.slane %v423, %v427
        %v430 = vmul.f32 %v421, %v428
        %v431 = vmul.f32 %v422, %v428
        %v432 = vld [vmem:[%s3] sm:$0x1]
        %v434 = vlaneseq
        %v435 = vshrl.u32 %v434, 7
        %v436 = vsub.s32 0, %v435
        %v437 = vrot.slane %v432, %v436
        %v439 = vadd.f32 %v430, %v437
        %v440 = vadd.f32 %v431, %v437
        %v441 = vmax.f32 %v439, 0.0
        %v442 = vmax.f32 %v440, 0.0
        %v443 = vpack.c.bf16 %v442, %v441
        %s444 = sadd.s32 %s415, 1
        %s445 = smul.u32 %s444, 2
        %s446 = smul.addr %s445, 4
        %s447 = scalar_lea.vmem %s245, %s446
        %v448 = vld [vmem:[%s447] sm:$0xf]
        %v449 = vld [vmem:[%s447 + $0x4] sm:$0x7]
        %v450 = vunpack.c.l.bf16 %v448
        %v451 = vunpack.c.l.bf16 %v449
        %v452 = vmul.f32 %v450, %v428
        %v453 = vmul.f32 %v451, %v428
        %v454 = vadd.f32 %v452, %v437
        %v455 = vadd.f32 %v453, %v437
        %v456 = vmax.f32 %v454, 0.0
        %v457 = vmax.f32 %v455, 0.0
        %v458 = vpack.c.bf16 %v457, %v456
        %s459 = sadd.s32 %s415, 2
        %s460 = smul.u32 %s459, 2
        %s461 = smul.addr %s460, 4
        %s462 = scalar_lea.vmem %s245, %s461
        %v463 = vld [vmem:[%s462] sm:$0xf]
        %v464 = vld [vmem:[%s462 + $0x4] sm:$0x7]
        %v465 = vunpack.c.l.bf16 %v463
        %v466 = vunpack.c.l.bf16 %v464
        %v467 = vmul.f32 %v465, %v428
        %v468 = vmul.f32 %v466, %v428
        %v469 = vadd.f32 %v467, %v437
        %v470 = vadd.f32 %v468, %v437
        %v471 = vmax.f32 %v469, 0.0
        %v472 = vmax.f32 %v470, 0.0
        %v473 = vpack.c.bf16 %v472, %v471
        %v475 = vshrl.u32 %v443, 16
        %v477 = vshll.u32 %v443, 16
        %v479 = vrot.slane %v477, 1
        %v480 = vor.u32 %v475, %v479
        %v483 = vrot.slane %v443, 1
        %v486 = vshrl.u32 %v458, 16
        %v488 = vshll.u32 %v458, 16
        %v490 = vrot.slane %v488, 1
        %v491 = vor.u32 %v486, %v490
        %v494 = vrot.slane %v458, 1
        %v497 = vshrl.u32 %v473, 16
        %v499 = vshll.u32 %v473, 16
        %v501 = vrot.slane %v499, 1
        %v502 = vor.u32 %v497, %v501
        %v505 = vrot.slane %v473, 1
        %v651 = vunpack.c.l.b16 %v263
        %v652 = vunpack.c.l.b16 %v264
        %v653 = vunpack.c.l.b16 %v265
        %v654 = vunpack.c.l.b16 %v266
        %v655 = vunpack.c.l.b16 %v267
        %v656 = vunpack.c.l.b16 %v268
        %v657 = vunpack.c.l.b16 %v269
        %v658 = vunpack.c.l.b16 %v270
        %v659 = vunpack.c.l.b16 %v271
        %v660 = vunpack.c.l.b16 %v272
        %v661 = vunpack.c.l.b16 %v273
        %v662 = vunpack.c.l.b16 %v274
        %v663 = vunpack.c.l.b16 %v275
        %v664 = vunpack.c.l.b16 %v276
        %v665 = vunpack.c.l.b16 %v277
        %v666 = vunpack.c.l.b16 %v278
        %v667 = vunpack.c.l.b16 %v279
        %v668 = vunpack.c.l.b16 %v280
        %v669 = vunpack.c.l.b16 %v281
        %v670 = vunpack.c.l.b16 %v282
        %v671 = vunpack.c.l.b16 %v283
        %v672 = vunpack.c.l.b16 %v284
        %v673 = vunpack.c.l.b16 %v285
        %v674 = vunpack.c.l.b16 %v286
        %v675 = vunpack.c.l.b16 %v287
        %v676 = vunpack.c.l.b16 %v288
        %v677 = vunpack.c.l.b16 %v289
        %v678 = vunpack.c.l.b16 %v290
        %v679 = vunpack.c.l.b16 %v291
        %v680 = vunpack.c.l.b16 %v292
        %v681 = vunpack.c.l.b16 %v293
        %v682 = vunpack.c.l.b16 %v294
        %v683 = vunpack.c.l.b16 %v295
        %v684 = vunpack.c.l.b16 %v296
        %v685 = vunpack.c.l.b16 %v297
        %v686 = vunpack.c.l.b16 %v298
        %v687 = vunpack.c.l.b16 %v299
        %v688 = vunpack.c.l.b16 %v300
        %v689 = vunpack.c.l.b16 %v301
        %v690 = vunpack.c.l.b16 %v302
        %v691 = vunpack.c.l.b16 %v303
        %v692 = vunpack.c.l.b16 %v304
        %v693 = vunpack.c.l.b16 %v305
        %v694 = vunpack.c.l.b16 %v306
        %v695 = vunpack.c.l.b16 %v307
        %v696 = vunpack.c.l.b16 %v308
        %v697 = vunpack.c.l.b16 %v309
        %v698 = vunpack.c.l.b16 %v310
        %v699 = vunpack.c.l.b16 %v311
        %v700 = vunpack.c.l.b16 %v312
        %v701 = vunpack.c.l.b16 %v313
        %v702 = vunpack.c.l.b16 %v314
        %v703 = vunpack.c.l.b16 %v315
        %v704 = vunpack.c.l.b16 %v316
        %v705 = vunpack.c.l.b16 %v317
        %v706 = vunpack.c.l.b16 %v318
        %v707 = vunpack.c.l.b16 %v319
        %v708 = vunpack.c.l.b16 %v320
        %v709 = vunpack.c.l.b16 %v321
        %v710 = vunpack.c.l.b16 %v322
        %v711 = vunpack.c.l.b16 %v323
        %v712 = vunpack.c.l.b16 %v324
        %v713 = vunpack.c.l.b16 %v325
        %v714 = vunpack.c.l.b16 %v326
        %v715 = vunpack.c.l.b16 %v327
        %v716 = vunpack.c.l.b16 %v328
        %v717 = vunpack.c.l.b16 %v329
        %v718 = vunpack.c.l.b16 %v330
        %v719 = vunpack.c.l.b16 %v331
        %v720 = vunpack.c.l.b16 %v332
        %v721 = vunpack.c.l.b16 %v333
        %v722 = vunpack.c.l.b16 %v334
        %v723 = vunpack.c.l.b16 %v335
        %v724 = vunpack.c.l.b16 %v336
        %v725 = vunpack.c.l.b16 %v337
        %v726 = vunpack.c.l.b16 %v338
        %v727 = vunpack.c.l.b16 %v339
        %v728 = vunpack.c.l.b16 %v340
        %v729 = vunpack.c.l.b16 %v341
        %v730 = vunpack.c.l.b16 %v342
        %v731 = vunpack.c.l.b16 %v343
        %v732 = vunpack.c.l.b16 %v344
        %v733 = vunpack.c.l.b16 %v345
        %v734 = vunpack.c.l.b16 %v346
        %v735 = vunpack.c.l.b16 %v347
        %v736 = vunpack.c.l.b16 %v348
        %v737 = vunpack.c.l.b16 %v349
        %v738 = vunpack.c.l.b16 %v350
        %v739 = vunpack.c.l.b16 %v351
        %v740 = vunpack.c.l.b16 %v352
        %v741 = vunpack.c.l.b16 %v353
        %v742 = vunpack.c.l.b16 %v354
        %v743 = vunpack.c.l.b16 %v355
        %v744 = vunpack.c.l.b16 %v356
        %v745 = vunpack.c.l.b16 %v357
        %v746 = vunpack.c.l.b16 %v358
        %v747 = vunpack.c.l.b16 %v359
        %v748 = vunpack.c.l.b16 %v360
        %v749 = vunpack.c.l.b16 %v361
        %v750 = vunpack.c.l.b16 %v362
        %v751 = vunpack.c.l.b16 %v363
        %v752 = vunpack.c.l.b16 %v364
        %v753 = vunpack.c.l.b16 %v365
        %v754 = vunpack.c.l.b16 %v366
        %v755 = vunpack.c.l.b16 %v367
        %v756 = vunpack.c.l.b16 %v368
        %v757 = vunpack.c.l.b16 %v369
        %v758 = vunpack.c.l.b16 %v370
        %v759 = vunpack.c.l.b16 %v371
        %v760 = vunpack.c.l.b16 %v372
        %v761 = vunpack.c.l.b16 %v373
        %v762 = vunpack.c.l.b16 %v374
        %v763 = vunpack.c.l.b16 %v375
        %v764 = vunpack.c.l.b16 %v376
        %v765 = vunpack.c.l.b16 %v377
        %v766 = vunpack.c.l.b16 %v378
        %v767 = vunpack.c.l.b16 %v379
        %v768 = vunpack.c.l.b16 %v380
        %v769 = vunpack.c.l.b16 %v381
        %v770 = vunpack.c.l.b16 %v382
        %v771 = vunpack.c.l.b16 %v383
        %v772 = vunpack.c.l.b16 %v384
        %v773 = vunpack.c.l.b16 %v385
        %v774 = vunpack.c.l.b16 %v386
        %v775 = vunpack.c.l.b16 %v387
        %v776 = vunpack.c.l.b16 %v388
        %v777 = vunpack.c.l.b16 %v389
        %v778 = vunpack.c.l.b16 %v390
        %v779 = vunpack.c.l.b16 %v391
        %v780 = vunpack.c.l.b16 %v392
        %v781 = vunpack.c.l.b16 %v393
        %v782 = vunpack.c.l.b16 %v394
        %v783 = vunpack.c.l.b16 %v395
        %v784 = vunpack.c.l.b16 %v396
        %v785 = vunpack.c.l.b16 %v397
        %v786 = vunpack.c.l.b16 %v398
        %v787 = vunpack.c.l.b16 %v399
        %v788 = vunpack.c.l.b16 %v400
        %v789 = vunpack.c.l.b16 %v401
        %v790 = vunpack.c.l.b16 %v402
        %v791 = vunpack.c.l.b16 %v403
        %v792 = vunpack.c.l.b16 %v404
        %v793 = vunpack.c.l.b16 %v405
        %v794 = vunpack.c.l.b16 %v406
        %v795 = vpack.c.b16 %v652, %v651
        %v796 = vpack.c.b16 %v654, %v653
        %v797 = vpack.c.b16 %v656, %v655
        %v798 = vpack.c.b16 %v658, %v657
        %v799 = vpack.c.b16 %v660, %v659
        %v800 = vpack.c.b16 %v662, %v661
        %v801 = vpack.c.b16 %v664, %v663
        %v802 = vpack.c.b16 %v666, %v665
        %v803 = vpack.c.b16 %v668, %v667
        %v804 = vpack.c.b16 %v670, %v669
        %v805 = vpack.c.b16 %v672, %v671
        %v806 = vpack.c.b16 %v674, %v673
        %v807 = vpack.c.b16 %v676, %v675
        %v808 = vpack.c.b16 %v678, %v677
        %v809 = vpack.c.b16 %v680, %v679
        %v810 = vpack.c.b16 %v682, %v681
        %v811 = vpack.c.b16 %v684, %v683
        %v812 = vpack.c.b16 %v686, %v685
        %v813 = vpack.c.b16 %v688, %v687
        %v814 = vpack.c.b16 %v690, %v689
        %v815 = vpack.c.b16 %v692, %v691
        %v816 = vpack.c.b16 %v694, %v693
        %v817 = vpack.c.b16 %v696, %v695
        %v818 = vpack.c.b16 %v698, %v697
        %v819 = vpack.c.b16 %v700, %v699
        %v820 = vpack.c.b16 %v702, %v701
        %v821 = vpack.c.b16 %v704, %v703
        %v822 = vpack.c.b16 %v706, %v705
        %v823 = vpack.c.b16 %v708, %v707
        %v824 = vpack.c.b16 %v710, %v709
        %v825 = vpack.c.b16 %v712, %v711
        %v826 = vpack.c.b16 %v714, %v713
        %v827 = vpack.c.b16 %v716, %v715
        %v828 = vpack.c.b16 %v718, %v717
        %v829 = vpack.c.b16 %v720, %v719
        %v830 = vpack.c.b16 %v722, %v721
        %v831 = vpack.c.b16 %v724, %v723
        %v832 = vpack.c.b16 %v726, %v725
        %v833 = vpack.c.b16 %v728, %v727
        %v834 = vpack.c.b16 %v730, %v729
        %v835 = vpack.c.b16 %v732, %v731
        %v836 = vpack.c.b16 %v734, %v733
        %v837 = vpack.c.b16 %v736, %v735
        %v838 = vpack.c.b16 %v738, %v737
        %v839 = vpack.c.b16 %v740, %v739
        %v840 = vpack.c.b16 %v742, %v741
        %v841 = vpack.c.b16 %v744, %v743
        %v842 = vpack.c.b16 %v746, %v745
        %v843 = vpack.c.b16 %v748, %v747
        %v844 = vpack.c.b16 %v750, %v749
        %v845 = vpack.c.b16 %v752, %v751
        %v846 = vpack.c.b16 %v754, %v753
        %v847 = vpack.c.b16 %v756, %v755
        %v848 = vpack.c.b16 %v758, %v757
        %v849 = vpack.c.b16 %v760, %v759
        %v850 = vpack.c.b16 %v762, %v761
        %v851 = vpack.c.b16 %v764, %v763
        %v852 = vpack.c.b16 %v766, %v765
        %v853 = vpack.c.b16 %v768, %v767
        %v854 = vpack.c.b16 %v770, %v769
        %v855 = vpack.c.b16 %v772, %v771
        %v856 = vpack.c.b16 %v774, %v773
        %v857 = vpack.c.b16 %v776, %v775
        %v858 = vpack.c.b16 %v778, %v777
        %v859 = vpack.c.b16 %v780, %v779
        %v860 = vpack.c.b16 %v782, %v781
        %v861 = vpack.c.b16 %v784, %v783
        %v862 = vpack.c.b16 %v786, %v785
        %v863 = vpack.c.b16 %v788, %v787
        %v864 = vpack.c.b16 %v790, %v789
        %v865 = vpack.c.b16 %v792, %v791
        %v866 = vpack.c.b16 %v794, %v793
        %939 = vmatprep.subr.bf16.mxu0 0
        %940 = vmatpush1.bf16.msra.mxu0 %v802
        %941 = vmatprep.subr.bf16.mxu0 0
        %942 = vmatpush1.bf16.msra.mxu0 %v801
        %943 = vmatprep.subr.bf16.mxu0 0
        %944 = vmatpush1.bf16.msra.mxu0 %v800
        %945 = vmatprep.subr.bf16.mxu0 0
        %946 = vmatpush1.bf16.msra.mxu0 %v799
        %947 = vmatprep.subr.bf16.mxu0 0
        %948 = vmatpush1.bf16.msra.mxu0 %v798
        %949 = vmatprep.subr.bf16.mxu0 0
        %950 = vmatpush1.bf16.msra.mxu0 %v797
        %951 = vmatprep.subr.bf16.mxu0 0
        %952 = vmatpush1.bf16.msra.mxu0 %v796
        %953 = vmatprep.subr.bf16.mxu0 0
        %954 = vmatpush1.bf16.msra.mxu0 %v795
        %955 = vmatprep.subr.bf16.mxu0 0
        %956 = vmatpush2.bf16.msra.mxu0 %v810
        %957 = vmatprep.subr.bf16.mxu0 0
        %958 = vmatpush2.bf16.msra.mxu0 %v809
        %959 = vmatprep.subr.bf16.mxu0 0
        %960 = vmatpush2.bf16.msra.mxu0 %v808
        %961 = vmatprep.subr.bf16.mxu0 0
        %962 = vmatpush2.bf16.msra.mxu0 %v807
        %963 = vmatprep.subr.bf16.mxu0 0
        %964 = vmatpush2.bf16.msra.mxu0 %v806
        %965 = vmatprep.subr.bf16.mxu0 0
        %966 = vmatpush2.bf16.msra.mxu0 %v805
        %967 = vmatprep.subr.bf16.mxu0 0
        %968 = vmatpush2.bf16.msra.mxu0 %v804
        %969 = vmatprep.subr.bf16.mxu0 0
        %970 = vmatpush2.bf16.msra.mxu0 %v803
        %971 = vmatprep.mubr.bf16.mxu0 %v480
        %972 = vmatmul.mubr.bf16.gmra.mxu0 %v443
        %v973 = vpop.f32.mrf.mxu0
        %v974 = vadd.f32 0.0, %v973
        %v975 = vpop.f32.mrf.mxu0
        %v976 = vpop.f32.mrf.mxu0
        %v977 = vadd.f32 0.0, %v976
        %v978 = vpop.f32.mrf.mxu0
        %979 = vdwg.mxu0
        %980 = vmatprep.subr.bf16.mxu0 0
        %981 = vmatpush1.bf16.msra.mxu0 %v818
        %982 = vmatprep.subr.bf16.mxu0 0
        %983 = vmatpush1.bf16.msra.mxu0 %v817
        %984 = vmatprep.subr.bf16.mxu0 0
        %985 = vmatpush1.bf16.msra.mxu0 %v816
        %986 = vmatprep.subr.bf16.mxu0 0
        %987 = vmatpush1.bf16.msra.mxu0 %v815
        %988 = vmatprep.subr.bf16.mxu0 0
        %989 = vmatpush1.bf16.msra.mxu0 %v814
        %990 = vmatprep.subr.bf16.mxu0 0
        %991 = vmatpush1.bf16.msra.mxu0 %v813
        %992 = vmatprep.subr.bf16.mxu0 0
        %993 = vmatpush1.bf16.msra.mxu0 %v812
        %994 = vmatprep.subr.bf16.mxu0 0
        %995 = vmatpush1.bf16.msra.mxu0 %v811
        %996 = vmatprep.subr.bf16.mxu0 0
        %997 = vmatpush2.bf16.msra.mxu0 %v826
        %998 = vmatprep.subr.bf16.mxu0 0
        %999 = vmatpush2.bf16.msra.mxu0 %v825
        %1000 = vmatprep.subr.bf16.mxu0 0
        %1001 = vmatpush2.bf16.msra.mxu0 %v824
        %1002 = vmatprep.subr.bf16.mxu0 0
        %1003 = vmatpush2.bf16.msra.mxu0 %v823
        %1004 = vmatprep.subr.bf16.mxu0 0
        %1005 = vmatpush2.bf16.msra.mxu0 %v822
        %1006 = vmatprep.subr.bf16.mxu0 0
        %1007 = vmatpush2.bf16.msra.mxu0 %v821
        %1008 = vmatprep.subr.bf16.mxu0 0
        %1009 = vmatpush2.bf16.msra.mxu0 %v820
        %1010 = vmatprep.subr.bf16.mxu0 0
        %1011 = vmatpush2.bf16.msra.mxu0 %v819
        %1012 = vmatprep.mubr.bf16.mxu0 %v458
        %1013 = vmatmul.mubr.bf16.gmra.mxu0 %v483
        %v1014 = vpop.f32.mrf.mxu0
        %v1015 = vadd.f32 %v974, %v1014
        %v1016 = vpop.f32.mrf.mxu0
        %v1017 = vpop.f32.mrf.mxu0
        %v1018 = vadd.f32 %v977, %v1017
        %v1019 = vpop.f32.mrf.mxu0
        %1020 = vdwg.mxu0
        %1021 = vmatprep.subr.bf16.mxu0 0
        %1022 = vmatpush1.bf16.msra.mxu0 %v834
        %1023 = vmatprep.subr.bf16.mxu0 0
        %1024 = vmatpush1.bf16.msra.mxu0 %v833
        %1025 = vmatprep.subr.bf16.mxu0 0
        %1026 = vmatpush1.bf16.msra.mxu0 %v832
        %1027 = vmatprep.subr.bf16.mxu0 0
        %1028 = vmatpush1.bf16.msra.mxu0 %v831
        %1029 = vmatprep.subr.bf16.mxu0 0
        %1030 = vmatpush1.bf16.msra.mxu0 %v830
        %1031 = vmatprep.subr.bf16.mxu0 0
        %1032 = vmatpush1.bf16.msra.mxu0 %v829
        %1033 = vmatprep.subr.bf16.mxu0 0
        %1034 = vmatpush1.bf16.msra.mxu0 %v828
        %1035 = vmatprep.subr.bf16.mxu0 0
        %1036 = vmatpush1.bf16.msra.mxu0 %v827
        %1037 = vmatprep.subr.bf16.mxu0 0
        %1038 = vmatpush2.bf16.msra.mxu0 %v842
        %1039 = vmatprep.subr.bf16.mxu0 0
        %1040 = vmatpush2.bf16.msra.mxu0 %v841
        %1041 = vmatprep.subr.bf16.mxu0 0
        %1042 = vmatpush2.bf16.msra.mxu0 %v840
        %1043 = vmatprep.subr.bf16.mxu0 0
        %1044 = vmatpush2.bf16.msra.mxu0 %v839
        %1045 = vmatprep.subr.bf16.mxu0 0
        %1046 = vmatpush2.bf16.msra.mxu0 %v838
        %1047 = vmatprep.subr.bf16.mxu0 0
        %1048 = vmatpush2.bf16.msra.mxu0 %v837
        %1049 = vmatprep.subr.bf16.mxu0 0
        %1050 = vmatpush2.bf16.msra.mxu0 %v836
        %1051 = vmatprep.subr.bf16.mxu0 0
        %1052 = vmatpush2.bf16.msra.mxu0 %v835
        %1053 = vmatprep.mubr.bf16.mxu0 %v494
        %1054 = vmatmul.mubr.bf16.gmra.mxu0 %v491
        %v1055 = vpop.f32.mrf.mxu0
        %v1056 = vadd.f32 %v1015, %v1055
        %v1057 = vpop.f32.mrf.mxu0
        %v1058 = vpop.f32.mrf.mxu0
        %v1059 = vadd.f32 %v1018, %v1058
        %v1060 = vpop.f32.mrf.mxu0
        %1061 = vdwg.mxu0
        %1062 = vmatprep.subr.bf16.mxu0 0
        %1063 = vmatpush1.bf16.msra.mxu0 %v850
        %1064 = vmatprep.subr.bf16.mxu0 0
        %1065 = vmatpush1.bf16.msra.mxu0 %v849
        %1066 = vmatprep.subr.bf16.mxu0 0
        %1067 = vmatpush1.bf16.msra.mxu0 %v848
        %1068 = vmatprep.subr.bf16.mxu0 0
        %1069 = vmatpush1.bf16.msra.mxu0 %v847
        %1070 = vmatprep.subr.bf16.mxu0 0
        %1071 = vmatpush1.bf16.msra.mxu0 %v846
        %1072 = vmatprep.subr.bf16.mxu0 0
        %1073 = vmatpush1.bf16.msra.mxu0 %v845
        %1074 = vmatprep.subr.bf16.mxu0 0
        %1075 = vmatpush1.bf16.msra.mxu0 %v844
        %1076 = vmatprep.subr.bf16.mxu0 0
        %1077 = vmatpush1.bf16.msra.mxu0 %v843
        %1078 = vmatprep.subr.bf16.mxu0 0
        %1079 = vmatpush2.bf16.msra.mxu0 %v858
        %1080 = vmatprep.subr.bf16.mxu0 0
        %1081 = vmatpush2.bf16.msra.mxu0 %v857
        %1082 = vmatprep.subr.bf16.mxu0 0
        %1083 = vmatpush2.bf16.msra.mxu0 %v856
        %1084 = vmatprep.subr.bf16.mxu0 0
        %1085 = vmatpush2.bf16.msra.mxu0 %v855
        %1086 = vmatprep.subr.bf16.mxu0 0
        %1087 = vmatpush2.bf16.msra.mxu0 %v854
        %1088 = vmatprep.subr.bf16.mxu0 0
        %1089 = vmatpush2.bf16.msra.mxu0 %v853
        %1090 = vmatprep.subr.bf16.mxu0 0
        %1091 = vmatpush2.bf16.msra.mxu0 %v852
        %1092 = vmatprep.subr.bf16.mxu0 0
        %1093 = vmatpush2.bf16.msra.mxu0 %v851
        %1094 = vmatprep.mubr.bf16.mxu0 %v502
        %1095 = vmatmul.mubr.bf16.gmra.mxu0 %v473
        %v1096 = vpop.f32.mrf.mxu0
        %v1097 = vadd.f32 %v1056, %v1096
        %v1098 = vpop.f32.mrf.mxu0
        %v1099 = vpop.f32.mrf.mxu0
        %v1100 = vadd.f32 %v1059, %v1099
        %v1101 = vpop.f32.mrf.mxu0
        %1102 = vdwg.mxu0
        %1103 = vmatprep.subr.bf16.mxu0 0
        %1104 = vmatpush1.bf16.msra.mxu0 %v866
        %1105 = vmatprep.subr.bf16.mxu0 0
        %1106 = vmatpush1.bf16.msra.mxu0 %v865
        %1107 = vmatprep.subr.bf16.mxu0 0
        %1108 = vmatpush1.bf16.msra.mxu0 %v864
        %1109 = vmatprep.subr.bf16.mxu0 0
        %1110 = vmatpush1.bf16.msra.mxu0 %v863
        %1111 = vmatprep.subr.bf16.mxu0 0
        %1112 = vmatpush1.bf16.msra.mxu0 %v862
        %1113 = vmatprep.subr.bf16.mxu0 0
        %1114 = vmatpush1.bf16.msra.mxu0 %v861
        %1115 = vmatprep.subr.bf16.mxu0 0
        %1116 = vmatpush1.bf16.msra.mxu0 %v860
        %1117 = vmatprep.subr.bf16.mxu0 0
        %1118 = vmatpush1.bf16.msra.mxu0 %v859
        %1119 = vmatprep.subr.bf16.mxu0 0
        %1120 = vmatpush2.bf16.msra.mxu0 0
        %1121 = vmatprep.subr.bf16.mxu0 0
        %1122 = vmatpush2.bf16.msra.mxu0 0
        %1123 = vmatprep.subr.bf16.mxu0 0
        %1124 = vmatpush2.bf16.msra.mxu0 0
        %1125 = vmatprep.subr.bf16.mxu0 0
        %1126 = vmatpush2.bf16.msra.mxu0 0
        %1127 = vmatprep.subr.bf16.mxu0 0
        %1128 = vmatpush2.bf16.msra.mxu0 0
        %1129 = vmatprep.subr.bf16.mxu0 0
        %1130 = vmatpush2.bf16.msra.mxu0 0
        %1131 = vmatprep.subr.bf16.mxu0 0
        %1132 = vmatpush2.bf16.msra.mxu0 0
        %1133 = vmatprep.subr.bf16.mxu0 0
        %1134 = vmatpush2.bf16.msra.mxu0 0
        %1135 = vmatprep.mubr.bf16.mxu0 0
        %1136 = vmatmul.mubr.bf16.gmra.mxu0 %v505
        %v1137 = vpop.f32.mrf.mxu0
        %v1138 = vadd.f32 %v1097, %v1137
        %v1139 = vpop.f32.mrf.mxu0
        %v1140 = vpop.f32.mrf.mxu0
        %v1141 = vadd.f32 %v1100, %v1140
        %v1142 = vpop.f32.mrf.mxu0
        %1143 = vdwg.mxu0
        %s1144 = smul.u32 %s408, 16
        %s1145 = scalar_lea.vmem %s255, %s1144
        %1146 = vst [vmem:[%s1145] sm:$0xff] %v1138
        %1147 = vst [vmem:[%s1145 + $0x8] sm:$0xf] %v1141
        %vm1148 = vcmask 1043456
        %v1149 = vsel %vm1148, %v1141, 0.0
        %v1150 = vadd.f32 %v1138, %v1149
        %v1151 = vrot.slane %v1150, 4
        %v1152 = vadd.f32 %v1150, %v1151
        %v1153 = vrot.slane %v1152, 2
        %v1154 = vadd.f32 %v1152, %v1153
        %v1155 = vrot.slane %v1154, 1
        %v1156 = vadd.f32 %v1154, %v1155
        %v1157 = vadd.f32 %v413, %v1156
        %v1158 = vmul.f32 %v1138, %v1138
        %v1159 = vmul.f32 %v1141, %v1141
        %v1160 = vsel %vm1148, %v1159, 0.0
        %v1161 = vadd.f32 %v1158, %v1160
        %v1162 = vrot.slane %v1161, 4
        %v1163 = vadd.f32 %v1161, %v1162
        %v1164 = vrot.slane %v1163, 2
        %v1165 = vadd.f32 %v1163, %v1164
        %v1166 = vrot.slane %v1165, 1
        %v1167 = vadd.f32 %v1165, %v1166
        %v1168 = vadd.f32 %v414, %v1167
      $region41: #{down_conv_forward.4} parent=35 // loop_footer
        %s412 = sadd.s32 1, %s408
      $region42: #{down_conv_forward.4} parent=35 // loop_footer_branch
        %407 = sbr.rel target = $region38
      $region43: #{down_conv_forward.4} parent=35 // loop_exit
        _
      %vm1169 = vcmask 1040384
      %v1170 = vsel %vm1169, %v413, %v414
      %p1171 = scmp.eq.s32.totalorder %s22, 0
      // Predicated region
      $region44: #{down_conv_forward.4} parent=35 // pred_check
        %p1172 = pneg %p1171
      $region45: #{down_conv_forward.4} parent=35 // pred_check_branch
        %1174 = sbr.rel (%p1172) target = $region47
      $region46: #{down_conv_forward.4} parent=35 // pred_region
        %1175 = vst [vmem:[%s260] sm:$0x3] %v1170
      $region47: #{down_conv_forward.4} parent=35 // pred_fallthru
        _
      %p1176 = scmp.gt.s32.totalorder %s22, 0
      // Predicated region
      $region48: #{down_conv_forward.4} parent=35 // pred_check
        %p1177 = pneg %p1176
      $region49: #{down_conv_forward.4} parent=35 // pred_check_branch
        %1179 = sbr.rel (%p1177) target = $region51
      $region50: #{down_conv_forward.4} parent=35 // pred_region
        %v1180 = vld [vmem:[%s260] sm:$0x3]
        %v1181 = vadd.f32 %v1180, %v1170
        %1182 = vst [vmem:[%s260] sm:$0x3] %v1181
      $region51: #{down_conv_forward.4} parent=35 // pred_fallthru
        _
      %s1183 = smul.u32 12, %s22
      %p1184 = scmp.lt.s32.totalorder %s21, 1
      %s1185 = scalar_select %p1184, %s21, 1
      %p1186 = scmp.lt.s32.totalorder %s1183, 11
      %s1187 = scalar_select %p1186, %s1183, 11
      %s1188 = smul.addr %s1187, 2
      %s1189 = smul.addr %s1185, 24
      %s1190 = sadd.s32 %s1188, %s1189
      %s1191 = smul.addr %s1190, 8
      %s1192 = scalar_lea.vmem %s4, %s1191
      %p1193 = scmp.lt.s32.totalorder %s21, 1
      %s1194 = scalar_select %p1193, %s21, 1
      %s1195 = smul.addr %s1194, 2
      %s1196 = scalar_lea.vmem %s5, %s1195
      // Predicated region
      $region52: #{down_conv_forward.4} parent=35 // pred_check
        %p1197 = pneg %p138
      $region53: #{down_conv_forward.4} parent=35 // pred_check_branch
        %1199 = sbr.rel (%p1197) target = $region55
      $region54: #{down_conv_forward.4} parent=35 // pred_region
        %s1200 = smul.u32 12, %s22
      $region55: #{down_conv_forward.4} parent=35 // pred_fallthru
        _
      // Predicated region
      $region56: #{down_conv_forward.4} parent=35 // pred_check
        %p1201 = pneg %p164
      $region57: #{down_conv_forward.4} parent=35 // pred_check_branch
        %1203 = sbr.rel (%p1201) target = $region59
      $region58: #{down_conv_forward.4} parent=35 // pred_region
        _
      $region59: #{down_conv_forward.4} parent=35 // pred_fallthru
        _
    $region36: #{down_conv_forward.4} parent=5 // pred_fallthru
      _
    %p1204 = scmp.le.s32.totalorder 2, %s12
    // Predicated region
    $region60: #{down_conv_forward.4} parent=5 // pred_check
      %p1205 = pneg %p1204
    $region61: #{down_conv_forward.4} parent=5 // pred_check_branch
      %1207 = sbr.rel (%p1205) target = $region63
    $region62: #{down_conv_forward.4} parent=5 // pred_region
      %s1208 = ssub.s32 %s12, 2
      // Predicated region
      $region64: #{down_conv_forward.4} parent=62 // pred_check
        %p1209 = pneg %p144
      $region65: #{down_conv_forward.4} parent=62 // pred_check_branch
        %1211 = sbr.rel (%p1209) target = $region67
      $region66: #{down_conv_forward.4} parent=62 // pred_region
        %s1212 = smul.u32 12, %s24
        %p1213 = scmp.lt.s32.totalorder %s23, 1
        %s1214 = scalar_select %p1213, %s23, 1
        %p1215 = scmp.lt.s32.totalorder %s1212, 11
        %s1216 = scalar_select %p1215, %s1212, 11
        %s1217 = smul.addr %s1216, 2
        %s1218 = smul.addr %s1214, 24
        %s1219 = sadd.s32 %s1217, %s1218
        %s1220 = smul.addr %s1219, 8
        %s1221 = scalar_lea.vmem %s4, %s1220
      $region67: #{down_conv_forward.4} parent=62 // pred_fallthru
        _
      // Predicated region
      $region68: #{down_conv_forward.4} parent=62 // pred_check
        %p1222 = pneg %p170
      $region69: #{down_conv_forward.4} parent=62 // pred_check_branch
        %1224 = sbr.rel (%p1222) target = $region71
      $region70: #{down_conv_forward.4} parent=62 // pred_region
        %p1225 = scmp.lt.s32.totalorder %s23, 1
        %s1226 = scalar_select %p1225, %s23, 1
        %s1227 = smul.addr %s1226, 2
        %s1228 = scalar_lea.vmem %s5, %s1227
      $region71: #{down_conv_forward.4} parent=62 // pred_fallthru
        _
    $region63: #{down_conv_forward.4} parent=5 // pred_fallthru
      _
  $region6: #{down_conv_forward.4} parent=0 // loop_footer
    %s16 = sadd.s32 1, %s12
  $region7: #{down_conv_forward.4} parent=0 // loop_footer_branch
    %11 = sbr.rel target = $region3
  $region8: #{down_conv_forward.4} parent=0 // loop_exit
    _

// kernel: down_conv_forward.5
$region0: #{down_conv_forward.5}
  #allocation0 [shape = 'u32[]', space=smem, size = 0x4, offset = 0x4, fixed_abs, tag = 'smem constant byte address 0x4 - core index']
  #allocation1 [shape = 'u32[144,128]{1,0:T(1,128)}', space=vmem, size = 0x12000, scoped, tag = 'internal scratch']
  %s0 = inlined_call_operand.vmem [shape: f32[2,12,6,2,128], index: 0, kind: input, shape index: {}]
  %s1 = inlined_call_operand.vmem [shape: f32[1,128], index: 1, kind: input, shape index: {}]
  %s2 = inlined_call_operand.vmem [shape: f32[1,128], index: 2, kind: input, shape index: {}]
  %s3 = inlined_call_operand.vmem [shape: f32[2,12,6,2,128], index: 3, kind: output, shape index: {0}]
  %s4 = inlined_call_operand.vmem [shape: f32[2,6,6,128], index: 4, kind: output, shape index: {1}]
  %5 = xla_tuple %s3, %s4
  %s6 = sld [smem:[#allocation0]]
  $region53: #{down_conv_forward.5} parent=0
    _
  %s8 = ssub.s32 1, %s6
  %s9 = scalar_select 0, %s8, %s6
  loop: start=0, step=1, limit=4
  $region2: #{down_conv_forward.5} parent=0 // loop_pre_header
    _
  $region3: #{down_conv_forward.5} parent=0 // loop_header
    %s11 = sphi 0, %s15
    %p12 = scmp.ge.s32.totalorder %s11, 4
    %s18 = sphi 0, %s30
    %s19 = sphi 0, %s26
    %s20 = sphi 0, %s18
    %s21 = sphi 0, %s19
    %s22 = sphi 0, %s20
    %s23 = sphi 0, %s21
    %s35 = sphi 0, %s37
    %s38 = sphi 0, %s35
    %s39 = sphi 0, %s38
    %s55 = sphi 0, %s39
    %s59 = sphi 0, %s59
    %s61 = sphi 0, %s59
    %s62 = sphi 0, %s61
    %s76 = sphi 0, %s62
    %s80 = sphi 0, %s80
    %s82 = sphi 0, %s80
    %s83 = sphi 0, %s82
    %s97 = sphi 0, %s83
    %s105 = sphi 0, %s107
    %s108 = sphi 0, %s105
    %s109 = sphi 0, %s108
    %s125 = sphi 0, %s109
    %s133 = sphi 0, %s135
    %s136 = sphi 0, %s133
    %s137 = sphi 0, %s136
    %s153 = sphi 0, %s137
  $region4: #{down_conv_forward.5} parent=0 // loop_header_branch
    %14 = sbr.rel (%p12) target = $region8
  $region5: #{down_conv_forward.5} parent=0 // loop_body
    %s16 = ssub.s32 %s11, 1
    %s17 = ssub.s32 %s11, 2
    %s24 = sadd.s32 1, %s19
    %p25 = scmp.ge.s32.totalorder %s24, 1
    %s26 = scalar_select %p25, 0, %s24
    %s27 = sadd.s32 1, %s18
    %s28 = scalar_select %p25, %s27, %s18
    %p29 = scmp.ge.s32.totalorder %s28, 2
    %s30 = scalar_select %p29, 0, %s28
    %s31 = ssub.s32 %s18, %s30
    %s32 = ssub.s32 %s19, %s26
    %s33 = sor.u32 %s31, %s32
    %p34 = scmp.eq.s32.totalorder %s33, 0
    %s36 = sadd.s32 %s35, 1
    %s37 = scalar_select %p34, %s35, %s36
    %p40 = pneg %p34
    %p41 = scmp.eq.s32.totalorder %s11, 1
    %p42 = por %p40, %p41
    %p43 = scmp.ne.s32.totalorder %s35, %s38
    %p44 = scmp.eq.s32.totalorder %s11, 0
    %p45 = por %p43, %p44
    %p46 = scmp.ne.s32.totalorder %s35, %s38
    %p47 = scmp.eq.s32.totalorder %s16, 1
    %p48 = por %p46, %p47
    %p49 = scmp.ne.s32.totalorder %s38, %s39
    %p50 = scmp.eq.s32.totalorder %s16, 0
    %p51 = por %p49, %p50
    %p52 = scmp.ne.s32.totalorder %s38, %s39
    %p53 = scmp.eq.s32.totalorder %s17, 1
    %p54 = por %p52, %p53
    %p56 = scmp.ne.s32.totalorder %s39, %s55
    %p57 = scmp.eq.s32.totalorder %s17, 0
    %p58 = por %p56, %p57
    %s60 = sadd.s32 %s59, 1
    %p63 = scmp.eq.s32.totalorder %s11, 1
    %p64 = scmp.ne.s32.totalorder %s59, %s61
    %p65 = scmp.eq.s32.totalorder %s11, 0
    %p66 = por %p64, %p65
    %p67 = scmp.ne.s32.totalorder %s59, %s61
    %p68 = scmp.eq.s32.totalorder %s16, 1
    %p69 = por %p67, %p68
    %p70 = scmp.ne.s32.totalorder %s61, %s62
    %p71 = scmp.eq.s32.totalorder %s16, 0
    %p72 = por %p70, %p71
    %p73 = scmp.ne.s32.totalorder %s61, %s62
    %p74 = scmp.eq.s32.totalorder %s17, 1
    %p75 = por %p73, %p74
    %p77 = scmp.ne.s32.totalorder %s62, %s76
    %p78 = scmp.eq.s32.totalorder %s17, 0
    %p79 = por %p77, %p78
    %s81 = sadd.s32 %s80, 1
    %p84 = scmp.eq.s32.totalorder %s11, 1
    %p85 = scmp.ne.s32.totalorder %s80, %s82
    %p86 = scmp.eq.s32.totalorder %s11, 0
    %p87 = por %p85, %p86
    %p88 = scmp.ne.s32.totalorder %s80, %s82
    %p89 = scmp.eq.s32.totalorder %s16, 1
    %p90 = por %p88, %p89
    %p91 = scmp.ne.s32.totalorder %s82, %s83
    %p92 = scmp.eq.s32.totalorder %s16, 0
    %p93 = por %p91, %p92
    %p94 = scmp.ne.s32.totalorder %s82, %s83
    %p95 = scmp.eq.s32.totalorder %s17, 1
    %p96 = por %p94, %p95
    %p98 = scmp.ne.s32.totalorder %s83, %s97
    %p99 = scmp.eq.s32.totalorder %s17, 0
    %p100 = por %p98, %p99
    %s101 = ssub.s32 %s18, %s30
    %s102 = ssub.s32 %s19, %s26
    %s103 = sor.u32 %s101, %s102
    %p104 = scmp.eq.s32.totalorder %s103, 0
    %s106 = sadd.s32 %s105, 1
    %s107 = scalar_select %p104, %s105, %s106
    %p110 = pneg %p104
    %p111 = scmp.eq.s32.totalorder %s11, 1
    %p112 = por %p110, %p111
    %p113 = scmp.ne.s32.totalorder %s105, %s108
    %p114 = scmp.eq.s32.totalorder %s11, 0
    %p115 = por %p113, %p114
    %p116 = scmp.ne.s32.totalorder %s105, %s108
    %p117 = scmp.eq.s32.totalorder %s16, 1
    %p118 = por %p116, %p117
    %p119 = scmp.ne.s32.totalorder %s108, %s109
    %p120 = scmp.eq.s32.totalorder %s16, 0
    %p121 = por %p119, %p120
    %p122 = scmp.ne.s32.totalorder %s108, %s109
    %p123 = scmp.eq.s32.totalorder %s17, 1
    %p124 = por %p122, %p123
    %p126 = scmp.ne.s32.totalorder %s109, %s125
    %p127 = scmp.eq.s32.totalorder %s17, 0
    %p128 = por %p126, %p127
    %s129 = ssub.s32 %s18, %s30
    %s130 = ssub.s32 %s19, %s26
    %s131 = sor.u32 %s129, %s130
    %p132 = scmp.eq.s32.totalorder %s131, 0
    %s134 = sadd.s32 %s133, 1
    %s135 = scalar_select %p132, %s133, %s134
    %p138 = pneg %p132
    %p139 = scmp.eq.s32.totalorder %s11, 1
    %p140 = por %p138, %p139
    %p141 = scmp.ne.s32.totalorder %s133, %s136
    %p142 = scmp.eq.s32.totalorder %s11, 0
    %p143 = por %p141, %p142
    %p144 = scmp.ne.s32.totalorder %s133, %s136
    %p145 = scmp.eq.s32.totalorder %s16, 1
    %p146 = por %p144, %p145
    %p147 = scmp.ne.s32.totalorder %s136, %s137
    %p148 = scmp.eq.s32.totalorder %s16, 0
    %p149 = por %p147, %p148
    %p150 = scmp.ne.s32.totalorder %s136, %s137
    %p151 = scmp.eq.s32.totalorder %s17, 1
    %p152 = por %p150, %p151
    %p154 = scmp.ne.s32.totalorder %s137, %s153
    %p155 = scmp.eq.s32.totalorder %s17, 0
    %p156 = por %p154, %p155
    %p157 = scmp.le.s32.totalorder 1, %s11
    %p158 = scmp.lt.s32.totalorder %s11, 3
    %p159 = pnand %p157, %p158
    %p160 = pneg %p159
    // Predicated region
    $region9: #{down_conv_forward.5} parent=5 // pred_check
      _
    $region10: #{down_conv_forward.5} parent=5 // pred_check_branch
      %162 = sbr.rel (%p159) target = $region12
    $region11: #{down_conv_forward.5} parent=5 // pred_region
      %s163 = ssub.s32 %s11, 1
      // Predicated region
      $region13: #{down_conv_forward.5} parent=11 // pred_check
        %p164 = pneg %p72
      $region14: #{down_conv_forward.5} parent=11 // pred_check_branch
        %166 = sbr.rel (%p164) target = $region16
      $region15: #{down_conv_forward.5} parent=11 // pred_region
        _
      $region16: #{down_conv_forward.5} parent=11 // pred_fallthru
        _
      // Predicated region
      $region17: #{down_conv_forward.5} parent=11 // pred_check
        %p167 = pneg %p93
      $region18: #{down_conv_forward.5} parent=11 // pred_check_branch
        %169 = sbr.rel (%p167) target = $region20
      $region19: #{down_conv_forward.5} parent=11 // pred_region
        _
      $region20: #{down_conv_forward.5} parent=11 // pred_fallthru
        _
    $region12: #{down_conv_forward.5} parent=5 // pred_fallthru
      _
    %p170 = scmp.lt.s32.totalorder %s11, 2
    // Predicated region
    $region21: #{down_conv_forward.5} parent=5 // pred_check
      %p171 = pneg %p170
    $region22: #{down_conv_forward.5} parent=5 // pred_check_branch
      %173 = sbr.rel (%p171) target = $region24
    $region23: #{down_conv_forward.5} parent=5 // pred_region
      // Predicated region
      $region25: #{down_conv_forward.5} parent=23 // pred_check
        %p174 = pneg %p45
      $region26: #{down_conv_forward.5} parent=23 // pred_check_branch
        %176 = sbr.rel (%p174) target = $region28
      $region27: #{down_conv_forward.5} parent=23 // pred_region
        %s177 = smul.u32 12, %s19
        %p178 = scmp.lt.s32.totalorder %s18, 1
        %s179 = scalar_select %p178, %s18, 1
        %p180 = scmp.lt.s32.totalorder %s177, 11
        %s181 = scalar_select %p180, %s177, 11
        %s182 = smul.addr %s181, 6
        %s183 = smul.addr %s179, 72
        %s184 = sadd.s32 %s182, %s183
        %s185 = smul.addr %s184, 2
        %s186 = scalar_lea.vmem %s0, %s185
        %s187 = smul.u32 12, %s19
      $region28: #{down_conv_forward.5} parent=23 // pred_fallthru
        _
    $region24: #{down_conv_forward.5} parent=5 // pred_fallthru
      _
    %p188 = scmp.le.s32.totalorder 1, %s11
    %p189 = scmp.lt.s32.totalorder %s11, 3
    %p190 = pnand %p188, %p189
    %p191 = pneg %p190
    // Predicated region
    $region29: #{down_conv_forward.5} parent=5 // pred_check
      _
    $region30: #{down_conv_forward.5} parent=5 // pred_check_branch
      %193 = sbr.rel (%p190) target = $region32
    $region31: #{down_conv_forward.5} parent=5 // pred_region
      %s194 = ssub.s32 %s11, 1
      %s195 = smul.u32 12, %s21
      %p196 = scmp.lt.s32.totalorder %s20, 1
      %s197 = scalar_select %p196, %s20, 1
      %p198 = scmp.lt.s32.totalorder %s195, 11
      %s199 = scalar_select %p198, %s195, 11
      %s200 = smul.addr %s199, 6
      %s201 = smul.addr %s197, 72
      %s202 = sadd.s32 %s200, %s201
      %s203 = smul.addr %s202, 2
      %s204 = scalar_lea.vmem %s0, %s203
      %p205 = pneg %p51
      %p206 = pneg %p48
      %p207 = pneg %p72
      %p208 = pneg %p69
      %p209 = pneg %p93
      %p210 = pneg %p90
      %p211 = pneg %p121
      %p212 = pneg %p118
      %s213 = smul.u32 12, %s21
      %p214 = scmp.lt.s32.totalorder %s20, 1
      %s215 = scalar_select %p214, %s20, 1
      %p216 = scmp.lt.s32.totalorder %s213, 11
      %s217 = scalar_select %p216, %s213, 11
      %s218 = smul.addr %s217, 6
      %s219 = smul.addr %s215, 72
      %s220 = sadd.s32 %s218, %s219
      %s221 = smul.addr %s220, 2
      %s222 = scalar_lea.vmem %s3, %s221
      %p223 = pneg %p149
      %p224 = pneg %p146
      %s225 = smul.u32 6, %s21
      %p226 = scmp.lt.s32.totalorder %s20, 1
      %s227 = scalar_select %p226, %s20, 1
      %p228 = scmp.lt.s32.totalorder %s225, 5
      %s229 = scalar_select %p228, %s225, 5
      %s230 = smul.addr %s227, 6
      %s231 = sadd.s32 %s229, %s230
      %s232 = smul.addr %s231, 8
      %s233 = scalar_lea.vmem %s4, %s232
      %s234 = smul.u32 12, %s21
      %p235 = scmp.lt.s32.totalorder %s20, 1
      %s236 = scalar_select %p235, %s20, 1
      %p237 = scmp.lt.s32.totalorder %s234, 11
      %s238 = scalar_select %p237, %s234, 11
      %s239 = smul.addr %s238, 6
      %s240 = smul.addr %s236, 72
      %s241 = sadd.s32 %s239, %s240
      %s242 = smul.addr %s241, 2
      %s243 = scalar_lea.vmem %s0, %s242
      %s244 = smul.u32 12, %s21
      %s245 = smul.u32 12, %s21
      %p246 = scmp.lt.s32.totalorder %s20, 1
      %s247 = scalar_select %p246, %s20, 1
      %p248 = scmp.lt.s32.totalorder %s245, 11
      %s249 = scalar_select %p248, %s245, 11
      %s250 = smul.addr %s249, 6
      %s251 = smul.addr %s247, 72
      %s252 = sadd.s32 %s250, %s251
      %s253 = smul.addr %s252, 2
      %s254 = scalar_lea.vmem %s3, %s253
      %s255 = smul.u32 12, %s21
      %s256 = smul.u32 6, %s21
      %p257 = scmp.lt.s32.totalorder %s20, 1
      %s258 = scalar_select %p257, %s20, 1
      %p259 = scmp.lt.s32.totalorder %s256, 5
      %s260 = scalar_select %p259, %s256, 5
      %s261 = smul.addr %s258, 6
      %s262 = sadd.s32 %s260, %s261
      %s263 = smul.addr %s262, 8
      %s264 = scalar_lea.vmem %s4, %s263
      %s265 = smul.u32 6, %s21
      %v266 = vld [vmem:[%s243] sm:$0x3]
      %v267 = vld [vmem:[%s243 + $0x2] sm:$0x3]
      %v268 = vld [vmem:[%s243 + $0x4] sm:$0x3]
      %v269 = vld [vmem:[%s243 + $0x6] sm:$0x3]
      %v270 = vld [vmem:[%s243 + $0x8] sm:$0x3]
      %v271 = vld [vmem:[%s243 + $0xa] sm:$0x3]
      %v272 = vld [vmem:[%s243 + $0xc] sm:$0x3]
      %v273 = vld [vmem:[%s243 + $0xe] sm:$0x3]
      %v274 = vld [vmem:[%s243 + $0x10] sm:$0x3]
      %v275 = vld [vmem:[%s243 + $0x12] sm:$0x3]
      %v276 = vld [vmem:[%s243 + $0x14] sm:$0x3]
      %v277 = vld [vmem:[%s243 + $0x16] sm:$0x3]
      %v278 = vld [vmem:[%s243 + $0x18] sm:$0x3]
      %v279 = vld [vmem:[%s243 + $0x1a] sm:$0x3]
      %v280 = vld [vmem:[%s243 + $0x1c] sm:$0x3]
      %v281 = vld [vmem:[%s243 + $0x1e] sm:$0x3]
      %v282 = vld [vmem:[%s243 + $0x20] sm:$0x3]
      %v283 = vld [vmem:[%s243 + $0x22] sm:$0x3]
      %v284 = vld [vmem:[%s243 + $0x24] sm:$0x3]
      %v285 = vld [vmem:[%s243 + $0x26] sm:$0x3]
      %v286 = vld [vmem:[%s243 + $0x28] sm:$0x3]
      %v287 = vld [vmem:[%s243 + $0x2a] sm:$0x3]
      %v288 = vld [vmem:[%s243 + $0x2c] sm:$0x3]
      %v289 = vld [vmem:[%s243 + $0x2e] sm:$0x3]
      %v290 = vld [vmem:[%s243 + $0x30] sm:$0x3]
      %v291 = vld [vmem:[%s243 + $0x32] sm:$0x3]
      %v292 = vld [vmem:[%s243 + $0x34] sm:$0x3]
      %v293 = vld [vmem:[%s243 + $0x36] sm:$0x3]
      %v294 = vld [vmem:[%s243 + $0x38] sm:$0x3]
      %v295 = vld [vmem:[%s243 + $0x3a] sm:$0x3]
      %v296 = vld [vmem:[%s243 + $0x3c] sm:$0x3]
      %v297 = vld [vmem:[%s243 + $0x3e] sm:$0x3]
      %v298 = vld [vmem:[%s243 + $0x40] sm:$0x3]
      %v299 = vld [vmem:[%s243 + $0x42] sm:$0x3]
      %v300 = vld [vmem:[%s243 + $0x44] sm:$0x3]
      %v301 = vld [vmem:[%s243 + $0x46] sm:$0x3]
      %v302 = vld [vmem:[%s243 + $0x48] sm:$0x3]
      %v303 = vld [vmem:[%s243 + $0x4a] sm:$0x3]
      %v304 = vld [vmem:[%s243 + $0x4c] sm:$0x3]
      %v305 = vld [vmem:[%s243 + $0x4e] sm:$0x3]
      %v306 = vld [vmem:[%s243 + $0x50] sm:$0x3]
      %v307 = vld [vmem:[%s243 + $0x52] sm:$0x3]
      %v308 = vld [vmem:[%s243 + $0x54] sm:$0x3]
      %v309 = vld [vmem:[%s243 + $0x56] sm:$0x3]
      %v310 = vld [vmem:[%s243 + $0x58] sm:$0x3]
      %v311 = vld [vmem:[%s243 + $0x5a] sm:$0x3]
      %v312 = vld [vmem:[%s243 + $0x5c] sm:$0x3]
      %v313 = vld [vmem:[%s243 + $0x5e] sm:$0x3]
      %v314 = vld [vmem:[%s243 + $0x60] sm:$0x3]
      %v315 = vld [vmem:[%s243 + $0x62] sm:$0x3]
      %v316 = vld [vmem:[%s243 + $0x64] sm:$0x3]
      %v317 = vld [vmem:[%s243 + $0x66] sm:$0x3]
      %v318 = vld [vmem:[%s243 + $0x68] sm:$0x3]
      %v319 = vld [vmem:[%s243 + $0x6a] sm:$0x3]
      %v320 = vld [vmem:[%s243 + $0x6c] sm:$0x3]
      %v321 = vld [vmem:[%s243 + $0x6e] sm:$0x3]
      %v322 = vld [vmem:[%s243 + $0x70] sm:$0x3]
      %v323 = vld [vmem:[%s243 + $0x72] sm:$0x3]
      %v324 = vld [vmem:[%s243 + $0x74] sm:$0x3]
      %v325 = vld [vmem:[%s243 + $0x76] sm:$0x3]
      %v326 = vld [vmem:[%s243 + $0x78] sm:$0x3]
      %v327 = vld [vmem:[%s243 + $0x7a] sm:$0x3]
      %v328 = vld [vmem:[%s243 + $0x7c] sm:$0x3]
      %v329 = vld [vmem:[%s243 + $0x7e] sm:$0x3]
      %v330 = vld [vmem:[%s243 + $0x80] sm:$0x3]
      %v331 = vld [vmem:[%s243 + $0x82] sm:$0x3]
      %v332 = vld [vmem:[%s243 + $0x84] sm:$0x3]
      %v333 = vld [vmem:[%s243 + $0x86] sm:$0x3]
      %v334 = vld [vmem:[%s243 + $0x88] sm:$0x3]
      %v335 = vld [vmem:[%s243 + $0x8a] sm:$0x3]
      %v336 = vld [vmem:[%s243 + $0x8c] sm:$0x3]
      %v337 = vld [vmem:[%s243 + $0x8e] sm:$0x3]
      %v338 = vld [vmem:[%s1] sm:$0x1]
      %v340 = vlaneseq
      %v341 = vshrl.u32 %v340, 7
      %v342 = vsub.s32 0, %v341
      %v343 = vrot.slane %v338, %v342
      %v345 = vmul.f32 %v266, %v343
      %v346 = vmul.f32 %v267, %v343
      %v347 = vmul.f32 %v268, %v343
      %v348 = vmul.f32 %v269, %v343
      %v349 = vmul.f32 %v270, %v343
      %v350 = vmul.f32 %v271, %v343
      %v351 = vmul.f32 %v272, %v343
      %v352 = vmul.f32 %v273, %v343
      %v353 = vmul.f32 %v274, %v343
      %v354 = vmul.f32 %v275, %v343
      %v355 = vmul.f32 %v276, %v343
      %v356 = vmul.f32 %v277, %v343
      %v357 = vmul.f32 %v278, %v343
      %v358 = vmul.f32 %v279, %v343
      %v359 = vmul.f32 %v280, %v343
      %v360 = vmul.f32 %v281, %v343
      %v361 = vmul.f32 %v282, %v343
      %v362 = vmul.f32 %v283, %v343
      %v363 = vmul.f32 %v284, %v343
      %v364 = vmul.f32 %v285, %v343
      %v365 = vmul.f32 %v286, %v343
      %v366 = vmul.f32 %v287, %v343
      %v367 = vmul.f32 %v288, %v343
      %v368 = vmul.f32 %v289, %v343
      %v369 = vmul.f32 %v290, %v343
      %v370 = vmul.f32 %v291, %v343
      %v371 = vmul.f32 %v292, %v343
      %v372 = vmul.f32 %v293, %v343
      %v373 = vmul.f32 %v294, %v343
      %v374 = vmul.f32 %v295, %v343
      %v375 = vmul.f32 %v296, %v343
      %v376 = vmul.f32 %v297, %v343
      %v377 = vmul.f32 %v298, %v343
      %v378 = vmul.f32 %v299, %v343
      %v379 = vmul.f32 %v300, %v343
      %v380 = vmul.f32 %v301, %v343
      %v381 = vmul.f32 %v302, %v343
      %v382 = vmul.f32 %v303, %v343
      %v383 = vmul.f32 %v304, %v343
      %v384 = vmul.f32 %v305, %v343
      %v385 = vmul.f32 %v306, %v343
      %v386 = vmul.f32 %v307, %v343
      %v387 = vmul.f32 %v308, %v343
      %v388 = vmul.f32 %v309, %v343
      %v389 = vmul.f32 %v310, %v343
      %v390 = vmul.f32 %v311, %v343
      %v391 = vmul.f32 %v312, %v343
      %v392 = vmul.f32 %v313, %v343
      %v393 = vmul.f32 %v314, %v343
      %v394 = vmul.f32 %v315, %v343
      %v395 = vmul.f32 %v316, %v343
      %v396 = vmul.f32 %v317, %v343
      %v397 = vmul.f32 %v318, %v343
      %v398 = vmul.f32 %v319, %v343
      %v399 = vmul.f32 %v320, %v343
      %v400 = vmul.f32 %v321, %v343
      %v401 = vmul.f32 %v322, %v343
      %v402 = vmul.f32 %v323, %v343
      %v403 = vmul.f32 %v324, %v343
      %v404 = vmul.f32 %v325, %v343
      %v405 = vmul.f32 %v326, %v343
      %v406 = vmul.f32 %v327, %v343
      %v407 = vmul.f32 %v328, %v343
      %v408 = vmul.f32 %v329, %v343
      %v409 = vmul.f32 %v330, %v343
      %v410 = vmul.f32 %v331, %v343
      %v411 = vmul.f32 %v332, %v343
      %v412 = vmul.f32 %v333, %v343
      %v413 = vmul.f32 %v334, %v343
      %v414 = vmul.f32 %v335, %v343
      %v415 = vmul.f32 %v336, %v343
      %v416 = vmul.f32 %v337, %v343
      %v417 = vld [vmem:[%s2] sm:$0x1]
      %v419 = vlaneseq
      %v420 = vshrl.u32 %v419, 7
      %v421 = vsub.s32 0, %v420
      %v422 = vrot.slane %v417, %v421
      %v424 = vadd.f32 %v345, %v422
      %v425 = vadd.f32 %v346, %v422
      %v426 = vadd.f32 %v347, %v422
      %v427 = vadd.f32 %v348, %v422
      %v428 = vadd.f32 %v349, %v422
      %v429 = vadd.f32 %v350, %v422
      %v430 = vadd.f32 %v351, %v422
      %v431 = vadd.f32 %v352, %v422
      %v432 = vadd.f32 %v353, %v422
      %v433 = vadd.f32 %v354, %v422
      %v434 = vadd.f32 %v355, %v422
      %v435 = vadd.f32 %v356, %v422
      %v436 = vadd.f32 %v357, %v422
      %v437 = vadd.f32 %v358, %v422
      %v438 = vadd.f32 %v359, %v422
      %v439 = vadd.f32 %v360, %v422
      %v440 = vadd.f32 %v361, %v422
      %v441 = vadd.f32 %v362, %v422
      %v442 = vadd.f32 %v363, %v422
      %v443 = vadd.f32 %v364, %v422
      %v444 = vadd.f32 %v365, %v422
      %v445 = vadd.f32 %v366, %v422
      %v446 = vadd.f32 %v367, %v422
      %v447 = vadd.f32 %v368, %v422
      %v448 = vadd.f32 %v369, %v422
      %v449 = vadd.f32 %v370, %v422
      %v450 = vadd.f32 %v371, %v422
      %v451 = vadd.f32 %v372, %v422
      %v452 = vadd.f32 %v373, %v422
      %v453 = vadd.f32 %v374, %v422
      %v454 = vadd.f32 %v375, %v422
      %v455 = vadd.f32 %v376, %v422
      %v456 = vadd.f32 %v377, %v422
      %v457 = vadd.f32 %v378, %v422
      %v458 = vadd.f32 %v379, %v422
      %v459 = vadd.f32 %v380, %v422
      %v460 = vadd.f32 %v381, %v422
      %v461 = vadd.f32 %v382, %v422
      %v462 = vadd.f32 %v383, %v422
      %v463 = vadd.f32 %v384, %v422
      %v464 = vadd.f32 %v385, %v422
      %v465 = vadd.f32 %v386, %v422
      %v466 = vadd.f32 %v387, %v422
      %v467 = vadd.f32 %v388, %v422
      %v468 = vadd.f32 %v389, %v422
      %v469 = vadd.f32 %v390, %v422
      %v470 = vadd.f32 %v391, %v422
      %v471 = vadd.f32 %v392, %v422
      %v472 = vadd.f32 %v393, %v422
      %v473 = vadd.f32 %v394, %v422
      %v474 = vadd.f32 %v395, %v422
      %v475 = vadd.f32 %v396, %v422
      %v476 = vadd.f32 %v397, %v422
      %v477 = vadd.f32 %v398, %v422
      %v478 = vadd.f32 %v399, %v422
      %v479 = vadd.f32 %v400, %v422
      %v480 = vadd.f32 %v401, %v422
      %v481 = vadd.f32 %v402, %v422
      %v482 = vadd.f32 %v403, %v422
      %v483 = vadd.f32 %v404, %v422
      %v484 = vadd.f32 %v405, %v422
      %v485 = vadd.f32 %v406, %v422
      %v486 = vadd.f32 %v407, %v422
      %v487 = vadd.f32 %v408, %v422
      %v488 = vadd.f32 %v409, %v422
      %v489 = vadd.f32 %v410, %v422
      %v490 = vadd.f32 %v411, %v422
      %v491 = vadd.f32 %v412, %v422
      %v492 = vadd.f32 %v413, %v422
      %v493 = vadd.f32 %v414, %v422
      %v494 = vadd.f32 %v415, %v422
      %v495 = vadd.f32 %v416, %v422
      %v496 = vmax.f32 %v424, 0.0
      %v497 = vmax.f32 %v425, 0.0
      %v498 = vmax.f32 %v426, 0.0
      %v499 = vmax.f32 %v427, 0.0
      %v500 = vmax.f32 %v428, 0.0
      %v501 = vmax.f32 %v429, 0.0
      %v502 = vmax.f32 %v430, 0.0
      %v503 = vmax.f32 %v431, 0.0
      %v504 = vmax.f32 %v432, 0.0
      %v505 = vmax.f32 %v433, 0.0
      %v506 = vmax.f32 %v434, 0.0
      %v507 = vmax.f32 %v435, 0.0
      %v508 = vmax.f32 %v436, 0.0
      %v509 = vmax.f32 %v437, 0.0
      %v510 = vmax.f32 %v438, 0.0
      %v511 = vmax.f32 %v439, 0.0
      %v512 = vmax.f32 %v440, 0.0
      %v513 = vmax.f32 %v441, 0.0
      %v514 = vmax.f32 %v442, 0.0
      %v515 = vmax.f32 %v443, 0.0
      %v516 = vmax.f32 %v444, 0.0
      %v517 = vmax.f32 %v445, 0.0
      %v518 = vmax.f32 %v446, 0.0
      %v519 = vmax.f32 %v447, 0.0
      %v520 = vmax.f32 %v448, 0.0
      %v521 = vmax.f32 %v449, 0.0
      %v522 = vmax.f32 %v450, 0.0
      %v523 = vmax.f32 %v451, 0.0
      %v524 = vmax.f32 %v452, 0.0
      %v525 = vmax.f32 %v453, 0.0
      %v526 = vmax.f32 %v454, 0.0
      %v527 = vmax.f32 %v455, 0.0
      %v528 = vmax.f32 %v456, 0.0
      %v529 = vmax.f32 %v457, 0.0
      %v530 = vmax.f32 %v458, 0.0
      %v531 = vmax.f32 %v459, 0.0
      %v532 = vmax.f32 %v460, 0.0
      %v533 = vmax.f32 %v461, 0.0
      %v534 = vmax.f32 %v462, 0.0
      %v535 = vmax.f32 %v463, 0.0
      %v536 = vmax.f32 %v464, 0.0
      %v537 = vmax.f32 %v465, 0.0
      %v538 = vmax.f32 %v466, 0.0
      %v539 = vmax.f32 %v467, 0.0
      %v540 = vmax.f32 %v468, 0.0
      %v541 = vmax.f32 %v469, 0.0
      %v542 = vmax.f32 %v470, 0.0
      %v543 = vmax.f32 %v471, 0.0
      %v544 = vmax.f32 %v472, 0.0
      %v545 = vmax.f32 %v473, 0.0
      %v546 = vmax.f32 %v474, 0.0
      %v547 = vmax.f32 %v475, 0.0
      %v548 = vmax.f32 %v476, 0.0
      %v549 = vmax.f32 %v477, 0.0
      %v550 = vmax.f32 %v478, 0.0
      %v551 = vmax.f32 %v479, 0.0
      %v552 = vmax.f32 %v480, 0.0
      %v553 = vmax.f32 %v481, 0.0
      %v554 = vmax.f32 %v482, 0.0
      %v555 = vmax.f32 %v483, 0.0
      %v556 = vmax.f32 %v484, 0.0
      %v557 = vmax.f32 %v485, 0.0
      %v558 = vmax.f32 %v486, 0.0
      %v559 = vmax.f32 %v487, 0.0
      %v560 = vmax.f32 %v488, 0.0
      %v561 = vmax.f32 %v489, 0.0
      %v562 = vmax.f32 %v490, 0.0
      %v563 = vmax.f32 %v491, 0.0
      %v564 = vmax.f32 %v492, 0.0
      %v565 = vmax.f32 %v493, 0.0
      %v566 = vmax.f32 %v494, 0.0
      %v567 = vmax.f32 %v495, 0.0
      %568 = vst [vmem:[%s254] sm:$0x3] %v496
      %569 = vst [vmem:[%s254 + $0x2] sm:$0x3] %v497
      %570 = vst [vmem:[%s254 + $0x4] sm:$0x3] %v498
      %571 = vst [vmem:[%s254 + $0x6] sm:$0x3] %v499
      %572 = vst [vmem:[%s254 + $0x8] sm:$0x3] %v500
      %573 = vst [vmem:[%s254 + $0xa] sm:$0x3] %v501
      %574 = vst [vmem:[%s254 + $0xc] sm:$0x3] %v502
      %575 = vst [vmem:[%s254 + $0xe] sm:$0x3] %v503
      %576 = vst [vmem:[%s254 + $0x10] sm:$0x3] %v504
      %577 = vst [vmem:[%s254 + $0x12] sm:$0x3] %v505
      %578 = vst [vmem:[%s254 + $0x14] sm:$0x3] %v506
      %579 = vst [vmem:[%s254 + $0x16] sm:$0x3] %v507
      %580 = vst [vmem:[%s254 + $0x18] sm:$0x3] %v508
      %581 = vst [vmem:[%s254 + $0x1a] sm:$0x3] %v509
      %582 = vst [vmem:[%s254 + $0x1c] sm:$0x3] %v510
      %583 = vst [vmem:[%s254 + $0x1e] sm:$0x3] %v511
      %584 = vst [vmem:[%s254 + $0x20] sm:$0x3] %v512
      %585 = vst [vmem:[%s254 + $0x22] sm:$0x3] %v513
      %586 = vst [vmem:[%s254 + $0x24] sm:$0x3] %v514
      %587 = vst [vmem:[%s254 + $0x26] sm:$0x3] %v515
      %588 = vst [vmem:[%s254 + $0x28] sm:$0x3] %v516
      %589 = vst [vmem:[%s254 + $0x2a] sm:$0x3] %v517
      %590 = vst [vmem:[%s254 + $0x2c] sm:$0x3] %v518
      %591 = vst [vmem:[%s254 + $0x2e] sm:$0x3] %v519
      %592 = vst [vmem:[%s254 + $0x30] sm:$0x3] %v520
      %593 = vst [vmem:[%s254 + $0x32] sm:$0x3] %v521
      %594 = vst [vmem:[%s254 + $0x34] sm:$0x3] %v522
      %595 = vst [vmem:[%s254 + $0x36] sm:$0x3] %v523
      %596 = vst [vmem:[%s254 + $0x38] sm:$0x3] %v524
      %597 = vst [vmem:[%s254 + $0x3a] sm:$0x3] %v525
      %598 = vst [vmem:[%s254 + $0x3c] sm:$0x3] %v526
      %599 = vst [vmem:[%s254 + $0x3e] sm:$0x3] %v527
      %600 = vst [vmem:[%s254 + $0x40] sm:$0x3] %v528
      %601 = vst [vmem:[%s254 + $0x42] sm:$0x3] %v529
      %602 = vst [vmem:[%s254 + $0x44] sm:$0x3] %v530
      %603 = vst [vmem:[%s254 + $0x46] sm:$0x3] %v531
      %604 = vst [vmem:[%s254 + $0x48] sm:$0x3] %v532
      %605 = vst [vmem:[%s254 + $0x4a] sm:$0x3] %v533
      %606 = vst [vmem:[%s254 + $0x4c] sm:$0x3] %v534
      %607 = vst [vmem:[%s254 + $0x4e] sm:$0x3] %v535
      %608 = vst [vmem:[%s254 + $0x50] sm:$0x3] %v536
      %609 = vst [vmem:[%s254 + $0x52] sm:$0x3] %v537
      %610 = vst [vmem:[%s254 + $0x54] sm:$0x3] %v538
      %611 = vst [vmem:[%s254 + $0x56] sm:$0x3] %v539
      %612 = vst [vmem:[%s254 + $0x58] sm:$0x3] %v540
      %613 = vst [vmem:[%s254 + $0x5a] sm:$0x3] %v541
      %614 = vst [vmem:[%s254 + $0x5c] sm:$0x3] %v542
      %615 = vst [vmem:[%s254 + $0x5e] sm:$0x3] %v543
      %616 = vst [vmem:[%s254 + $0x60] sm:$0x3] %v544
      %617 = vst [vmem:[%s254 + $0x62] sm:$0x3] %v545
      %618 = vst [vmem:[%s254 + $0x64] sm:$0x3] %v546
      %619 = vst [vmem:[%s254 + $0x66] sm:$0x3] %v547
      %620 = vst [vmem:[%s254 + $0x68] sm:$0x3] %v548
      %621 = vst [vmem:[%s254 + $0x6a] sm:$0x3] %v549
      %622 = vst [vmem:[%s254 + $0x6c] sm:$0x3] %v550
      %623 = vst [vmem:[%s254 + $0x6e] sm:$0x3] %v551
      %624 = vst [vmem:[%s254 + $0x70] sm:$0x3] %v552
      %625 = vst [vmem:[%s254 + $0x72] sm:$0x3] %v553
      %626 = vst [vmem:[%s254 + $0x74] sm:$0x3] %v554
      %627 = vst [vmem:[%s254 + $0x76] sm:$0x3] %v555
      %628 = vst [vmem:[%s254 + $0x78] sm:$0x3] %v556
      %629 = vst [vmem:[%s254 + $0x7a] sm:$0x3] %v557
      %630 = vst [vmem:[%s254 + $0x7c] sm:$0x3] %v558
      %631 = vst [vmem:[%s254 + $0x7e] sm:$0x3] %v559
      %632 = vst [vmem:[%s254 + $0x80] sm:$0x3] %v560
      %633 = vst [vmem:[%s254 + $0x82] sm:$0x3] %v561
      %634 = vst [vmem:[%s254 + $0x84] sm:$0x3] %v562
      %635 = vst [vmem:[%s254 + $0x86] sm:$0x3] %v563
      %636 = vst [vmem:[%s254 + $0x88] sm:$0x3] %v564
      %637 = vst [vmem:[%s254 + $0x8a] sm:$0x3] %v565
      %638 = vst [vmem:[%s254 + $0x8c] sm:$0x3] %v566
      %639 = vst [vmem:[%s254 + $0x8e] sm:$0x3] %v567
      %vm640 = vcmask 1041408
      %v641 = vsel %vm640, %v496, -inf
      %v642 = vrot.slane %v641, 4
      %v643 = vmax.f32 %v641, %v642
      %v644 = vrot.slane %v643, 2
      %v645 = vmax.f32 %v643, %v644
      %v646 = vrot.slane %v645, 1
      %v647 = vmax.f32 %v645, %v646
      %v648 = vsel %vm640, %v497, -inf
      %v649 = vrot.slane %v648, 4
      %v650 = vmax.f32 %v648, %v649
      %v651 = vrot.slane %v650, 2
      %v652 = vmax.f32 %v650, %v651
      %v653 = vrot.slane %v652, 1
      %v654 = vmax.f32 %v652, %v653
      %v655 = vsel %vm640, %v498, -inf
      %v656 = vrot.slane %v655, 4
      %v657 = vmax.f32 %v655, %v656
      %v658 = vrot.slane %v657, 2
      %v659 = vmax.f32 %v657, %v658
      %v660 = vrot.slane %v659, 1
      %v661 = vmax.f32 %v659, %v660
      %v662 = vsel %vm640, %v499, -inf
      %v663 = vrot.slane %v662, 4
      %v664 = vmax.f32 %v662, %v663
      %v665 = vrot.slane %v664, 2
      %v666 = vmax.f32 %v664, %v665
      %v667 = vrot.slane %v666, 1
      %v668 = vmax.f32 %v666, %v667
      %v669 = vsel %vm640, %v500, -inf
      %v670 = vrot.slane %v669, 4
      %v671 = vmax.f32 %v669, %v670
      %v672 = vrot.slane %v671, 2
      %v673 = vmax.f32 %v671, %v672
      %v674 = vrot.slane %v673, 1
      %v675 = vmax.f32 %v673, %v674
      %v676 = vsel %vm640, %v501, -inf
      %v677 = vrot.slane %v676, 4
      %v678 = vmax.f32 %v676, %v677
      %v679 = vrot.slane %v678, 2
      %v680 = vmax.f32 %v678, %v679
      %v681 = vrot.slane %v680, 1
      %v682 = vmax.f32 %v680, %v681
      %v683 = vsel %vm640, %v502, -inf
      %v684 = vrot.slane %v683, 4
      %v685 = vmax.f32 %v683, %v684
      %v686 = vrot.slane %v685, 2
      %v687 = vmax.f32 %v685, %v686
      %v688 = vrot.slane %v687, 1
      %v689 = vmax.f32 %v687, %v688
      %v690 = vsel %vm640, %v503, -inf
      %v691 = vrot.slane %v690, 4
      %v692 = vmax.f32 %v690, %v691
      %v693 = vrot.slane %v692, 2
      %v694 = vmax.f32 %v692, %v693
      %v695 = vrot.slane %v694, 1
      %v696 = vmax.f32 %v694, %v695
      %v697 = vsel %vm640, %v504, -inf
      %v698 = vrot.slane %v697, 4
      %v699 = vmax.f32 %v697, %v698
      %v700 = vrot.slane %v699, 2
      %v701 = vmax.f32 %v699, %v700
      %v702 = vrot.slane %v701, 1
      %v703 = vmax.f32 %v701, %v702
      %v704 = vsel %vm640, %v505, -inf
      %v705 = vrot.slane %v704, 4
      %v706 = vmax.f32 %v704, %v705
      %v707 = vrot.slane %v706, 2
      %v708 = vmax.f32 %v706, %v707
      %v709 = vrot.slane %v708, 1
      %v710 = vmax.f32 %v708, %v709
      %v711 = vsel %vm640, %v506, -inf
      %v712 = vrot.slane %v711, 4
      %v713 = vmax.f32 %v711, %v712
      %v714 = vrot.slane %v713, 2
      %v715 = vmax.f32 %v713, %v714
      %v716 = vrot.slane %v715, 1
      %v717 = vmax.f32 %v715, %v716
      %v718 = vsel %vm640, %v507, -inf
      %v719 = vrot.slane %v718, 4
      %v720 = vmax.f32 %v718, %v719
      %v721 = vrot.slane %v720, 2
      %v722 = vmax.f32 %v720, %v721
      %v723 = vrot.slane %v722, 1
      %v724 = vmax.f32 %v722, %v723
      %v725 = vsel %vm640, %v508, -inf
      %v726 = vrot.slane %v725, 4
      %v727 = vmax.f32 %v725, %v726
      %v728 = vrot.slane %v727, 2
      %v729 = vmax.f32 %v727, %v728
      %v730 = vrot.slane %v729, 1
      %v731 = vmax.f32 %v729, %v730
      %v732 = vsel %vm640, %v509, -inf
      %v733 = vrot.slane %v732, 4
      %v734 = vmax.f32 %v732, %v733
      %v735 = vrot.slane %v734, 2
      %v736 = vmax.f32 %v734, %v735
      %v737 = vrot.slane %v736, 1
      %v738 = vmax.f32 %v736, %v737
      %v739 = vsel %vm640, %v510, -inf
      %v740 = vrot.slane %v739, 4
      %v741 = vmax.f32 %v739, %v740
      %v742 = vrot.slane %v741, 2
      %v743 = vmax.f32 %v741, %v742
      %v744 = vrot.slane %v743, 1
      %v745 = vmax.f32 %v743, %v744
      %v746 = vsel %vm640, %v511, -inf
      %v747 = vrot.slane %v746, 4
      %v748 = vmax.f32 %v746, %v747
      %v749 = vrot.slane %v748, 2
      %v750 = vmax.f32 %v748, %v749
      %v751 = vrot.slane %v750, 1
      %v752 = vmax.f32 %v750, %v751
      %v753 = vsel %vm640, %v512, -inf
      %v754 = vrot.slane %v753, 4
      %v755 = vmax.f32 %v753, %v754
      %v756 = vrot.slane %v755, 2
      %v757 = vmax.f32 %v755, %v756
      %v758 = vrot.slane %v757, 1
      %v759 = vmax.f32 %v757, %v758
      %v760 = vsel %vm640, %v513, -inf
      %v761 = vrot.slane %v760, 4
      %v762 = vmax.f32 %v760, %v761
      %v763 = vrot.slane %v762, 2
      %v764 = vmax.f32 %v762, %v763
      %v765 = vrot.slane %v764, 1
      %v766 = vmax.f32 %v764, %v765
      %v767 = vsel %vm640, %v514, -inf
      %v768 = vrot.slane %v767, 4
      %v769 = vmax.f32 %v767, %v768
      %v770 = vrot.slane %v769, 2
      %v771 = vmax.f32 %v769, %v770
      %v772 = vrot.slane %v771, 1
      %v773 = vmax.f32 %v771, %v772
      %v774 = vsel %vm640, %v515, -inf
      %v775 = vrot.slane %v774, 4
      %v776 = vmax.f32 %v774, %v775
      %v777 = vrot.slane %v776, 2
      %v778 = vmax.f32 %v776, %v777
      %v779 = vrot.slane %v778, 1
      %v780 = vmax.f32 %v778, %v779
      %v781 = vsel %vm640, %v516, -inf
      %v782 = vrot.slane %v781, 4
      %v783 = vmax.f32 %v781, %v782
      %v784 = vrot.slane %v783, 2
      %v785 = vmax.f32 %v783, %v784
      %v786 = vrot.slane %v785, 1
      %v787 = vmax.f32 %v785, %v786
      %v788 = vsel %vm640, %v517, -inf
      %v789 = vrot.slane %v788, 4
      %v790 = vmax.f32 %v788, %v789
      %v791 = vrot.slane %v790, 2
      %v792 = vmax.f32 %v790, %v791
      %v793 = vrot.slane %v792, 1
      %v794 = vmax.f32 %v792, %v793
      %v795 = vsel %vm640, %v518, -inf
      %v796 = vrot.slane %v795, 4
      %v797 = vmax.f32 %v795, %v796
      %v798 = vrot.slane %v797, 2
      %v799 = vmax.f32 %v797, %v798
      %v800 = vrot.slane %v799, 1
      %v801 = vmax.f32 %v799, %v800
      %v802 = vsel %vm640, %v519, -inf
      %v803 = vrot.slane %v802, 4
      %v804 = vmax.f32 %v802, %v803
      %v805 = vrot.slane %v804, 2
      %v806 = vmax.f32 %v804, %v805
      %v807 = vrot.slane %v806, 1
      %v808 = vmax.f32 %v806, %v807
      %v809 = vsel %vm640, %v520, -inf
      %v810 = vrot.slane %v809, 4
      %v811 = vmax.f32 %v809, %v810
      %v812 = vrot.slane %v811, 2
      %v813 = vmax.f32 %v811, %v812
      %v814 = vrot.slane %v813, 1
      %v815 = vmax.f32 %v813, %v814
      %v816 = vsel %vm640, %v521, -inf
      %v817 = vrot.slane %v816, 4
      %v818 = vmax.f32 %v816, %v817
      %v819 = vrot.slane %v818, 2
      %v820 = vmax.f32 %v818, %v819
      %v821 = vrot.slane %v820, 1
      %v822 = vmax.f32 %v820, %v821
      %v823 = vsel %vm640, %v522, -inf
      %v824 = vrot.slane %v823, 4
      %v825 = vmax.f32 %v823, %v824
      %v826 = vrot.slane %v825, 2
      %v827 = vmax.f32 %v825, %v826
      %v828 = vrot.slane %v827, 1
      %v829 = vmax.f32 %v827, %v828
      %v830 = vsel %vm640, %v523, -inf
      %v831 = vrot.slane %v830, 4
      %v832 = vmax.f32 %v830, %v831
      %v833 = vrot.slane %v832, 2
      %v834 = vmax.f32 %v832, %v833
      %v835 = vrot.slane %v834, 1
      %v836 = vmax.f32 %v834, %v835
      %v837 = vsel %vm640, %v524, -inf
      %v838 = vrot.slane %v837, 4
      %v839 = vmax.f32 %v837, %v838
      %v840 = vrot.slane %v839, 2
      %v841 = vmax.f32 %v839, %v840
      %v842 = vrot.slane %v841, 1
      %v843 = vmax.f32 %v841, %v842
      %v844 = vsel %vm640, %v525, -inf
      %v845 = vrot.slane %v844, 4
      %v846 = vmax.f32 %v844, %v845
      %v847 = vrot.slane %v846, 2
      %v848 = vmax.f32 %v846, %v847
      %v849 = vrot.slane %v848, 1
      %v850 = vmax.f32 %v848, %v849
      %v851 = vsel %vm640, %v526, -inf
      %v852 = vrot.slane %v851, 4
      %v853 = vmax.f32 %v851, %v852
      %v854 = vrot.slane %v853, 2
      %v855 = vmax.f32 %v853, %v854
      %v856 = vrot.slane %v855, 1
      %v857 = vmax.f32 %v855, %v856
      %v858 = vsel %vm640, %v527, -inf
      %v859 = vrot.slane %v858, 4
      %v860 = vmax.f32 %v858, %v859
      %v861 = vrot.slane %v860, 2
      %v862 = vmax.f32 %v860, %v861
      %v863 = vrot.slane %v862, 1
      %v864 = vmax.f32 %v862, %v863
      %v865 = vsel %vm640, %v528, -inf
      %v866 = vrot.slane %v865, 4
      %v867 = vmax.f32 %v865, %v866
      %v868 = vrot.slane %v867, 2
      %v869 = vmax.f32 %v867, %v868
      %v870 = vrot.slane %v869, 1
      %v871 = vmax.f32 %v869, %v870
      %v872 = vsel %vm640, %v529, -inf
      %v873 = vrot.slane %v872, 4
      %v874 = vmax.f32 %v872, %v873
      %v875 = vrot.slane %v874, 2
      %v876 = vmax.f32 %v874, %v875
      %v877 = vrot.slane %v876, 1
      %v878 = vmax.f32 %v876, %v877
      %v879 = vsel %vm640, %v530, -inf
      %v880 = vrot.slane %v879, 4
      %v881 = vmax.f32 %v879, %v880
      %v882 = vrot.slane %v881, 2
      %v883 = vmax.f32 %v881, %v882
      %v884 = vrot.slane %v883, 1
      %v885 = vmax.f32 %v883, %v884
      %v886 = vsel %vm640, %v531, -inf
      %v887 = vrot.slane %v886, 4
      %v888 = vmax.f32 %v886, %v887
      %v889 = vrot.slane %v888, 2
      %v890 = vmax.f32 %v888, %v889
      %v891 = vrot.slane %v890, 1
      %v892 = vmax.f32 %v890, %v891
      %v893 = vsel %vm640, %v532, -inf
      %v894 = vrot.slane %v893, 4
      %v895 = vmax.f32 %v893, %v894
      %v896 = vrot.slane %v895, 2
      %v897 = vmax.f32 %v895, %v896
      %v898 = vrot.slane %v897, 1
      %v899 = vmax.f32 %v897, %v898
      %v900 = vsel %vm640, %v533, -inf
      %v901 = vrot.slane %v900, 4
      %v902 = vmax.f32 %v900, %v901
      %v903 = vrot.slane %v902, 2
      %v904 = vmax.f32 %v902, %v903
      %v905 = vrot.slane %v904, 1
      %v906 = vmax.f32 %v904, %v905
      %v907 = vsel %vm640, %v534, -inf
      %v908 = vrot.slane %v907, 4
      %v909 = vmax.f32 %v907, %v908
      %v910 = vrot.slane %v909, 2
      %v911 = vmax.f32 %v909, %v910
      %v912 = vrot.slane %v911, 1
      %v913 = vmax.f32 %v911, %v912
      %v914 = vsel %vm640, %v535, -inf
      %v915 = vrot.slane %v914, 4
      %v916 = vmax.f32 %v914, %v915
      %v917 = vrot.slane %v916, 2
      %v918 = vmax.f32 %v916, %v917
      %v919 = vrot.slane %v918, 1
      %v920 = vmax.f32 %v918, %v919
      %v921 = vsel %vm640, %v536, -inf
      %v922 = vrot.slane %v921, 4
      %v923 = vmax.f32 %v921, %v922
      %v924 = vrot.slane %v923, 2
      %v925 = vmax.f32 %v923, %v924
      %v926 = vrot.slane %v925, 1
      %v927 = vmax.f32 %v925, %v926
      %v928 = vsel %vm640, %v537, -inf
      %v929 = vrot.slane %v928, 4
      %v930 = vmax.f32 %v928, %v929
      %v931 = vrot.slane %v930, 2
      %v932 = vmax.f32 %v930, %v931
      %v933 = vrot.slane %v932, 1
      %v934 = vmax.f32 %v932, %v933
      %v935 = vsel %vm640, %v538, -inf
      %v936 = vrot.slane %v935, 4
      %v937 = vmax.f32 %v935, %v936
      %v938 = vrot.slane %v937, 2
      %v939 = vmax.f32 %v937, %v938
      %v940 = vrot.slane %v939, 1
      %v941 = vmax.f32 %v939, %v940
      %v942 = vsel %vm640, %v539, -inf
      %v943 = vrot.slane %v942, 4
      %v944 = vmax.f32 %v942, %v943
      %v945 = vrot.slane %v944, 2
      %v946 = vmax.f32 %v944, %v945
      %v947 = vrot.slane %v946, 1
      %v948 = vmax.f32 %v946, %v947
      %v949 = vsel %vm640, %v540, -inf
      %v950 = vrot.slane %v949, 4
      %v951 = vmax.f32 %v949, %v950
      %v952 = vrot.slane %v951, 2
      %v953 = vmax.f32 %v951, %v952
      %v954 = vrot.slane %v953, 1
      %v955 = vmax.f32 %v953, %v954
      %v956 = vsel %vm640, %v541, -inf
      %v957 = vrot.slane %v956, 4
      %v958 = vmax.f32 %v956, %v957
      %v959 = vrot.slane %v958, 2
      %v960 = vmax.f32 %v958, %v959
      %v961 = vrot.slane %v960, 1
      %v962 = vmax.f32 %v960, %v961
      %v963 = vsel %vm640, %v542, -inf
      %v964 = vrot.slane %v963, 4
      %v965 = vmax.f32 %v963, %v964
      %v966 = vrot.slane %v965, 2
      %v967 = vmax.f32 %v965, %v966
      %v968 = vrot.slane %v967, 1
      %v969 = vmax.f32 %v967, %v968
      %v970 = vsel %vm640, %v543, -inf
      %v971 = vrot.slane %v970, 4
      %v972 = vmax.f32 %v970, %v971
      %v973 = vrot.slane %v972, 2
      %v974 = vmax.f32 %v972, %v973
      %v975 = vrot.slane %v974, 1
      %v976 = vmax.f32 %v974, %v975
      %v977 = vsel %vm640, %v544, -inf
      %v978 = vrot.slane %v977, 4
      %v979 = vmax.f32 %v977, %v978
      %v980 = vrot.slane %v979, 2
      %v981 = vmax.f32 %v979, %v980
      %v982 = vrot.slane %v981, 1
      %v983 = vmax.f32 %v981, %v982
      %v984 = vsel %vm640, %v545, -inf
      %v985 = vrot.slane %v984, 4
      %v986 = vmax.f32 %v984, %v985
      %v987 = vrot.slane %v986, 2
      %v988 = vmax.f32 %v986, %v987
      %v989 = vrot.slane %v988, 1
      %v990 = vmax.f32 %v988, %v989
      %v991 = vsel %vm640, %v546, -inf
      %v992 = vrot.slane %v991, 4
      %v993 = vmax.f32 %v991, %v992
      %v994 = vrot.slane %v993, 2
      %v995 = vmax.f32 %v993, %v994
      %v996 = vrot.slane %v995, 1
      %v997 = vmax.f32 %v995, %v996
      %v998 = vsel %vm640, %v547, -inf
      %v999 = vrot.slane %v998, 4
      %v1000 = vmax.f32 %v998, %v999
      %v1001 = vrot.slane %v1000, 2
      %v1002 = vmax.f32 %v1000, %v1001
      %v1003 = vrot.slane %v1002, 1
      %v1004 = vmax.f32 %v1002, %v1003
      %v1005 = vsel %vm640, %v548, -inf
      %v1006 = vrot.slane %v1005, 4
      %v1007 = vmax.f32 %v1005, %v1006
      %v1008 = vrot.slane %v1007, 2
      %v1009 = vmax.f32 %v1007, %v1008
      %v1010 = vrot.slane %v1009, 1
      %v1011 = vmax.f32 %v1009, %v1010
      %v1012 = vsel %vm640, %v549, -inf
      %v1013 = vrot.slane %v1012, 4
      %v1014 = vmax.f32 %v1012, %v1013
      %v1015 = vrot.slane %v1014, 2
      %v1016 = vmax.f32 %v1014, %v1015
      %v1017 = vrot.slane %v1016, 1
      %v1018 = vmax.f32 %v1016, %v1017
      %v1019 = vsel %vm640, %v550, -inf
      %v1020 = vrot.slane %v1019, 4
      %v1021 = vmax.f32 %v1019, %v1020
      %v1022 = vrot.slane %v1021, 2
      %v1023 = vmax.f32 %v1021, %v1022
      %v1024 = vrot.slane %v1023, 1
      %v1025 = vmax.f32 %v1023, %v1024
      %v1026 = vsel %vm640, %v551, -inf
      %v1027 = vrot.slane %v1026, 4
      %v1028 = vmax.f32 %v1026, %v1027
      %v1029 = vrot.slane %v1028, 2
      %v1030 = vmax.f32 %v1028, %v1029
      %v1031 = vrot.slane %v1030, 1
      %v1032 = vmax.f32 %v1030, %v1031
      %v1033 = vsel %vm640, %v552, -inf
      %v1034 = vrot.slane %v1033, 4
      %v1035 = vmax.f32 %v1033, %v1034
      %v1036 = vrot.slane %v1035, 2
      %v1037 = vmax.f32 %v1035, %v1036
      %v1038 = vrot.slane %v1037, 1
      %v1039 = vmax.f32 %v1037, %v1038
      %v1040 = vsel %vm640, %v553, -inf
      %v1041 = vrot.slane %v1040, 4
      %v1042 = vmax.f32 %v1040, %v1041
      %v1043 = vrot.slane %v1042, 2
      %v1044 = vmax.f32 %v1042, %v1043
      %v1045 = vrot.slane %v1044, 1
      %v1046 = vmax.f32 %v1044, %v1045
      %v1047 = vsel %vm640, %v554, -inf
      %v1048 = vrot.slane %v1047, 4
      %v1049 = vmax.f32 %v1047, %v1048
      %v1050 = vrot.slane %v1049, 2
      %v1051 = vmax.f32 %v1049, %v1050
      %v1052 = vrot.slane %v1051, 1
      %v1053 = vmax.f32 %v1051, %v1052
      %v1054 = vsel %vm640, %v555, -inf
      %v1055 = vrot.slane %v1054, 4
      %v1056 = vmax.f32 %v1054, %v1055
      %v1057 = vrot.slane %v1056, 2
      %v1058 = vmax.f32 %v1056, %v1057
      %v1059 = vrot.slane %v1058, 1
      %v1060 = vmax.f32 %v1058, %v1059
      %v1061 = vsel %vm640, %v556, -inf
      %v1062 = vrot.slane %v1061, 4
      %v1063 = vmax.f32 %v1061, %v1062
      %v1064 = vrot.slane %v1063, 2
      %v1065 = vmax.f32 %v1063, %v1064
      %v1066 = vrot.slane %v1065, 1
      %v1067 = vmax.f32 %v1065, %v1066
      %v1068 = vsel %vm640, %v557, -inf
      %v1069 = vrot.slane %v1068, 4
      %v1070 = vmax.f32 %v1068, %v1069
      %v1071 = vrot.slane %v1070, 2
      %v1072 = vmax.f32 %v1070, %v1071
      %v1073 = vrot.slane %v1072, 1
      %v1074 = vmax.f32 %v1072, %v1073
      %v1075 = vsel %vm640, %v558, -inf
      %v1076 = vrot.slane %v1075, 4
      %v1077 = vmax.f32 %v1075, %v1076
      %v1078 = vrot.slane %v1077, 2
      %v1079 = vmax.f32 %v1077, %v1078
      %v1080 = vrot.slane %v1079, 1
      %v1081 = vmax.f32 %v1079, %v1080
      %v1082 = vsel %vm640, %v559, -inf
      %v1083 = vrot.slane %v1082, 4
      %v1084 = vmax.f32 %v1082, %v1083
      %v1085 = vrot.slane %v1084, 2
      %v1086 = vmax.f32 %v1084, %v1085
      %v1087 = vrot.slane %v1086, 1
      %v1088 = vmax.f32 %v1086, %v1087
      %v1089 = vsel %vm640, %v560, -inf
      %v1090 = vrot.slane %v1089, 4
      %v1091 = vmax.f32 %v1089, %v1090
      %v1092 = vrot.slane %v1091, 2
      %v1093 = vmax.f32 %v1091, %v1092
      %v1094 = vrot.slane %v1093, 1
      %v1095 = vmax.f32 %v1093, %v1094
      %v1096 = vsel %vm640, %v561, -inf
      %v1097 = vrot.slane %v1096, 4
      %v1098 = vmax.f32 %v1096, %v1097
      %v1099 = vrot.slane %v1098, 2
      %v1100 = vmax.f32 %v1098, %v1099
      %v1101 = vrot.slane %v1100, 1
      %v1102 = vmax.f32 %v1100, %v1101
      %v1103 = vsel %vm640, %v562, -inf
      %v1104 = vrot.slane %v1103, 4
      %v1105 = vmax.f32 %v1103, %v1104
      %v1106 = vrot.slane %v1105, 2
      %v1107 = vmax.f32 %v1105, %v1106
      %v1108 = vrot.slane %v1107, 1
      %v1109 = vmax.f32 %v1107, %v1108
      %v1110 = vsel %vm640, %v563, -inf
      %v1111 = vrot.slane %v1110, 4
      %v1112 = vmax.f32 %v1110, %v1111
      %v1113 = vrot.slane %v1112, 2
      %v1114 = vmax.f32 %v1112, %v1113
      %v1115 = vrot.slane %v1114, 1
      %v1116 = vmax.f32 %v1114, %v1115
      %v1117 = vsel %vm640, %v564, -inf
      %v1118 = vrot.slane %v1117, 4
      %v1119 = vmax.f32 %v1117, %v1118
      %v1120 = vrot.slane %v1119, 2
      %v1121 = vmax.f32 %v1119, %v1120
      %v1122 = vrot.slane %v1121, 1
      %v1123 = vmax.f32 %v1121, %v1122
      %v1124 = vsel %vm640, %v565, -inf
      %v1125 = vrot.slane %v1124, 4
      %v1126 = vmax.f32 %v1124, %v1125
      %v1127 = vrot.slane %v1126, 2
      %v1128 = vmax.f32 %v1126, %v1127
      %v1129 = vrot.slane %v1128, 1
      %v1130 = vmax.f32 %v1128, %v1129
      %v1131 = vsel %vm640, %v566, -inf
      %v1132 = vrot.slane %v1131, 4
      %v1133 = vmax.f32 %v1131, %v1132
      %v1134 = vrot.slane %v1133, 2
      %v1135 = vmax.f32 %v1133, %v1134
      %v1136 = vrot.slane %v1135, 1
      %v1137 = vmax.f32 %v1135, %v1136
      %v1138 = vsel %vm640, %v567, -inf
      %v1139 = vrot.slane %v1138, 4
      %v1140 = vmax.f32 %v1138, %v1139
      %v1141 = vrot.slane %v1140, 2
      %v1142 = vmax.f32 %v1140, %v1141
      %v1143 = vrot.slane %v1142, 1
      %v1144 = vmax.f32 %v1142, %v1143
      %v1145 = vmax.f32 %v647, %v689
      %v1146 = vmax.f32 %v654, %v696
      %v1147 = vmax.f32 %v661, %v703
      %v1148 = vmax.f32 %v668, %v710
      %v1149 = vmax.f32 %v675, %v717
      %v1150 = vmax.f32 %v682, %v724
      %v1151 = vmax.f32 %v731, %v773
      %v1152 = vmax.f32 %v738, %v780
      %v1153 = vmax.f32 %v745, %v787
      %v1154 = vmax.f32 %v752, %v794
      %v1155 = vmax.f32 %v759, %v801
      %v1156 = vmax.f32 %v766, %v808
      %v1157 = vmax.f32 %v815, %v857
      %v1158 = vmax.f32 %v822, %v864
      %v1159 = vmax.f32 %v829, %v871
      %v1160 = vmax.f32 %v836, %v878
      %v1161 = vmax.f32 %v843, %v885
      %v1162 = vmax.f32 %v850, %v892
      %v1163 = vmax.f32 %v899, %v941
      %v1164 = vmax.f32 %v906, %v948
      %v1165 = vmax.f32 %v913, %v955
      %v1166 = vmax.f32 %v920, %v962
      %v1167 = vmax.f32 %v927, %v969
      %v1168 = vmax.f32 %v934, %v976
      %v1169 = vmax.f32 %v983, %v1025
      %v1170 = vmax.f32 %v990, %v1032
      %v1171 = vmax.f32 %v997, %v1039
      %v1172 = vmax.f32 %v1004, %v1046
      %v1173 = vmax.f32 %v1011, %v1053
      %v1174 = vmax.f32 %v1018, %v1060
      %v1175 = vmax.f32 %v1067, %v1109
      %v1176 = vmax.f32 %v1074, %v1116
      %v1177 = vmax.f32 %v1081, %v1123
      %v1178 = vmax.f32 %v1088, %v1130
      %v1179 = vmax.f32 %v1095, %v1137
      %v1180 = vmax.f32 %v1102, %v1144
      %vm1217 = vcmask 1041409
      %v1218 = vsel %vm1217, %v1146, %v1145
      %vm1219 = vcmask 1042434
      %v1220 = vsel %vm1219, %v1147, %v1218
      %vm1221 = vcmask 1043459
      %v1222 = vsel %vm1221, %v1148, %v1220
      %vm1223 = vcmask 1044484
      %v1224 = vsel %vm1223, %v1149, %v1222
      %vm1225 = vcmask 1045509
      %v1226 = vsel %vm1225, %v1150, %v1224
      %v1227 = vsel %vm1217, %v1152, %v1151
      %v1228 = vsel %vm1219, %v1153, %v1227
      %v1229 = vsel %vm1221, %v1154, %v1228
      %v1230 = vsel %vm1223, %v1155, %v1229
      %v1231 = vsel %vm1225, %v1156, %v1230
      %v1232 = vsel %vm1217, %v1158, %v1157
      %v1233 = vsel %vm1219, %v1159, %v1232
      %v1234 = vsel %vm1221, %v1160, %v1233
      %v1235 = vsel %vm1223, %v1161, %v1234
      %v1236 = vsel %vm1225, %v1162, %v1235
      %v1237 = vsel %vm1217, %v1164, %v1163
      %v1238 = vsel %vm1219, %v1165, %v1237
      %v1239 = vsel %vm1221, %v1166, %v1238
      %v1240 = vsel %vm1223, %v1167, %v1239
      %v1241 = vsel %vm1225, %v1168, %v1240
      %v1242 = vsel %vm1217, %v1170, %v1169
      %v1243 = vsel %vm1219, %v1171, %v1242
      %v1244 = vsel %vm1221, %v1172, %v1243
      %v1245 = vsel %vm1223, %v1173, %v1244
      %v1246 = vsel %vm1225, %v1174, %v1245
      %v1247 = vsel %vm1217, %v1176, %v1175
      %v1248 = vsel %vm1219, %v1177, %v1247
      %v1249 = vsel %vm1221, %v1178, %v1248
      %v1250 = vsel %vm1223, %v1179, %v1249
      %v1251 = vsel %vm1225, %v1180, %v1250
      %1258 = vst [vmem:[%s264] sm:$0x3f] %v1226
      %1259 = vst [vmem:[%s264 + $0x8] sm:$0x3f] %v1231
      %1260 = vst [vmem:[%s264 + $0x10] sm:$0x3f] %v1236
      %1261 = vst [vmem:[%s264 + $0x18] sm:$0x3f] %v1241
      %1262 = vst [vmem:[%s264 + $0x20] sm:$0x3f] %v1246
      %1263 = vst [vmem:[%s264 + $0x28] sm:$0x3f] %v1251
      %s1264 = smul.u32 12, %s21
      %p1265 = scmp.lt.s32.totalorder %s20, 1
      %s1266 = scalar_select %p1265, %s20, 1
      %p1267 = scmp.lt.s32.totalorder %s1264, 11
      %s1268 = scalar_select %p1267, %s1264, 11
      %s1269 = smul.addr %s1268, 6
      %s1270 = smul.addr %s1266, 72
      %s1271 = sadd.s32 %s1269, %s1270
      %s1272 = smul.addr %s1271, 2
      %s1273 = scalar_lea.vmem %s3, %s1272
      %s1274 = smul.u32 6, %s21
      %p1275 = scmp.lt.s32.totalorder %s20, 1
      %s1276 = scalar_select %p1275, %s20, 1
      %p1277 = scmp.lt.s32.totalorder %s1274, 5
      %s1278 = scalar_select %p1277, %s1274, 5
      %s1279 = smul.addr %s1276, 6
      %s1280 = sadd.s32 %s1278, %s1279
      %s1281 = smul.addr %s1280, 8
      %s1282 = scalar_lea.vmem %s4, %s1281
      // Predicated region
      $region33: #{down_conv_forward.5} parent=31 // pred_check
        %p1283 = pneg %p118
      $region34: #{down_conv_forward.5} parent=31 // pred_check_branch
        %1285 = sbr.rel (%p1283) target = $region36
      $region35: #{down_conv_forward.5} parent=31 // pred_region
        %s1286 = smul.u32 12, %s21
      $region36: #{down_conv_forward.5} parent=31 // pred_fallthru
        _
      // Predicated region
      $region37: #{down_conv_forward.5} parent=31 // pred_check
        %p1287 = pneg %p146
      $region38: #{down_conv_forward.5} parent=31 // pred_check_branch
        %1289 = sbr.rel (%p1287) target = $region40
      $region39: #{down_conv_forward.5} parent=31 // pred_region
        %s1290 = smul.u32 6, %s21
      $region40: #{down_conv_forward.5} parent=31 // pred_fallthru
        _
    $region32: #{down_conv_forward.5} parent=5 // pred_fallthru
      _
    %p1291 = scmp.le.s32.totalorder 2, %s11
    // Predicated region
    $region41: #{down_conv_forward.5} parent=5 // pred_check
      %p1292 = pneg %p1291
    $region42: #{down_conv_forward.5} parent=5 // pred_check_branch
      %1294 = sbr.rel (%p1292) target = $region44
    $region43: #{down_conv_forward.5} parent=5 // pred_region
      %s1295 = ssub.s32 %s11, 2
      // Predicated region
      $region45: #{down_conv_forward.5} parent=43 // pred_check
        %p1296 = pneg %p124
      $region46: #{down_conv_forward.5} parent=43 // pred_check_branch
        %1298 = sbr.rel (%p1296) target = $region48
      $region47: #{down_conv_forward.5} parent=43 // pred_region
        %s1299 = smul.u32 12, %s23
        %p1300 = scmp.lt.s32.totalorder %s22, 1
        %s1301 = scalar_select %p1300, %s22, 1
        %p1302 = scmp.lt.s32.totalorder %s1299, 11
        %s1303 = scalar_select %p1302, %s1299, 11
        %s1304 = smul.addr %s1303, 6
        %s1305 = smul.addr %s1301, 72
        %s1306 = sadd.s32 %s1304, %s1305
        %s1307 = smul.addr %s1306, 2
        %s1308 = scalar_lea.vmem %s3, %s1307
      $region48: #{down_conv_forward.5} parent=43 // pred_fallthru
        _
      // Predicated region
      $region49: #{down_conv_forward.5} parent=43 // pred_check
        %p1309 = pneg %p152
      $region50: #{down_conv_forward.5} parent=43 // pred_check_branch
        %1311 = sbr.rel (%p1309) target = $region52
      $region51: #{down_conv_forward.5} parent=43 // pred_region
        %s1312 = smul.u32 6, %s23
        %p1313 = scmp.lt.s32.totalorder %s22, 1
        %s1314 = scalar_select %p1313, %s22, 1
        %p1315 = scmp.lt.s32.totalorder %s1312, 5
        %s1316 = scalar_select %p1315, %s1312, 5
        %s1317 = smul.addr %s1314, 6
        %s1318 = sadd.s32 %s1316, %s1317
        %s1319 = smul.addr %s1318, 8
        %s1320 = scalar_lea.vmem %s4, %s1319
      $region52: #{down_conv_forward.5} parent=43 // pred_fallthru
        _
    $region44: #{down_conv_forward.5} parent=5 // pred_fallthru
      _
  $region6: #{down_conv_forward.5} parent=0 // loop_footer
    %s15 = sadd.s32 1, %s11
  $region7: #{down_conv_forward.5} parent=0 // loop_footer_branch
    %10 = sbr.rel target = $region3
  $region8: #{down_conv_forward.5} parent=0 // loop_exit
    _

</llo_original>
